<compile_context>
chip_gen: v7x
topology: tpu7x:2x2x1
jax: 0.10.0
libtpu: 0.0.40
codegen_flags: <defaults>
</compile_context>

<pallas_src>
import numpy as np

import jax
import jax.numpy as jnp
from jax.experimental import pallas as pl
from jax.experimental.pallas import tpu as pltpu

_CHANNELS = [12, 24, 48, 96, 196]
_BLOCKS = [2, 4, 2]
_BN_EPS = 1e-5


# ============================================================================
# Build-time packing helpers
# ============================================================================
class _Packer:
    """Packs many small 2-D arrays into one (rows, width) f32 slab.

    Every entry starts at an 8-row-aligned offset and is zero padded, so the
    in-kernel static slices never start inside a sublane tile.
    """

    def __init__(self, width):
        self.width = width
        self.chunks = []
        self.off = 0

    def add(self, arr):
        arr = np.asarray(arr, np.float32)
        r, c = arr.shape
        assert c <= self.width, (c, self.width)
        rp = ((r + 7) // 8) * 8
        buf = np.zeros((rp, self.width), np.float32)
        buf[:r, :c] = arr
        self.chunks.append(buf)
        off = self.off
        self.off += rp
        return (off, r, c)

    def finalize(self):
        return jnp.asarray(np.concatenate(self.chunks, axis=0))


def _tap_stack(lin, stride, *, clamp=False, skip_mid=False):
    """Stacked 0/1 tap matrices for a k=3, padding=1 conv / pool.

    clamp (maxpool only): out-of-range taps are index-clamped.  For k=3, s=2, p=1
    every clamped tap duplicates an in-window element, so this is exactly equivalent
    to -inf padding for max.  NOT valid for other kernel/stride/padding combos.
    skip_mid (stride-1 depthwise): only the k=0 / k=2 taps are emitted; the k=1 tap
    is the identity and is applied on the VPU.
    Segments are padded to a multiple of 8 rows so row slices stay tile-aligned.
    """
    assert not (skip_mid and stride != 1)
    lout = (lin - 1) // stride + 1
    seg_h = ((lout + 7) // 8) * 8
    ks = (0, 2) if skip_mid else (0, 1, 2)
    segs = []
    for k in ks:
        t = np.zeros((seg_h, lin), np.float32)
        for o in range(lout):
            l = stride * o + k - 1
            if clamp:
                l = min(max(l, 0), lin - 1)
            if 0 <= l < lin:
                t[o, l] = 1.0
        segs.append(t)
    return np.concatenate(segs, axis=0), (seg_h, lout, lin, len(ks))


def _bn_fold(bn):
    scale = bn['gamma'] / np.sqrt(bn['var'] + _BN_EPS)
    return scale, bn['beta'] - bn['mean'] * scale


# ============================================================================
# Raw (torch-like) parameter generation
# ============================================================================
class _KeyGen:
    def __init__(self, key):
        self.key = key

    def __call__(self):
        self.key, sub = jax.random.split(self.key)
        return sub


def _rand(kg, shape, fan_in):
    return np.asarray(jax.random.normal(kg(), shape, jnp.float32)) / np.sqrt(float(fan_in))


def _rand_bn(kg, c):
    return {
        'gamma': np.asarray(1.0 + 0.1 * jax.random.normal(kg(), (c,), jnp.float32)),
        'beta': np.asarray(0.1 * jax.random.normal(kg(), (c,), jnp.float32)),
        'mean': np.asarray(0.1 * jax.random.normal(kg(), (c,), jnp.float32)),
        'var': np.asarray(1.0 + 0.1 * jax.random.uniform(kg(), (c,), jnp.float32)),
    }


def build_raw_params(key, inp=2, oup=2):
    kg = _KeyGen(key)
    raw = {
        'stem_w': _rand(kg, (_CHANNELS[0], inp, 3), inp * 3),
        'stem_bn': _rand_bn(kg, _CHANNELS[0]),
        'stages': [],
        'last_w': _rand(kg, (_CHANNELS[4], _CHANNELS[3]), _CHANNELS[3]),
        'last_bn': _rand_bn(kg, _CHANNELS[4]),
        'fc_w': _rand(kg, (oup, _CHANNELS[4]), _CHANNELS[4]),
        'fc_b': np.asarray(0.01 * jax.random.normal(kg(), (oup,), jnp.float32)),
    }
    for i, nb in enumerate(_BLOCKS):
        cin, cout = _CHANNELS[i], _CHANNELS[i + 1]
        bf = cout // 2
        stage = [{
            'stride': 2,
            'b1_dw_w': _rand(kg, (cin, 1, 3), 3), 'b1_dw_bn': _rand_bn(kg, cin),
            'b1_pw_w': _rand(kg, (bf, cin), cin), 'b1_pw_bn': _rand_bn(kg, bf),
            'pw1_w': _rand(kg, (bf, cin), cin), 'pw1_bn': _rand_bn(kg, bf),
            'dw_w': _rand(kg, (bf, 1, 3), 3), 'dw_bn': _rand_bn(kg, bf),
            'pw2_w': _rand(kg, (bf, bf), bf), 'pw2_bn': _rand_bn(kg, bf),
        }]
        for _ in range(nb - 1):
            stage.append({
                'stride': 1,
                'pw1_w': _rand(kg, (bf, bf), bf), 'pw1_bn': _rand_bn(kg, bf),
                'dw_w': _rand(kg, (bf, 1, 3), 3), 'dw_bn': _rand_bn(kg, bf),
                'pw2_w': _rand(kg, (bf, bf), bf), 'pw2_bn': _rand_bn(kg, bf),
            })
        raw['stages'].append(stage)
    return raw


# ============================================================================
# Build the two packed slabs + static layout (all folding happens here)
# ============================================================================
def build_packed_params(raw, length=128):
    assert length % 32 == 0, "need five clean stride-2 halvings"
    oup = raw['fc_w'].shape[0]
    taps = _Packer(width=128)
    wts = _Packer(width=256)
    lay = {'oup': oup, 'oup_pad': 128}

    def add_taps(lin, stride, **kw):
        arr, (seg_h, lout, lin_, nseg) = _tap_stack(lin, stride, **kw)
        off, _, _ = taps.add(arr)
        return (off, seg_h, lout, lin_, nseg)

    # --- stem: Conv1d(inp->12, k3, s2, p1) + BN (folded) --------------------
    scale, shift = _bn_fold(raw['stem_bn'])
    lay['stem_T'] = add_taps(length, 2)
    lay['stem_W'] = [wts.add(raw['stem_w'][:, :, k].T * scale[None, :]) for k in range(3)]
    lay['stem_s'] = wts.add(shift[None, :])
    l_cur = (length - 1) // 2 + 1

    # --- MaxPool1d(k3, s2, p1): clamped taps == -inf padding for this k/s/p --
    lay['pool_T'] = add_taps(l_cur, 2, clamp=True)
    l_cur = (l_cur - 1) // 2 + 1

    # --- stages: deferred-permutation folding --------------------------------
    lay['stages'] = []
    lg = np.arange(_CHANNELS[0])          # physical column -> logical channel
    for si, stage_raw in enumerate(raw['stages']):
        cin, cout = _CHANNELS[si], _CHANNELS[si + 1]
        bf = cout // 2
        st = {'T2': add_taps(l_cur, 2),
              'T1': add_taps((l_cur - 1) // 2 + 1, 1, skip_mid=True),
              'blocks': []}
        l_cur = (l_cur - 1) // 2 + 1
        for blk in stage_raw:
            e = {'stride': blk['stride']}
            if blk['stride'] == 2:
                # branch1 depthwise: per-channel weights follow incoming permutation
                dsc, dsh = _bn_fold(blk['b1_dw_bn'])
                e['b1_dw'] = wts.add(np.stack(
                    [blk['b1_dw_w'][lg, 0, k] * dsc[lg] for k in range(3)] + [dsh[lg]], 0))
                # branch1 1x1 -> even output columns (channel_shuffle folded)
                asc, ash = _bn_fold(blk['b1_pw_bn'])
                wa = np.zeros((cin, cout), np.float32)
                wa[:, 0::2] = blk['b1_pw_w'][:, lg].T * asc[None, :]
                sa = np.zeros((1, cout), np.float32)
                sa[0, 0::2] = ash
                e['b1_pw_w'] = wts.add(wa)
                e['b1_pw_s'] = wts.add(sa)
                # branch2 1x1 #1: rows follow incoming permutation
                sc1, sh1 = _bn_fold(blk['pw1_bn'])
                e['pw1_w'] = wts.add(blk['pw1_w'][:, lg].T * sc1[None, :])
                e['pw1_s'] = wts.add(sh1[None, :])
                # branch2 depthwise
                dsc2, dsh2 = _bn_fold(blk['dw_bn'])
                e['dw'] = wts.add(np.stack(
                    [blk['dw_w'][:, 0, k] * dsc2 for k in range(3)] + [dsh2], 0))
                # branch2 1x1 #2 -> odd output columns (channel_shuffle folded)
                sc2, sh2 = _bn_fold(blk['pw2_bn'])
                wb = np.zeros((bf, cout), np.float32)
                wb[:, 1::2] = blk['pw2_w'].T * sc2[None, :]
                sb = np.zeros((1, cout), np.float32)
                sb[0, 1::2] = sh2
                e['pw2_w'] = wts.add(wb)
                e['pw2_s'] = wts.add(sb)
                lg = np.arange(cout)      # stride-2 output is physically in logical order
            else:
                c = cout
                ph = np.empty(c, np.int64)
                ph[lg] = np.arange(c)     # logical channel -> physical column
                # 1x1 #1: selects the x2 half (logical ch >= bf), permutation folded in rows
                sc1, sh1 = _bn_fold(blk['pw1_bn'])
                w1 = np.zeros((c, bf), np.float32)
                for p in range(c):
                    if lg[p] >= bf:
                        w1[p, :] = blk['pw1_w'][:, lg[p] - bf] * sc1
                e['pw1_w'] = wts.add(w1)
                e['pw1_s'] = wts.add(sh1[None, :])
                # stride-1 depthwise
                dsc, dsh = _bn_fold(blk['dw_bn'])
                e['dw'] = wts.add(np.stack(
                    [blk['dw_w'][:, 0, k] * dsc for k in range(3)] + [dsh], 0))
                # 1x1 #2: branch output j is stored in the physical column that held
                # logical channel bf+j (the consumed x2 slot); the shuffle only updates lg.
                sc2, sh2 = _bn_fold(blk['pw2_bn'])
                w2 = np.zeros((bf, c), np.float32)
                s2 = np.zeros((1, c), np.float32)
                for j in range(bf):
                    q = ph[bf + j]
                    w2[:, q] = blk['pw2_w'][j, :] * sc2[j]
                    s2[0, q] = sh2[j]
                e['pw2_w'] = wts.add(w2)
                e['pw2_s'] = wts.add(s2)
                # keep-mask for the x1 passthrough (VPU multiply, no permutation matmul)
                e['mask'] = wts.add((lg < bf).astype(np.float32)[None, :])
                lg = np.where(lg < bf, 2 * lg, 2 * (lg - bf) + 1)
            st['blocks'].append(e)
        lay['stages'].append(st)

    # --- lastconv / mean / fc (final permutation folded into lastconv rows) --
    lsc, lsh = _bn_fold(raw['last_bn'])
    lay['last_w'] = wts.add(raw['last_w'][:, lg].T * lsc[None, :])
    lay['last_s'] = wts.add(lsh[None, :])
    lay['last_len'] = l_cur

    wf = np.zeros((_CHANNELS[4], lay['oup_pad']), np.float32)
    wf[:, :oup] = raw['fc_w'].T
    bfc = np.zeros((1, lay['oup_pad']), np.float32)
    bfc[0, :oup] = raw['fc_b']
    lay['fc_w'] = wts.add(wf)
    lay['fc_b'] = wts.add(bfc)

    return taps.finalize(), wts.finalize(), lay


# ============================================================================
# Fused kernel
# ============================================================================
def _dot(a, b):
    return jnp.dot(a, b, preferred_element_type=jnp.float32)


def _ld(ref, ent):
    off, r, c = ent
    return ref[off:off + r, 0:c]


def _tap_apply(taps_ref, ent, v):
    """ONE stacked matmul for all taps of a k=3 conv/pool; returns per-tap slices."""
    off, seg_h, lout, lin, nseg = ent
    tall = _dot(taps_ref[off:off + nseg * seg_h, 0:lin], v)
    return [tall[k * seg_h:k * seg_h + lout, :] for k in range(nseg)]


def _make_kernel(lay):
    def kernel(x_ref, taps_ref, w_ref, o_ref):
        x = x_ref[0]                                            # (L, Cin)

        # stem: Conv1d(Cin->12, k3, s2, p1) + BN + ReLU
        s = _tap_apply(taps_ref, lay['stem_T'], x)
        y = _ld(w_ref, lay['stem_s'])
        for k in range(3):
            y = y + _dot(s[k], _ld(w_ref, lay['stem_W'][k]))
        y = jnp.maximum(y, 0.0)

        # MaxPool1d(k3, s2, p1)
        p0, p1, p2 = _tap_apply(taps_ref, lay['pool_T'], y)
        y = jnp.maximum(jnp.maximum(p0, p1), p2)

        # InvertedResidual1D stages (shuffle/split permutations already folded)
        for st in lay['stages']:
            for blk in st['blocks']:
                if blk['stride'] == 2:
                    wd = _ld(w_ref, blk['b1_dw'])
                    a0, a1, a2 = _tap_apply(taps_ref, st['T2'], y)
                    a = a0 * wd[0:1, :] + a1 * wd[1:2, :] + a2 * wd[2:3, :] + wd[3:4, :]
                    a = jnp.maximum(
                        _dot(a, _ld(w_ref, blk['b1_pw_w'])) + _ld(w_ref, blk['b1_pw_s']), 0.0)
                    h = jnp.maximum(
                        _dot(y, _ld(w_ref, blk['pw1_w'])) + _ld(w_ref, blk['pw1_s']), 0.0)
                    wd2 = _ld(w_ref, blk['dw'])
                    g0, g1, g2 = _tap_apply(taps_ref, st['T2'], h)
                    g = g0 * wd2[0:1, :] + g1 * wd2[1:2, :] + g2 * wd2[2:3, :] + wd2[3:4, :]
                    bv = jnp.maximum(
                        _dot(g, _ld(w_ref, blk['pw2_w'])) + _ld(w_ref, blk['pw2_s']), 0.0)
                    y = a + bv                      # even cols = branch1, odd = branch2
                else:
                    h = jnp.maximum(
                        _dot(y, _ld(w_ref, blk['pw1_w'])) + _ld(w_ref, blk['pw1_s']), 0.0)
                    wd = _ld(w_ref, blk['dw'])
                    g0, g2 = _tap_apply(taps_ref, st['T1'], h)   # middle tap = identity
                    g = g0 * wd[0:1, :] + h * wd[1:2, :] + g2 * wd[2:3, :] + wd[3:4, :]
                    bv = jnp.maximum(
                        _dot(g, _ld(w_ref, blk['pw2_w'])) + _ld(w_ref, blk['pw2_s']), 0.0)
                    y = y * _ld(w_ref, blk['mask']) + bv         # x1 passthrough on VPU

        # lastconv (96->196) + global mean over length + fc (padded to 128 lanes)
        y = jnp.maximum(_dot(y, _ld(w_ref, lay['last_w'])) + _ld(w_ref, lay['last_s']), 0.0)
        llast = lay['last_len']
        m = _dot(jnp.full((1, llast), 1.0 / llast, jnp.float32), y)
        out = _dot(m, _ld(w_ref, lay['fc_w'])) + _ld(w_ref, lay['fc_b'])
        o_ref[0] = out.astype(o_ref.dtype)

    return kernel


def iv_model_forward(x_ncl, taps, wts, lay):
    B, cin, L = x_ncl.shape
    oup_pad = lay['oup_pad']
    x_blc = jnp.transpose(x_ncl.astype(jnp.float32), (0, 2, 1))   # (B, L, Cin)

    bytes_accessed = int((x_blc.size + taps.size + wts.size + B * oup_pad) * 4)
    out = pl.pallas_call(
        _make_kernel(lay),
        out_shape=jax.ShapeDtypeStruct((B, 1, oup_pad), jnp.float32),
        grid=(B,),
        in_specs=[
            pl.BlockSpec((1, L, cin), lambda b: (b, 0, 0)),
            pl.BlockSpec(taps.shape, lambda b: (0, 0)),   # constant -> fetched once
            pl.BlockSpec(wts.shape, lambda b: (0, 0)),    # constant -> fetched once
        ],
        out_specs=pl.BlockSpec((1, 1, oup_pad), lambda b: (b, 0, 0)),
        compiler_params=pltpu.CompilerParams(dimension_semantics=("parallel",)),
        cost_estimate=pl.CostEstimate(
            flops=1_100_000 * B, transcendentals=0, bytes_accessed=bytes_accessed),
    )(x_blc, taps, wts)
    return out.reshape(B, oup_pad)[:, :lay['oup']]


# ============================================================================
# Pure-JAX reference mirroring the PyTorch graph (validates all the folding)
# ============================================================================
def reference_forward(x_ncl, raw):
    x = jnp.transpose(jnp.asarray(x_ncl, jnp.float32), (0, 2, 1))  # (B, L, C)

    def bn(v, p):
        return (v - p['mean']) / np.sqrt(p['var'] + _BN_EPS) * p['gamma'] + p['beta']

    def conv1x1(v, w):                    # w (cout, cin)
        return jnp.einsum('blc,oc->blo', v, jnp.asarray(w))

    def taps3(v, stride, pad_value=0.0):
        vp = jnp.pad(v, ((0, 0), (1, 1), (0, 0)), constant_values=pad_value)
        lout = (v.shape[1] - 1) // stride + 1
        return [vp[:, k:k + (lout - 1) * stride + 1:stride, :] for k in range(3)]

    def dwconv(v, w, stride):             # w (C, 1, 3)
        t = taps3(v, stride)
        return sum(t[k] * jnp.asarray(w[:, 0, k])[None, None, :] for k in range(3))

    def stemconv(v, w, stride):           # w (12, cin, 3)
        t = taps3(v, stride)
        return sum(jnp.einsum('blc,oc->blo', t[k], jnp.asarray(w[:, :, k])) for k in range(3))

    def shuffle(v):
        b_, l_, c_ = v.shape
        return v.reshape(b_, l_, 2, c_ // 2).transpose(0, 1, 3, 2).reshape(b_, l_, c_)

    y = jax.nn.relu(bn(stemconv(x, raw['stem_w'], 2), raw['stem_bn']))
    t = taps3(y, 2, pad_value=-jnp.inf)
    y = jnp.maximum(jnp.maximum(t[0], t[1]), t[2])

    for stage in raw['stages']:
        for blk in stage:
            if blk['stride'] == 2:
                a = bn(dwconv(y, blk['b1_dw_w'], 2), blk['b1_dw_bn'])
                a = jax.nn.relu(bn(conv1x1(a, blk['b1_pw_w']), blk['b1_pw_bn']))
                h = jax.nn.relu(bn(conv1x1(y, blk['pw1_w']), blk['pw1_bn']))
                h = bn(dwconv(h, blk['dw_w'], 2), blk['dw_bn'])
                b2 = jax.nn.relu(bn(conv1x1(h, blk['pw2_w']), blk['pw2_bn']))
                y = shuffle(jnp.concatenate([a, b2], axis=-1))
            else:
                c = y.shape[-1]
                x1, x2 = y[..., :c // 2], y[..., c // 2:]
                h = jax.nn.relu(bn(conv1x1(x2, blk['pw1_w']), blk['pw1_bn']))
                h = bn(dwconv(h, blk['dw_w'], 1), blk['dw_bn'])
                b2 = jax.nn.relu(bn(conv1x1(h, blk['pw2_w']), blk['pw2_bn']))
                y = shuffle(jnp.concatenate([x1, b2], axis=-1))

    y = jax.nn.relu(bn(conv1x1(y, raw['last_w']), raw['last_bn']))
    m = jnp.mean(y, axis=1)
    return m @ jnp.asarray(raw['fc_w']).T + jnp.asarray(raw['fc_b'])[None, :]


# ============================================================================
if __name__ == "__main__":
    B, CIN, L, OUP = 2, 2, 128, 2        # L divisible by 32 (five stride-2 stages)
    key = jax.random.PRNGKey(0)
    kx, kp = jax.random.split(key)
    x = jax.random.normal(kx, (B, CIN, L), jnp.float32)

    raw = build_raw_params(kp, inp=CIN, oup=OUP)
    taps, wts, lay = build_packed_params(raw, length=L)

    fwd = jax.jit(lambda xx, tt, ww: iv_model_forward(xx, tt, ww, lay))
    out = jax.block_until_ready(fwd(x, taps, wts))
    assert out.shape == (B, OUP), out.shape
    assert bool(jnp.all(jnp.isfinite(out)))

    ref = reference_forward(x, raw)
    err = float(jnp.max(jnp.abs(out - ref)))
    assert bool(jnp.allclose(out, ref, rtol=1e-3, atol=1e-3)), f"max abs err {err}"
    print("KERNEL_OK")
</pallas_src>

<mosaic_0001>
module attributes {stable_mosaic.version = 11 : i64} {
  func.func @kernel(%arg0: i32, %arg1: memref<1x128x2xf32, #tpu.memory_space<vmem>>, %arg2: memref<448x128xf32, #tpu.memory_space<vmem>>, %arg3: memref<1288x256xf32, #tpu.memory_space<vmem>>, %arg4: memref<1x1x128xf32, #tpu.memory_space<vmem>>) attributes {dimension_semantics = [#tpu.dimension_semantics<parallel>], iteration_bounds = array<i64: 2>, scalar_prefetch = 0 : i64, scratch_operands = 0 : i64, tpu.core_type = #tpu.core_type<tc>, window_params = [{transform_indices = @transform_0, window_bounds = array<i64: 1, 128, 2>}, {pipeline_mode = #tpu.pipeline_mode<synchronous>, transform_indices = @transform_1, window_bounds = array<i64: 448, 128>}, {pipeline_mode = #tpu.pipeline_mode<synchronous>, transform_indices = @transform_2, window_bounds = array<i64: 1288, 256>}, {transform_indices = @transform_3, window_bounds = array<i64: 1, 1, 128>}]} {
    %c0 = arith.constant 0 : index
    %c0_0 = arith.constant 0 : index
    %c0_1 = arith.constant 0 : index
    %0 = vector.load %arg1[%c0, %c0_0, %c0_1] : memref<1x128x2xf32, #tpu.memory_space<vmem>>, vector<1x128x2xf32>
    %1 = vector.shape_cast %0 : vector<1x128x2xf32> to vector<128x2xf32>
    %c0_2 = arith.constant 0 : index
    %c0_3 = arith.constant 0 : index
    %2 = vector.load %arg2[%c0_2, %c0_3] : memref<448x128xf32, #tpu.memory_space<vmem>>, vector<192x128xf32>
    %cst = arith.constant dense<0.000000e+00> : vector<192x2xf32>
    %3 = tpu.matmul %2, %1, %cst {dimension_numbers = #tpu.dot_dimension_numbers<[1], [0], [0], [1], [0, 0, 1, 1], [], []>} : vector<192x128xf32>, vector<128x2xf32>, vector<192x2xf32> -> vector<192x2xf32>
    %4 = vector.extract_strided_slice %3 {offsets = [0, 0], sizes = [64, 2], strides = [1, 1]} : vector<192x2xf32> to vector<64x2xf32>
    %5 = vector.extract_strided_slice %3 {offsets = [64, 0], sizes = [64, 2], strides = [1, 1]} : vector<192x2xf32> to vector<64x2xf32>
    %6 = vector.extract_strided_slice %3 {offsets = [128, 0], sizes = [64, 2], strides = [1, 1]} : vector<192x2xf32> to vector<64x2xf32>
    %c24 = arith.constant 24 : index
    %c0_4 = arith.constant 0 : index
    %7 = vector.load %arg3[%c24, %c0_4] : memref<1288x256xf32, #tpu.memory_space<vmem>>, vector<1x12xf32>
    %c0_5 = arith.constant 0 : index
    %c0_6 = arith.constant 0 : index
    %8 = vector.load %arg3[%c0_5, %c0_6] : memref<1288x256xf32, #tpu.memory_space<vmem>>, vector<2x12xf32>
    %cst_7 = arith.constant dense<0.000000e+00> : vector<64x12xf32>
    %9 = tpu.matmul %4, %8, %cst_7 {dimension_numbers = #tpu.dot_dimension_numbers<[1], [0], [0], [1], [0, 0, 1, 1], [], []>} : vector<64x2xf32>, vector<2x12xf32>, vector<64x12xf32> -> vector<64x12xf32>
    %10 = vector.broadcast %7 : vector<1x12xf32> to vector<64x12xf32>
    %11 = arith.addf %10, %9 : vector<64x12xf32>
    %c8 = arith.constant 8 : index
    %c0_8 = arith.constant 0 : index
    %12 = vector.load %arg3[%c8, %c0_8] : memref<1288x256xf32, #tpu.memory_space<vmem>>, vector<2x12xf32>
    %cst_9 = arith.constant dense<0.000000e+00> : vector<64x12xf32>
    %13 = tpu.matmul %5, %12, %cst_9 {dimension_numbers = #tpu.dot_dimension_numbers<[1], [0], [0], [1], [0, 0, 1, 1], [], []>} : vector<64x2xf32>, vector<2x12xf32>, vector<64x12xf32> -> vector<64x12xf32>
    %14 = arith.addf %11, %13 : vector<64x12xf32>
    %c16 = arith.constant 16 : index
    %c0_10 = arith.constant 0 : index
    %15 = vector.load %arg3[%c16, %c0_10] : memref<1288x256xf32, #tpu.memory_space<vmem>>, vector<2x12xf32>
    %cst_11 = arith.constant dense<0.000000e+00> : vector<64x12xf32>
    %16 = tpu.matmul %6, %15, %cst_11 {dimension_numbers = #tpu.dot_dimension_numbers<[1], [0], [0], [1], [0, 0, 1, 1], [], []>} : vector<64x2xf32>, vector<2x12xf32>, vector<64x12xf32> -> vector<64x12xf32>
    %17 = arith.addf %14, %16 : vector<64x12xf32>
    %cst_12 = arith.constant 0.000000e+00 : f32
    %18 = vector.broadcast %cst_12 : f32 to vector<64x12xf32>
    %19 = arith.maximumf %17, %18 : vector<64x12xf32>
    %c192 = arith.constant 192 : index
    %c0_13 = arith.constant 0 : index
    %20 = vector.load %arg2[%c192, %c0_13] : memref<448x128xf32, #tpu.memory_space<vmem>>, vector<96x64xf32>
    %cst_14 = arith.constant dense<0.000000e+00> : vector<96x12xf32>
    %21 = tpu.matmul %20, %19, %cst_14 {dimension_numbers = #tpu.dot_dimension_numbers<[1], [0], [0], [1], [0, 0, 1, 1], [], []>} : vector<96x64xf32>, vector<64x12xf32>, vector<96x12xf32> -> vector<96x12xf32>
    %22 = vector.extract_strided_slice %21 {offsets = [0, 0], sizes = [32, 12], strides = [1, 1]} : vector<96x12xf32> to vector<32x12xf32>
    %23 = vector.extract_strided_slice %21 {offsets = [32, 0], sizes = [32, 12], strides = [1, 1]} : vector<96x12xf32> to vector<32x12xf32>
    %24 = vector.extract_strided_slice %21 {offsets = [64, 0], sizes = [32, 12], strides = [1, 1]} : vector<96x12xf32> to vector<32x12xf32>
    %25 = arith.maximumf %22, %23 : vector<32x12xf32>
    %26 = arith.maximumf %25, %24 : vector<32x12xf32>
    %c32 = arith.constant 32 : index
    %c0_15 = arith.constant 0 : index
    %27 = vector.load %arg3[%c32, %c0_15] : memref<1288x256xf32, #tpu.memory_space<vmem>>, vector<4x12xf32>
    %c288 = arith.constant 288 : index
    %c0_16 = arith.constant 0 : index
    %28 = vector.load %arg2[%c288, %c0_16] : memref<448x128xf32, #tpu.memory_space<vmem>>, vector<48x32xf32>
    %cst_17 = arith.constant dense<0.000000e+00> : vector<48x12xf32>
    %29 = tpu.matmul %28, %26, %cst_17 {dimension_numbers = #tpu.dot_dimension_numbers<[1], [0], [0], [1], [0, 0, 1, 1], [], []>} : vector<48x32xf32>, vector<32x12xf32>, vector<48x12xf32> -> vector<48x12xf32>
    %30 = vector.extract_strided_slice %29 {offsets = [0, 0], sizes = [16, 12], strides = [1, 1]} : vector<48x12xf32> to vector<16x12xf32>
    %31 = vector.extract_strided_slice %29 {offsets = [16, 0], sizes = [16, 12], strides = [1, 1]} : vector<48x12xf32> to vector<16x12xf32>
    %32 = vector.extract_strided_slice %29 {offsets = [32, 0], sizes = [16, 12], strides = [1, 1]} : vector<48x12xf32> to vector<16x12xf32>
    %33 = vector.extract_strided_slice %27 {offsets = [0, 0], sizes = [1, 12], strides = [1, 1]} : vector<4x12xf32> to vector<1x12xf32>
    %34 = vector.broadcast %33 : vector<1x12xf32> to vector<16x12xf32>
    %35 = arith.mulf %30, %34 : vector<16x12xf32>
    %36 = vector.extract_strided_slice %27 {offsets = [1, 0], sizes = [1, 12], strides = [1, 1]} : vector<4x12xf32> to vector<1x12xf32>
    %37 = vector.broadcast %36 : vector<1x12xf32> to vector<16x12xf32>
    %38 = arith.mulf %31, %37 : vector<16x12xf32>
    %39 = arith.addf %35, %38 : vector<16x12xf32>
    %40 = vector.extract_strided_slice %27 {offsets = [2, 0], sizes = [1, 12], strides = [1, 1]} : vector<4x12xf32> to vector<1x12xf32>
    %41 = vector.broadcast %40 : vector<1x12xf32> to vector<16x12xf32>
    %42 = arith.mulf %32, %41 : vector<16x12xf32>
    %43 = arith.addf %39, %42 : vector<16x12xf32>
    %44 = vector.extract_strided_slice %27 {offsets = [3, 0], sizes = [1, 12], strides = [1, 1]} : vector<4x12xf32> to vector<1x12xf32>
    %45 = vector.broadcast %44 : vector<1x12xf32> to vector<16x12xf32>
    %46 = arith.addf %43, %45 : vector<16x12xf32>
    %c40 = arith.constant 40 : index
    %c0_18 = arith.constant 0 : index
    %47 = vector.load %arg3[%c40, %c0_18] : memref<1288x256xf32, #tpu.memory_space<vmem>>, vector<12x24xf32>
    %cst_19 = arith.constant dense<0.000000e+00> : vector<16x24xf32>
    %48 = tpu.matmul %46, %47, %cst_19 {dimension_numbers = #tpu.dot_dimension_numbers<[1], [0], [0], [1], [0, 0, 1, 1], [], []>} : vector<16x12xf32>, vector<12x24xf32>, vector<16x24xf32> -> vector<16x24xf32>
    %c56 = arith.constant 56 : index
    %c0_20 = arith.constant 0 : index
    %49 = vector.load %arg3[%c56, %c0_20] : memref<1288x256xf32, #tpu.memory_space<vmem>>, vector<1x24xf32>
    %50 = vector.broadcast %49 : vector<1x24xf32> to vector<16x24xf32>
    %51 = arith.addf %48, %50 : vector<16x24xf32>
    %cst_21 = arith.constant 0.000000e+00 : f32
    %52 = vector.broadcast %cst_21 : f32 to vector<16x24xf32>
    %53 = arith.maximumf %51, %52 : vector<16x24xf32>
    %c64 = arith.constant 64 : index
    %c0_22 = arith.constant 0 : index
    %54 = vector.load %arg3[%c64, %c0_22] : memref<1288x256xf32, #tpu.memory_space<vmem>>, vector<12x12xf32>
    %cst_23 = arith.constant dense<0.000000e+00> : vector<32x12xf32>
    %55 = tpu.matmul %26, %54, %cst_23 {dimension_numbers = #tpu.dot_dimension_numbers<[1], [0], [0], [1], [0, 0, 1, 1], [], []>} : vector<32x12xf32>, vector<12x12xf32>, vector<32x12xf32> -> vector<32x12xf32>
    %c80 = arith.constant 80 : index
    %c0_24 = arith.constant 0 : index
    %56 = vector.load %arg3[%c80, %c0_24] : memref<1288x256xf32, #tpu.memory_space<vmem>>, vector<1x12xf32>
    %57 = vector.broadcast %56 : vector<1x12xf32> to vector<32x12xf32>
    %58 = arith.addf %55, %57 : vector<32x12xf32>
    %cst_25 = arith.constant 0.000000e+00 : f32
    %59 = vector.broadcast %cst_25 : f32 to vector<32x12xf32>
    %60 = arith.maximumf %58, %59 : vector<32x12xf32>
    %c88 = arith.constant 88 : index
    %c0_26 = arith.constant 0 : index
    %61 = vector.load %arg3[%c88, %c0_26] : memref<1288x256xf32, #tpu.memory_space<vmem>>, vector<4x12xf32>
    %c288_27 = arith.constant 288 : index
    %c0_28 = arith.constant 0 : index
    %62 = vector.load %arg2[%c288_27, %c0_28] : memref<448x128xf32, #tpu.memory_space<vmem>>, vector<48x32xf32>
    %cst_29 = arith.constant dense<0.000000e+00> : vector<48x12xf32>
    %63 = tpu.matmul %62, %60, %cst_29 {dimension_numbers = #tpu.dot_dimension_numbers<[1], [0], [0], [1], [0, 0, 1, 1], [], []>} : vector<48x32xf32>, vector<32x12xf32>, vector<48x12xf32> -> vector<48x12xf32>
    %64 = vector.extract_strided_slice %63 {offsets = [0, 0], sizes = [16, 12], strides = [1, 1]} : vector<48x12xf32> to vector<16x12xf32>
    %65 = vector.extract_strided_slice %63 {offsets = [16, 0], sizes = [16, 12], strides = [1, 1]} : vector<48x12xf32> to vector<16x12xf32>
    %66 = vector.extract_strided_slice %63 {offsets = [32, 0], sizes = [16, 12], strides = [1, 1]} : vector<48x12xf32> to vector<16x12xf32>
    %67 = vector.extract_strided_slice %61 {offsets = [0, 0], sizes = [1, 12], strides = [1, 1]} : vector<4x12xf32> to vector<1x12xf32>
    %68 = vector.broadcast %67 : vector<1x12xf32> to vector<16x12xf32>
    %69 = arith.mulf %64, %68 : vector<16x12xf32>
    %70 = vector.extract_strided_slice %61 {offsets = [1, 0], sizes = [1, 12], strides = [1, 1]} : vector<4x12xf32> to vector<1x12xf32>
    %71 = vector.broadcast %70 : vector<1x12xf32> to vector<16x12xf32>
    %72 = arith.mulf %65, %71 : vector<16x12xf32>
    %73 = arith.addf %69, %72 : vector<16x12xf32>
    %74 = vector.extract_strided_slice %61 {offsets = [2, 0], sizes = [1, 12], strides = [1, 1]} : vector<4x12xf32> to vector<1x12xf32>
    %75 = vector.broadcast %74 : vector<1x12xf32> to vector<16x12xf32>
    %76 = arith.mulf %66, %75 : vector<16x12xf32>
    %77 = arith.addf %73, %76 : vector<16x12xf32>
    %78 = vector.extract_strided_slice %61 {offsets = [3, 0], sizes = [1, 12], strides = [1, 1]} : vector<4x12xf32> to vector<1x12xf32>
    %79 = vector.broadcast %78 : vector<1x12xf32> to vector<16x12xf32>
    %80 = arith.addf %77, %79 : vector<16x12xf32>
    %c96 = arith.constant 96 : index
    %c0_30 = arith.constant 0 : index
    %81 = vector.load %arg3[%c96, %c0_30] : memref<1288x256xf32, #tpu.memory_space<vmem>>, vector<12x24xf32>
    %cst_31 = arith.constant dense<0.000000e+00> : vector<16x24xf32>
    %82 = tpu.matmul %80, %81, %cst_31 {dimension_numbers = #tpu.dot_dimension_numbers<[1], [0], [0], [1], [0, 0, 1, 1], [], []>} : vector<16x12xf32>, vector<12x24xf32>, vector<16x24xf32> -> vector<16x24xf32>
    %c112 = arith.constant 112 : index
    %c0_32 = arith.constant 0 : index
    %83 = vector.load %arg3[%c112, %c0_32] : memref<1288x256xf32, #tpu.memory_space<vmem>>, vector<1x24xf32>
    %84 = vector.broadcast %83 : vector<1x24xf32> to vector<16x24xf32>
    %85 = arith.addf %82, %84 : vector<16x24xf32>
    %cst_33 = arith.constant 0.000000e+00 : f32
    %86 = vector.broadcast %cst_33 : f32 to vector<16x24xf32>
    %87 = arith.maximumf %85, %86 : vector<16x24xf32>
    %88 = arith.addf %53, %87 : vector<16x24xf32>
    %c120 = arith.constant 120 : index
    %c0_34 = arith.constant 0 : index
    %89 = vector.load %arg3[%c120, %c0_34] : memref<1288x256xf32, #tpu.memory_space<vmem>>, vector<24x12xf32>
    %cst_35 = arith.constant dense<0.000000e+00> : vector<16x12xf32>
    %90 = tpu.matmul %88, %89, %cst_35 {dimension_numbers = #tpu.dot_dimension_numbers<[1], [0], [0], [1], [0, 0, 1, 1], [], []>} : vector<16x24xf32>, vector<24x12xf32>, vector<16x12xf32> -> vector<16x12xf32>
    %c144 = arith.constant 144 : index
    %c0_36 = arith.constant 0 : index
    %91 = vector.load %arg3[%c144, %c0_36] : memref<1288x256xf32, #tpu.memory_space<vmem>>, vector<1x12xf32>
    %92 = vector.broadcast %91 : vector<1x12xf32> to vector<16x12xf32>
    %93 = arith.addf %90, %92 : vector<16x12xf32>
    %cst_37 = arith.constant 0.000000e+00 : f32
    %94 = vector.broadcast %cst_37 : f32 to vector<16x12xf32>
    %95 = arith.maximumf %93, %94 : vector<16x12xf32>
    %c152 = arith.constant 152 : index
    %c0_38 = arith.constant 0 : index
    %96 = vector.load %arg3[%c152, %c0_38] : memref<1288x256xf32, #tpu.memory_space<vmem>>, vector<4x12xf32>
    %c336 = arith.constant 336 : index
    %c0_39 = arith.constant 0 : index
    %97 = vector.load %arg2[%c336, %c0_39] : memref<448x128xf32, #tpu.memory_space<vmem>>, vector<32x16xf32>
    %cst_40 = arith.constant dense<0.000000e+00> : vector<32x12xf32>
    %98 = tpu.matmul %97, %95, %cst_40 {dimension_numbers = #tpu.dot_dimension_numbers<[1], [0], [0], [1], [0, 0, 1, 1], [], []>} : vector<32x16xf32>, vector<16x12xf32>, vector<32x12xf32> -> vector<32x12xf32>
    %99 = vector.extract_strided_slice %98 {offsets = [0, 0], sizes = [16, 12], strides = [1, 1]} : vector<32x12xf32> to vector<16x12xf32>
    %100 = vector.extract_strided_slice %98 {offsets = [16, 0], sizes = [16, 12], strides = [1, 1]} : vector<32x12xf32> to vector<16x12xf32>
    %101 = vector.extract_strided_slice %96 {offsets = [0, 0], sizes = [1, 12], strides = [1, 1]} : vector<4x12xf32> to vector<1x12xf32>
    %102 = vector.broadcast %101 : vector<1x12xf32> to vector<16x12xf32>
    %103 = arith.mulf %99, %102 : vector<16x12xf32>
    %104 = vector.extract_strided_slice %96 {offsets = [1, 0], sizes = [1, 12], strides = [1, 1]} : vector<4x12xf32> to vector<1x12xf32>
    %105 = vector.broadcast %104 : vector<1x12xf32> to vector<16x12xf32>
    %106 = arith.mulf %95, %105 : vector<16x12xf32>
    %107 = arith.addf %103, %106 : vector<16x12xf32>
    %108 = vector.extract_strided_slice %96 {offsets = [2, 0], sizes = [1, 12], strides = [1, 1]} : vector<4x12xf32> to vector<1x12xf32>
    %109 = vector.broadcast %108 : vector<1x12xf32> to vector<16x12xf32>
    %110 = arith.mulf %100, %109 : vector<16x12xf32>
    %111 = arith.addf %107, %110 : vector<16x12xf32>
    %112 = vector.extract_strided_slice %96 {offsets = [3, 0], sizes = [1, 12], strides = [1, 1]} : vector<4x12xf32> to vector<1x12xf32>
    %113 = vector.broadcast %112 : vector<1x12xf32> to vector<16x12xf32>
    %114 = arith.addf %111, %113 : vector<16x12xf32>
    %c160 = arith.constant 160 : index
    %c0_41 = arith.constant 0 : index
    %115 = vector.load %arg3[%c160, %c0_41] : memref<1288x256xf32, #tpu.memory_space<vmem>>, vector<12x24xf32>
    %cst_42 = arith.constant dense<0.000000e+00> : vector<16x24xf32>
    %116 = tpu.matmul %114, %115, %cst_42 {dimension_numbers = #tpu.dot_dimension_numbers<[1], [0], [0], [1], [0, 0, 1, 1], [], []>} : vector<16x12xf32>, vector<12x24xf32>, vector<16x24xf32> -> vector<16x24xf32>
    %c176 = arith.constant 176 : index
    %c0_43 = arith.constant 0 : index
    %117 = vector.load %arg3[%c176, %c0_43] : memref<1288x256xf32, #tpu.memory_space<vmem>>, vector<1x24xf32>
    %118 = vector.broadcast %117 : vector<1x24xf32> to vector<16x24xf32>
    %119 = arith.addf %116, %118 : vector<16x24xf32>
    %cst_44 = arith.constant 0.000000e+00 : f32
    %120 = vector.broadcast %cst_44 : f32 to vector<16x24xf32>
    %121 = arith.maximumf %119, %120 : vector<16x24xf32>
    %c184 = arith.constant 184 : index
    %c0_45 = arith.constant 0 : index
    %122 = vector.load %arg3[%c184, %c0_45] : memref<1288x256xf32, #tpu.memory_space<vmem>>, vector<1x24xf32>
    %123 = vector.broadcast %122 : vector<1x24xf32> to vector<16x24xf32>
    %124 = arith.mulf %88, %123 : vector<16x24xf32>
    %125 = arith.addf %124, %121 : vector<16x24xf32>
    %c192_46 = arith.constant 192 : index
    %c0_47 = arith.constant 0 : index
    %126 = vector.load %arg3[%c192_46, %c0_47] : memref<1288x256xf32, #tpu.memory_space<vmem>>, vector<4x24xf32>
    %c368 = arith.constant 368 : index
    %c0_48 = arith.constant 0 : index
    %127 = vector.load %arg2[%c368, %c0_48] : memref<448x128xf32, #tpu.memory_space<vmem>>, vector<24x16xf32>
    %cst_49 = arith.constant dense<0.000000e+00> : vector<24x24xf32>
    %128 = tpu.matmul %127, %125, %cst_49 {dimension_numbers = #tpu.dot_dimension_numbers<[1], [0], [0], [1], [0, 0, 1, 1], [], []>} : vector<24x16xf32>, vector<16x24xf32>, vector<24x24xf32> -> vector<24x24xf32>
    %129 = vector.extract_strided_slice %128 {offsets = [0, 0], sizes = [8, 24], strides = [1, 1]} : vector<24x24xf32> to vector<8x24xf32>
    %130 = vector.extract_strided_slice %128 {offsets = [8, 0], sizes = [8, 24], strides = [1, 1]} : vector<24x24xf32> to vector<8x24xf32>
    %131 = vector.extract_strided_slice %128 {offsets = [16, 0], sizes = [8, 24], strides = [1, 1]} : vector<24x24xf32> to vector<8x24xf32>
    %132 = vector.extract_strided_slice %126 {offsets = [0, 0], sizes = [1, 24], strides = [1, 1]} : vector<4x24xf32> to vector<1x24xf32>
    %133 = vector.broadcast %132 : vector<1x24xf32> to vector<8x24xf32>
    %134 = arith.mulf %129, %133 : vector<8x24xf32>
    %135 = vector.extract_strided_slice %126 {offsets = [1, 0], sizes = [1, 24], strides = [1, 1]} : vector<4x24xf32> to vector<1x24xf32>
    %136 = vector.broadcast %135 : vector<1x24xf32> to vector<8x24xf32>
    %137 = arith.mulf %130, %136 : vector<8x24xf32>
    %138 = arith.addf %134, %137 : vector<8x24xf32>
    %139 = vector.extract_strided_slice %126 {offsets = [2, 0], sizes = [1, 24], strides = [1, 1]} : vector<4x24xf32> to vector<1x24xf32>
    %140 = vector.broadcast %139 : vector<1x24xf32> to vector<8x24xf32>
    %141 = arith.mulf %131, %140 : vector<8x24xf32>
    %142 = arith.addf %138, %141 : vector<8x24xf32>
    %143 = vector.extract_strided_slice %126 {offsets = [3, 0], sizes = [1, 24], strides = [1, 1]} : vector<4x24xf32> to vector<1x24xf32>
    %144 = vector.broadcast %143 : vector<1x24xf32> to vector<8x24xf32>
    %145 = arith.addf %142, %144 : vector<8x24xf32>
    %c200 = arith.constant 200 : index
    %c0_50 = arith.constant 0 : index
    %146 = vector.load %arg3[%c200, %c0_50] : memref<1288x256xf32, #tpu.memory_space<vmem>>, vector<24x48xf32>
    %cst_51 = arith.constant dense<0.000000e+00> : vector<8x48xf32>
    %147 = tpu.matmul %145, %146, %cst_51 {dimension_numbers = #tpu.dot_dimension_numbers<[1], [0], [0], [1], [0, 0, 1, 1], [], []>} : vector<8x24xf32>, vector<24x48xf32>, vector<8x48xf32> -> vector<8x48xf32>
    %c224 = arith.constant 224 : index
    %c0_52 = arith.constant 0 : index
    %148 = vector.load %arg3[%c224, %c0_52] : memref<1288x256xf32, #tpu.memory_space<vmem>>, vector<1x48xf32>
    %149 = vector.broadcast %148 : vector<1x48xf32> to vector<8x48xf32>
    %150 = arith.addf %147, %149 : vector<8x48xf32>
    %cst_53 = arith.constant 0.000000e+00 : f32
    %151 = vector.broadcast %cst_53 : f32 to vector<8x48xf32>
    %152 = arith.maximumf %150, %151 : vector<8x48xf32>
    %c232 = arith.constant 232 : index
    %c0_54 = arith.constant 0 : index
    %153 = vector.load %arg3[%c232, %c0_54] : memref<1288x256xf32, #tpu.memory_space<vmem>>, vector<24x24xf32>
    %cst_55 = arith.constant dense<0.000000e+00> : vector<16x24xf32>
    %154 = tpu.matmul %125, %153, %cst_55 {dimension_numbers = #tpu.dot_dimension_numbers<[1], [0], [0], [1], [0, 0, 1, 1], [], []>} : vector<16x24xf32>, vector<24x24xf32>, vector<16x24xf32> -> vector<16x24xf32>
    %c256 = arith.constant 256 : index
    %c0_56 = arith.constant 0 : index
    %155 = vector.load %arg3[%c256, %c0_56] : memref<1288x256xf32, #tpu.memory_space<vmem>>, vector<1x24xf32>
    %156 = vector.broadcast %155 : vector<1x24xf32> to vector<16x24xf32>
    %157 = arith.addf %154, %156 : vector<16x24xf32>
    %cst_57 = arith.constant 0.000000e+00 : f32
    %158 = vector.broadcast %cst_57 : f32 to vector<16x24xf32>
    %159 = arith.maximumf %157, %158 : vector<16x24xf32>
    %c264 = arith.constant 264 : index
    %c0_58 = arith.constant 0 : index
    %160 = vector.load %arg3[%c264, %c0_58] : memref<1288x256xf32, #tpu.memory_space<vmem>>, vector<4x24xf32>
    %c368_59 = arith.constant 368 : index
    %c0_60 = arith.constant 0 : index
    %161 = vector.load %arg2[%c368_59, %c0_60] : memref<448x128xf32, #tpu.memory_space<vmem>>, vector<24x16xf32>
    %cst_61 = arith.constant dense<0.000000e+00> : vector<24x24xf32>
    %162 = tpu.matmul %161, %159, %cst_61 {dimension_numbers = #tpu.dot_dimension_numbers<[1], [0], [0], [1], [0, 0, 1, 1], [], []>} : vector<24x16xf32>, vector<16x24xf32>, vector<24x24xf32> -> vector<24x24xf32>
    %163 = vector.extract_strided_slice %162 {offsets = [0, 0], sizes = [8, 24], strides = [1, 1]} : vector<24x24xf32> to vector<8x24xf32>
    %164 = vector.extract_strided_slice %162 {offsets = [8, 0], sizes = [8, 24], strides = [1, 1]} : vector<24x24xf32> to vector<8x24xf32>
    %165 = vector.extract_strided_slice %162 {offsets = [16, 0], sizes = [8, 24], strides = [1, 1]} : vector<24x24xf32> to vector<8x24xf32>
    %166 = vector.extract_strided_slice %160 {offsets = [0, 0], sizes = [1, 24], strides = [1, 1]} : vector<4x24xf32> to vector<1x24xf32>
    %167 = vector.broadcast %166 : vector<1x24xf32> to vector<8x24xf32>
    %168 = arith.mulf %163, %167 : vector<8x24xf32>
    %169 = vector.extract_strided_slice %160 {offsets = [1, 0], sizes = [1, 24], strides = [1, 1]} : vector<4x24xf32> to vector<1x24xf32>
    %170 = vector.broadcast %169 : vector<1x24xf32> to vector<8x24xf32>
    %171 = arith.mulf %164, %170 : vector<8x24xf32>
    %172 = arith.addf %168, %171 : vector<8x24xf32>
    %173 = vector.extract_strided_slice %160 {offsets = [2, 0], sizes = [1, 24], strides = [1, 1]} : vector<4x24xf32> to vector<1x24xf32>
    %174 = vector.broadcast %173 : vector<1x24xf32> to vector<8x24xf32>
    %175 = arith.mulf %165, %174 : vector<8x24xf32>
    %176 = arith.addf %172, %175 : vector<8x24xf32>
    %177 = vector.extract_strided_slice %160 {offsets = [3, 0], sizes = [1, 24], strides = [1, 1]} : vector<4x24xf32> to vector<1x24xf32>
    %178 = vector.broadcast %177 : vector<1x24xf32> to vector<8x24xf32>
    %179 = arith.addf %176, %178 : vector<8x24xf32>
    %c272 = arith.constant 272 : index
    %c0_62 = arith.constant 0 : index
    %180 = vector.load %arg3[%c272, %c0_62] : memref<1288x256xf32, #tpu.memory_space<vmem>>, vector<24x48xf32>
    %cst_63 = arith.constant dense<0.000000e+00> : vector<8x48xf32>
    %181 = tpu.matmul %179, %180, %cst_63 {dimension_numbers = #tpu.dot_dimension_numbers<[1], [0], [0], [1], [0, 0, 1, 1], [], []>} : vector<8x24xf32>, vector<24x48xf32>, vector<8x48xf32> -> vector<8x48xf32>
    %c296 = arith.constant 296 : index
    %c0_64 = arith.constant 0 : index
    %182 = vector.load %arg3[%c296, %c0_64] : memref<1288x256xf32, #tpu.memory_space<vmem>>, vector<1x48xf32>
    %183 = vector.broadcast %182 : vector<1x48xf32> to vector<8x48xf32>
    %184 = arith.addf %181, %183 : vector<8x48xf32>
    %cst_65 = arith.constant 0.000000e+00 : f32
    %185 = vector.broadcast %cst_65 : f32 to vector<8x48xf32>
    %186 = arith.maximumf %184, %185 : vector<8x48xf32>
    %187 = arith.addf %152, %186 : vector<8x48xf32>
    %c304 = arith.constant 304 : index
    %c0_66 = arith.constant 0 : index
    %188 = vector.load %arg3[%c304, %c0_66] : memref<1288x256xf32, #tpu.memory_space<vmem>>, vector<48x24xf32>
    %cst_67 = arith.constant dense<0.000000e+00> : vector<8x24xf32>
    %189 = tpu.matmul %187, %188, %cst_67 {dimension_numbers = #tpu.dot_dimension_numbers<[1], [0], [0], [1], [0, 0, 1, 1], [], []>} : vector<8x48xf32>, vector<48x24xf32>, vector<8x24xf32> -> vector<8x24xf32>
    %c352 = arith.constant 352 : index
    %c0_68 = arith.constant 0 : index
    %190 = vector.load %arg3[%c352, %c0_68] : memref<1288x256xf32, #tpu.memory_space<vmem>>, vector<1x24xf32>
    %191 = vector.broadcast %190 : vector<1x24xf32> to vector<8x24xf32>
    %192 = arith.addf %189, %191 : vector<8x24xf32>
    %cst_69 = arith.constant 0.000000e+00 : f32
    %193 = vector.broadcast %cst_69 : f32 to vector<8x24xf32>
    %194 = arith.maximumf %192, %193 : vector<8x24xf32>
    %c360 = arith.constant 360 : index
    %c0_70 = arith.constant 0 : index
    %195 = vector.load %arg3[%c360, %c0_70] : memref<1288x256xf32, #tpu.memory_space<vmem>>, vector<4x24xf32>
    %c392 = arith.constant 392 : index
    %c0_71 = arith.constant 0 : index
    %196 = vector.load %arg2[%c392, %c0_71] : memref<448x128xf32, #tpu.memory_space<vmem>>, vector<16x8xf32>
    %cst_72 = arith.constant dense<0.000000e+00> : vector<16x24xf32>
    %197 = tpu.matmul %196, %194, %cst_72 {dimension_numbers = #tpu.dot_dimension_numbers<[1], [0], [0], [1], [0, 0, 1, 1], [], []>} : vector<16x8xf32>, vector<8x24xf32>, vector<16x24xf32> -> vector<16x24xf32>
    %198 = vector.extract_strided_slice %197 {offsets = [0, 0], sizes = [8, 24], strides = [1, 1]} : vector<16x24xf32> to vector<8x24xf32>
    %199 = vector.extract_strided_slice %197 {offsets = [8, 0], sizes = [8, 24], strides = [1, 1]} : vector<16x24xf32> to vector<8x24xf32>
    %200 = vector.extract_strided_slice %195 {offsets = [0, 0], sizes = [1, 24], strides = [1, 1]} : vector<4x24xf32> to vector<1x24xf32>
    %201 = vector.broadcast %200 : vector<1x24xf32> to vector<8x24xf32>
    %202 = arith.mulf %198, %201 : vector<8x24xf32>
    %203 = vector.extract_strided_slice %195 {offsets = [1, 0], sizes = [1, 24], strides = [1, 1]} : vector<4x24xf32> to vector<1x24xf32>
    %204 = vector.broadcast %203 : vector<1x24xf32> to vector<8x24xf32>
    %205 = arith.mulf %194, %204 : vector<8x24xf32>
    %206 = arith.addf %202, %205 : vector<8x24xf32>
    %207 = vector.extract_strided_slice %195 {offsets = [2, 0], sizes = [1, 24], strides = [1, 1]} : vector<4x24xf32> to vector<1x24xf32>
    %208 = vector.broadcast %207 : vector<1x24xf32> to vector<8x24xf32>
    %209 = arith.mulf %199, %208 : vector<8x24xf32>
    %210 = arith.addf %206, %209 : vector<8x24xf32>
    %211 = vector.extract_strided_slice %195 {offsets = [3, 0], sizes = [1, 24], strides = [1, 1]} : vector<4x24xf32> to vector<1x24xf32>
    %212 = vector.broadcast %211 : vector<1x24xf32> to vector<8x24xf32>
    %213 = arith.addf %210, %212 : vector<8x24xf32>
    %c368_73 = arith.constant 368 : index
    %c0_74 = arith.constant 0 : index
    %214 = vector.load %arg3[%c368_73, %c0_74] : memref<1288x256xf32, #tpu.memory_space<vmem>>, vector<24x48xf32>
    %cst_75 = arith.constant dense<0.000000e+00> : vector<8x48xf32>
    %215 = tpu.matmul %213, %214, %cst_75 {dimension_numbers = #tpu.dot_dimension_numbers<[1], [0], [0], [1], [0, 0, 1, 1], [], []>} : vector<8x24xf32>, vector<24x48xf32>, vector<8x48xf32> -> vector<8x48xf32>
    %c392_76 = arith.constant 392 : index
    %c0_77 = arith.constant 0 : index
    %216 = vector.load %arg3[%c392_76, %c0_77] : memref<1288x256xf32, #tpu.memory_space<vmem>>, vector<1x48xf32>
    %217 = vector.broadcast %216 : vector<1x48xf32> to vector<8x48xf32>
    %218 = arith.addf %215, %217 : vector<8x48xf32>
    %cst_78 = arith.constant 0.000000e+00 : f32
    %219 = vector.broadcast %cst_78 : f32 to vector<8x48xf32>
    %220 = arith.maximumf %218, %219 : vector<8x48xf32>
    %c400 = arith.constant 400 : index
    %c0_79 = arith.constant 0 : index
    %221 = vector.load %arg3[%c400, %c0_79] : memref<1288x256xf32, #tpu.memory_space<vmem>>, vector<1x48xf32>
    %222 = vector.broadcast %221 : vector<1x48xf32> to vector<8x48xf32>
    %223 = arith.mulf %187, %222 : vector<8x48xf32>
    %224 = arith.addf %223, %220 : vector<8x48xf32>
    %c408 = arith.constant 408 : index
    %c0_80 = arith.constant 0 : index
    %225 = vector.load %arg3[%c408, %c0_80] : memref<1288x256xf32, #tpu.memory_space<vmem>>, vector<48x24xf32>
    %cst_81 = arith.constant dense<0.000000e+00> : vector<8x24xf32>
    %226 = tpu.matmul %224, %225, %cst_81 {dimension_numbers = #tpu.dot_dimension_numbers<[1], [0], [0], [1], [0, 0, 1, 1], [], []>} : vector<8x48xf32>, vector<48x24xf32>, vector<8x24xf32> -> vector<8x24xf32>
    %c456 = arith.constant 456 : index
    %c0_82 = arith.constant 0 : index
    %227 = vector.load %arg3[%c456, %c0_82] : memref<1288x256xf32, #tpu.memory_space<vmem>>, vector<1x24xf32>
    %228 = vector.broadcast %227 : vector<1x24xf32> to vector<8x24xf32>
    %229 = arith.addf %226, %228 : vector<8x24xf32>
    %cst_83 = arith.constant 0.000000e+00 : f32
    %230 = vector.broadcast %cst_83 : f32 to vector<8x24xf32>
    %231 = arith.maximumf %229, %230 : vector<8x24xf32>
    %c464 = arith.constant 464 : index
    %c0_84 = arith.constant 0 : index
    %232 = vector.load %arg3[%c464, %c0_84] : memref<1288x256xf32, #tpu.memory_space<vmem>>, vector<4x24xf32>
    %c392_85 = arith.constant 392 : index
    %c0_86 = arith.constant 0 : index
    %233 = vector.load %arg2[%c392_85, %c0_86] : memref<448x128xf32, #tpu.memory_space<vmem>>, vector<16x8xf32>
    %cst_87 = arith.constant dense<0.000000e+00> : vector<16x24xf32>
    %234 = tpu.matmul %233, %231, %cst_87 {dimension_numbers = #tpu.dot_dimension_numbers<[1], [0], [0], [1], [0, 0, 1, 1], [], []>} : vector<16x8xf32>, vector<8x24xf32>, vector<16x24xf32> -> vector<16x24xf32>
    %235 = vector.extract_strided_slice %234 {offsets = [0, 0], sizes = [8, 24], strides = [1, 1]} : vector<16x24xf32> to vector<8x24xf32>
    %236 = vector.extract_strided_slice %234 {offsets = [8, 0], sizes = [8, 24], strides = [1, 1]} : vector<16x24xf32> to vector<8x24xf32>
    %237 = vector.extract_strided_slice %232 {offsets = [0, 0], sizes = [1, 24], strides = [1, 1]} : vector<4x24xf32> to vector<1x24xf32>
    %238 = vector.broadcast %237 : vector<1x24xf32> to vector<8x24xf32>
    %239 = arith.mulf %235, %238 : vector<8x24xf32>
    %240 = vector.extract_strided_slice %232 {offsets = [1, 0], sizes = [1, 24], strides = [1, 1]} : vector<4x24xf32> to vector<1x24xf32>
    %241 = vector.broadcast %240 : vector<1x24xf32> to vector<8x24xf32>
    %242 = arith.mulf %231, %241 : vector<8x24xf32>
    %243 = arith.addf %239, %242 : vector<8x24xf32>
    %244 = vector.extract_strided_slice %232 {offsets = [2, 0], sizes = [1, 24], strides = [1, 1]} : vector<4x24xf32> to vector<1x24xf32>
    %245 = vector.broadcast %244 : vector<1x24xf32> to vector<8x24xf32>
    %246 = arith.mulf %236, %245 : vector<8x24xf32>
    %247 = arith.addf %243, %246 : vector<8x24xf32>
    %248 = vector.extract_strided_slice %232 {offsets = [3, 0], sizes = [1, 24], strides = [1, 1]} : vector<4x24xf32> to vector<1x24xf32>
    %249 = vector.broadcast %248 : vector<1x24xf32> to vector<8x24xf32>
    %250 = arith.addf %247, %249 : vector<8x24xf32>
    %c472 = arith.constant 472 : index
    %c0_88 = arith.constant 0 : index
    %251 = vector.load %arg3[%c472, %c0_88] : memref<1288x256xf32, #tpu.memory_space<vmem>>, vector<24x48xf32>
    %cst_89 = arith.constant dense<0.000000e+00> : vector<8x48xf32>
    %252 = tpu.matmul %250, %251, %cst_89 {dimension_numbers = #tpu.dot_dimension_numbers<[1], [0], [0], [1], [0, 0, 1, 1], [], []>} : vector<8x24xf32>, vector<24x48xf32>, vector<8x48xf32> -> vector<8x48xf32>
    %c496 = arith.constant 496 : index
    %c0_90 = arith.constant 0 : index
    %253 = vector.load %arg3[%c496, %c0_90] : memref<1288x256xf32, #tpu.memory_space<vmem>>, vector<1x48xf32>
    %254 = vector.broadcast %253 : vector<1x48xf32> to vector<8x48xf32>
    %255 = arith.addf %252, %254 : vector<8x48xf32>
    %cst_91 = arith.constant 0.000000e+00 : f32
    %256 = vector.broadcast %cst_91 : f32 to vector<8x48xf32>
    %257 = arith.maximumf %255, %256 : vector<8x48xf32>
    %c504 = arith.constant 504 : index
    %c0_92 = arith.constant 0 : index
    %258 = vector.load %arg3[%c504, %c0_92] : memref<1288x256xf32, #tpu.memory_space<vmem>>, vector<1x48xf32>
    %259 = vector.broadcast %258 : vector<1x48xf32> to vector<8x48xf32>
    %260 = arith.mulf %224, %259 : vector<8x48xf32>
    %261 = arith.addf %260, %257 : vector<8x48xf32>
    %c512 = arith.constant 512 : index
    %c0_93 = arith.constant 0 : index
    %262 = vector.load %arg3[%c512, %c0_93] : memref<1288x256xf32, #tpu.memory_space<vmem>>, vector<48x24xf32>
    %cst_94 = arith.constant dense<0.000000e+00> : vector<8x24xf32>
    %263 = tpu.matmul %261, %262, %cst_94 {dimension_numbers = #tpu.dot_dimension_numbers<[1], [0], [0], [1], [0, 0, 1, 1], [], []>} : vector<8x48xf32>, vector<48x24xf32>, vector<8x24xf32> -> vector<8x24xf32>
    %c560 = arith.constant 560 : index
    %c0_95 = arith.constant 0 : index
    %264 = vector.load %arg3[%c560, %c0_95] : memref<1288x256xf32, #tpu.memory_space<vmem>>, vector<1x24xf32>
    %265 = vector.broadcast %264 : vector<1x24xf32> to vector<8x24xf32>
    %266 = arith.addf %263, %265 : vector<8x24xf32>
    %cst_96 = arith.constant 0.000000e+00 : f32
    %267 = vector.broadcast %cst_96 : f32 to vector<8x24xf32>
    %268 = arith.maximumf %266, %267 : vector<8x24xf32>
    %c568 = arith.constant 568 : index
    %c0_97 = arith.constant 0 : index
    %269 = vector.load %arg3[%c568, %c0_97] : memref<1288x256xf32, #tpu.memory_space<vmem>>, vector<4x24xf32>
    %c392_98 = arith.constant 392 : index
    %c0_99 = arith.constant 0 : index
    %270 = vector.load %arg2[%c392_98, %c0_99] : memref<448x128xf32, #tpu.memory_space<vmem>>, vector<16x8xf32>
    %cst_100 = arith.constant dense<0.000000e+00> : vector<16x24xf32>
    %271 = tpu.matmul %270, %268, %cst_100 {dimension_numbers = #tpu.dot_dimension_numbers<[1], [0], [0], [1], [0, 0, 1, 1], [], []>} : vector<16x8xf32>, vector<8x24xf32>, vector<16x24xf32> -> vector<16x24xf32>
    %272 = vector.extract_strided_slice %271 {offsets = [0, 0], sizes = [8, 24], strides = [1, 1]} : vector<16x24xf32> to vector<8x24xf32>
    %273 = vector.extract_strided_slice %271 {offsets = [8, 0], sizes = [8, 24], strides = [1, 1]} : vector<16x24xf32> to vector<8x24xf32>
    %274 = vector.extract_strided_slice %269 {offsets = [0, 0], sizes = [1, 24], strides = [1, 1]} : vector<4x24xf32> to vector<1x24xf32>
    %275 = vector.broadcast %274 : vector<1x24xf32> to vector<8x24xf32>
    %276 = arith.mulf %272, %275 : vector<8x24xf32>
    %277 = vector.extract_strided_slice %269 {offsets = [1, 0], sizes = [1, 24], strides = [1, 1]} : vector<4x24xf32> to vector<1x24xf32>
    %278 = vector.broadcast %277 : vector<1x24xf32> to vector<8x24xf32>
    %279 = arith.mulf %268, %278 : vector<8x24xf32>
    %280 = arith.addf %276, %279 : vector<8x24xf32>
    %281 = vector.extract_strided_slice %269 {offsets = [2, 0], sizes = [1, 24], strides = [1, 1]} : vector<4x24xf32> to vector<1x24xf32>
    %282 = vector.broadcast %281 : vector<1x24xf32> to vector<8x24xf32>
    %283 = arith.mulf %273, %282 : vector<8x24xf32>
    %284 = arith.addf %280, %283 : vector<8x24xf32>
    %285 = vector.extract_strided_slice %269 {offsets = [3, 0], sizes = [1, 24], strides = [1, 1]} : vector<4x24xf32> to vector<1x24xf32>
    %286 = vector.broadcast %285 : vector<1x24xf32> to vector<8x24xf32>
    %287 = arith.addf %284, %286 : vector<8x24xf32>
    %c576 = arith.constant 576 : index
    %c0_101 = arith.constant 0 : index
    %288 = vector.load %arg3[%c576, %c0_101] : memref<1288x256xf32, #tpu.memory_space<vmem>>, vector<24x48xf32>
    %cst_102 = arith.constant dense<0.000000e+00> : vector<8x48xf32>
    %289 = tpu.matmul %287, %288, %cst_102 {dimension_numbers = #tpu.dot_dimension_numbers<[1], [0], [0], [1], [0, 0, 1, 1], [], []>} : vector<8x24xf32>, vector<24x48xf32>, vector<8x48xf32> -> vector<8x48xf32>
    %c600 = arith.constant 600 : index
    %c0_103 = arith.constant 0 : index
    %290 = vector.load %arg3[%c600, %c0_103] : memref<1288x256xf32, #tpu.memory_space<vmem>>, vector<1x48xf32>
    %291 = vector.broadcast %290 : vector<1x48xf32> to vector<8x48xf32>
    %292 = arith.addf %289, %291 : vector<8x48xf32>
    %cst_104 = arith.constant 0.000000e+00 : f32
    %293 = vector.broadcast %cst_104 : f32 to vector<8x48xf32>
    %294 = arith.maximumf %292, %293 : vector<8x48xf32>
    %c608 = arith.constant 608 : index
    %c0_105 = arith.constant 0 : index
    %295 = vector.load %arg3[%c608, %c0_105] : memref<1288x256xf32, #tpu.memory_space<vmem>>, vector<1x48xf32>
    %296 = vector.broadcast %295 : vector<1x48xf32> to vector<8x48xf32>
    %297 = arith.mulf %261, %296 : vector<8x48xf32>
    %298 = arith.addf %297, %294 : vector<8x48xf32>
    %c616 = arith.constant 616 : index
    %c0_106 = arith.constant 0 : index
    %299 = vector.load %arg3[%c616, %c0_106] : memref<1288x256xf32, #tpu.memory_space<vmem>>, vector<4x48xf32>
    %c408_107 = arith.constant 408 : index
    %c0_108 = arith.constant 0 : index
    %300 = vector.load %arg2[%c408_107, %c0_108] : memref<448x128xf32, #tpu.memory_space<vmem>>, vector<24x8xf32>
    %cst_109 = arith.constant dense<0.000000e+00> : vector<24x48xf32>
    %301 = tpu.matmul %300, %298, %cst_109 {dimension_numbers = #tpu.dot_dimension_numbers<[1], [0], [0], [1], [0, 0, 1, 1], [], []>} : vector<24x8xf32>, vector<8x48xf32>, vector<24x48xf32> -> vector<24x48xf32>
    %302 = vector.extract_strided_slice %301 {offsets = [0, 0], sizes = [4, 48], strides = [1, 1]} : vector<24x48xf32> to vector<4x48xf32>
    %303 = vector.extract_strided_slice %301 {offsets = [8, 0], sizes = [4, 48], strides = [1, 1]} : vector<24x48xf32> to vector<4x48xf32>
    %304 = vector.extract_strided_slice %301 {offsets = [16, 0], sizes = [4, 48], strides = [1, 1]} : vector<24x48xf32> to vector<4x48xf32>
    %305 = vector.extract_strided_slice %299 {offsets = [0, 0], sizes = [1, 48], strides = [1, 1]} : vector<4x48xf32> to vector<1x48xf32>
    %306 = vector.broadcast %305 : vector<1x48xf32> to vector<4x48xf32>
    %307 = arith.mulf %302, %306 : vector<4x48xf32>
    %308 = vector.extract_strided_slice %299 {offsets = [1, 0], sizes = [1, 48], strides = [1, 1]} : vector<4x48xf32> to vector<1x48xf32>
    %309 = vector.broadcast %308 : vector<1x48xf32> to vector<4x48xf32>
    %310 = arith.mulf %303, %309 : vector<4x48xf32>
    %311 = arith.addf %307, %310 : vector<4x48xf32>
    %312 = vector.extract_strided_slice %299 {offsets = [2, 0], sizes = [1, 48], strides = [1, 1]} : vector<4x48xf32> to vector<1x48xf32>
    %313 = vector.broadcast %312 : vector<1x48xf32> to vector<4x48xf32>
    %314 = arith.mulf %304, %313 : vector<4x48xf32>
    %315 = arith.addf %311, %314 : vector<4x48xf32>
    %316 = vector.extract_strided_slice %299 {offsets = [3, 0], sizes = [1, 48], strides = [1, 1]} : vector<4x48xf32> to vector<1x48xf32>
    %317 = vector.broadcast %316 : vector<1x48xf32> to vector<4x48xf32>
    %318 = arith.addf %315, %317 : vector<4x48xf32>
    %c624 = arith.constant 624 : index
    %c0_110 = arith.constant 0 : index
    %319 = vector.load %arg3[%c624, %c0_110] : memref<1288x256xf32, #tpu.memory_space<vmem>>, vector<48x96xf32>
    %cst_111 = arith.constant dense<0.000000e+00> : vector<4x96xf32>
    %320 = tpu.matmul %318, %319, %cst_111 {dimension_numbers = #tpu.dot_dimension_numbers<[1], [0], [0], [1], [0, 0, 1, 1], [], []>} : vector<4x48xf32>, vector<48x96xf32>, vector<4x96xf32> -> vector<4x96xf32>
    %c672 = arith.constant 672 : index
    %c0_112 = arith.constant 0 : index
    %321 = vector.load %arg3[%c672, %c0_112] : memref<1288x256xf32, #tpu.memory_space<vmem>>, vector<1x96xf32>
    %322 = vector.broadcast %321 : vector<1x96xf32> to vector<4x96xf32>
    %323 = arith.addf %320, %322 : vector<4x96xf32>
    %cst_113 = arith.constant 0.000000e+00 : f32
    %324 = vector.broadcast %cst_113 : f32 to vector<4x96xf32>
    %325 = arith.maximumf %323, %324 : vector<4x96xf32>
    %c680 = arith.constant 680 : index
    %c0_114 = arith.constant 0 : index
    %326 = vector.load %arg3[%c680, %c0_114] : memref<1288x256xf32, #tpu.memory_space<vmem>>, vector<48x48xf32>
    %cst_115 = arith.constant dense<0.000000e+00> : vector<8x48xf32>
    %327 = tpu.matmul %298, %326, %cst_115 {dimension_numbers = #tpu.dot_dimension_numbers<[1], [0], [0], [1], [0, 0, 1, 1], [], []>} : vector<8x48xf32>, vector<48x48xf32>, vector<8x48xf32> -> vector<8x48xf32>
    %c728 = arith.constant 728 : index
    %c0_116 = arith.constant 0 : index
    %328 = vector.load %arg3[%c728, %c0_116] : memref<1288x256xf32, #tpu.memory_space<vmem>>, vector<1x48xf32>
    %329 = vector.broadcast %328 : vector<1x48xf32> to vector<8x48xf32>
    %330 = arith.addf %327, %329 : vector<8x48xf32>
    %cst_117 = arith.constant 0.000000e+00 : f32
    %331 = vector.broadcast %cst_117 : f32 to vector<8x48xf32>
    %332 = arith.maximumf %330, %331 : vector<8x48xf32>
    %c736 = arith.constant 736 : index
    %c0_118 = arith.constant 0 : index
    %333 = vector.load %arg3[%c736, %c0_118] : memref<1288x256xf32, #tpu.memory_space<vmem>>, vector<4x48xf32>
    %c408_119 = arith.constant 408 : index
    %c0_120 = arith.constant 0 : index
    %334 = vector.load %arg2[%c408_119, %c0_120] : memref<448x128xf32, #tpu.memory_space<vmem>>, vector<24x8xf32>
    %cst_121 = arith.constant dense<0.000000e+00> : vector<24x48xf32>
    %335 = tpu.matmul %334, %332, %cst_121 {dimension_numbers = #tpu.dot_dimension_numbers<[1], [0], [0], [1], [0, 0, 1, 1], [], []>} : vector<24x8xf32>, vector<8x48xf32>, vector<24x48xf32> -> vector<24x48xf32>
    %336 = vector.extract_strided_slice %335 {offsets = [0, 0], sizes = [4, 48], strides = [1, 1]} : vector<24x48xf32> to vector<4x48xf32>
    %337 = vector.extract_strided_slice %335 {offsets = [8, 0], sizes = [4, 48], strides = [1, 1]} : vector<24x48xf32> to vector<4x48xf32>
    %338 = vector.extract_strided_slice %335 {offsets = [16, 0], sizes = [4, 48], strides = [1, 1]} : vector<24x48xf32> to vector<4x48xf32>
    %339 = vector.extract_strided_slice %333 {offsets = [0, 0], sizes = [1, 48], strides = [1, 1]} : vector<4x48xf32> to vector<1x48xf32>
    %340 = vector.broadcast %339 : vector<1x48xf32> to vector<4x48xf32>
    %341 = arith.mulf %336, %340 : vector<4x48xf32>
    %342 = vector.extract_strided_slice %333 {offsets = [1, 0], sizes = [1, 48], strides = [1, 1]} : vector<4x48xf32> to vector<1x48xf32>
    %343 = vector.broadcast %342 : vector<1x48xf32> to vector<4x48xf32>
    %344 = arith.mulf %337, %343 : vector<4x48xf32>
    %345 = arith.addf %341, %344 : vector<4x48xf32>
    %346 = vector.extract_strided_slice %333 {offsets = [2, 0], sizes = [1, 48], strides = [1, 1]} : vector<4x48xf32> to vector<1x48xf32>
    %347 = vector.broadcast %346 : vector<1x48xf32> to vector<4x48xf32>
    %348 = arith.mulf %338, %347 : vector<4x48xf32>
    %349 = arith.addf %345, %348 : vector<4x48xf32>
    %350 = vector.extract_strided_slice %333 {offsets = [3, 0], sizes = [1, 48], strides = [1, 1]} : vector<4x48xf32> to vector<1x48xf32>
    %351 = vector.broadcast %350 : vector<1x48xf32> to vector<4x48xf32>
    %352 = arith.addf %349, %351 : vector<4x48xf32>
    %c744 = arith.constant 744 : index
    %c0_122 = arith.constant 0 : index
    %353 = vector.load %arg3[%c744, %c0_122] : memref<1288x256xf32, #tpu.memory_space<vmem>>, vector<48x96xf32>
    %cst_123 = arith.constant dense<0.000000e+00> : vector<4x96xf32>
    %354 = tpu.matmul %352, %353, %cst_123 {dimension_numbers = #tpu.dot_dimension_numbers<[1], [0], [0], [1], [0, 0, 1, 1], [], []>} : vector<4x48xf32>, vector<48x96xf32>, vector<4x96xf32> -> vector<4x96xf32>
    %c792 = arith.constant 792 : index
    %c0_124 = arith.constant 0 : index
    %355 = vector.load %arg3[%c792, %c0_124] : memref<1288x256xf32, #tpu.memory_space<vmem>>, vector<1x96xf32>
    %356 = vector.broadcast %355 : vector<1x96xf32> to vector<4x96xf32>
    %357 = arith.addf %354, %356 : vector<4x96xf32>
    %cst_125 = arith.constant 0.000000e+00 : f32
    %358 = vector.broadcast %cst_125 : f32 to vector<4x96xf32>
    %359 = arith.maximumf %357, %358 : vector<4x96xf32>
    %360 = arith.addf %325, %359 : vector<4x96xf32>
    %c800 = arith.constant 800 : index
    %c0_126 = arith.constant 0 : index
    %361 = vector.load %arg3[%c800, %c0_126] : memref<1288x256xf32, #tpu.memory_space<vmem>>, vector<96x48xf32>
    %cst_127 = arith.constant dense<0.000000e+00> : vector<4x48xf32>
    %362 = tpu.matmul %360, %361, %cst_127 {dimension_numbers = #tpu.dot_dimension_numbers<[1], [0], [0], [1], [0, 0, 1, 1], [], []>} : vector<4x96xf32>, vector<96x48xf32>, vector<4x48xf32> -> vector<4x48xf32>
    %c896 = arith.constant 896 : index
    %c0_128 = arith.constant 0 : index
    %363 = vector.load %arg3[%c896, %c0_128] : memref<1288x256xf32, #tpu.memory_space<vmem>>, vector<1x48xf32>
    %364 = vector.broadcast %363 : vector<1x48xf32> to vector<4x48xf32>
    %365 = arith.addf %362, %364 : vector<4x48xf32>
    %cst_129 = arith.constant 0.000000e+00 : f32
    %366 = vector.broadcast %cst_129 : f32 to vector<4x48xf32>
    %367 = arith.maximumf %365, %366 : vector<4x48xf32>
    %c904 = arith.constant 904 : index
    %c0_130 = arith.constant 0 : index
    %368 = vector.load %arg3[%c904, %c0_130] : memref<1288x256xf32, #tpu.memory_space<vmem>>, vector<4x48xf32>
    %c432 = arith.constant 432 : index
    %c0_131 = arith.constant 0 : index
    %369 = vector.load %arg2[%c432, %c0_131] : memref<448x128xf32, #tpu.memory_space<vmem>>, vector<16x4xf32>
    %cst_132 = arith.constant dense<0.000000e+00> : vector<16x48xf32>
    %370 = tpu.matmul %369, %367, %cst_132 {dimension_numbers = #tpu.dot_dimension_numbers<[1], [0], [0], [1], [0, 0, 1, 1], [], []>} : vector<16x4xf32>, vector<4x48xf32>, vector<16x48xf32> -> vector<16x48xf32>
    %371 = vector.extract_strided_slice %370 {offsets = [0, 0], sizes = [4, 48], strides = [1, 1]} : vector<16x48xf32> to vector<4x48xf32>
    %372 = vector.extract_strided_slice %370 {offsets = [8, 0], sizes = [4, 48], strides = [1, 1]} : vector<16x48xf32> to vector<4x48xf32>
    %373 = vector.extract_strided_slice %368 {offsets = [0, 0], sizes = [1, 48], strides = [1, 1]} : vector<4x48xf32> to vector<1x48xf32>
    %374 = vector.broadcast %373 : vector<1x48xf32> to vector<4x48xf32>
    %375 = arith.mulf %371, %374 : vector<4x48xf32>
    %376 = vector.extract_strided_slice %368 {offsets = [1, 0], sizes = [1, 48], strides = [1, 1]} : vector<4x48xf32> to vector<1x48xf32>
    %377 = vector.broadcast %376 : vector<1x48xf32> to vector<4x48xf32>
    %378 = arith.mulf %367, %377 : vector<4x48xf32>
    %379 = arith.addf %375, %378 : vector<4x48xf32>
    %380 = vector.extract_strided_slice %368 {offsets = [2, 0], sizes = [1, 48], strides = [1, 1]} : vector<4x48xf32> to vector<1x48xf32>
    %381 = vector.broadcast %380 : vector<1x48xf32> to vector<4x48xf32>
    %382 = arith.mulf %372, %381 : vector<4x48xf32>
    %383 = arith.addf %379, %382 : vector<4x48xf32>
    %384 = vector.extract_strided_slice %368 {offsets = [3, 0], sizes = [1, 48], strides = [1, 1]} : vector<4x48xf32> to vector<1x48xf32>
    %385 = vector.broadcast %384 : vector<1x48xf32> to vector<4x48xf32>
    %386 = arith.addf %383, %385 : vector<4x48xf32>
    %c912 = arith.constant 912 : index
    %c0_133 = arith.constant 0 : index
    %387 = vector.load %arg3[%c912, %c0_133] : memref<1288x256xf32, #tpu.memory_space<vmem>>, vector<48x96xf32>
    %cst_134 = arith.constant dense<0.000000e+00> : vector<4x96xf32>
    %388 = tpu.matmul %386, %387, %cst_134 {dimension_numbers = #tpu.dot_dimension_numbers<[1], [0], [0], [1], [0, 0, 1, 1], [], []>} : vector<4x48xf32>, vector<48x96xf32>, vector<4x96xf32> -> vector<4x96xf32>
    %c960 = arith.constant 960 : index
    %c0_135 = arith.constant 0 : index
    %389 = vector.load %arg3[%c960, %c0_135] : memref<1288x256xf32, #tpu.memory_space<vmem>>, vector<1x96xf32>
    %390 = vector.broadcast %389 : vector<1x96xf32> to vector<4x96xf32>
    %391 = arith.addf %388, %390 : vector<4x96xf32>
    %cst_136 = arith.constant 0.000000e+00 : f32
    %392 = vector.broadcast %cst_136 : f32 to vector<4x96xf32>
    %393 = arith.maximumf %391, %392 : vector<4x96xf32>
    %c968 = arith.constant 968 : index
    %c0_137 = arith.constant 0 : index
    %394 = vector.load %arg3[%c968, %c0_137] : memref<1288x256xf32, #tpu.memory_space<vmem>>, vector<1x96xf32>
    %395 = vector.broadcast %394 : vector<1x96xf32> to vector<4x96xf32>
    %396 = arith.mulf %360, %395 : vector<4x96xf32>
    %397 = arith.addf %396, %393 : vector<4x96xf32>
    %c976 = arith.constant 976 : index
    %c0_138 = arith.constant 0 : index
    %398 = vector.load %arg3[%c976, %c0_138] : memref<1288x256xf32, #tpu.memory_space<vmem>>, vector<96x196xf32>
    %cst_139 = arith.constant dense<0.000000e+00> : vector<4x196xf32>
    %399 = tpu.matmul %397, %398, %cst_139 {dimension_numbers = #tpu.dot_dimension_numbers<[1], [0], [0], [1], [0, 0, 1, 1], [], []>} : vector<4x96xf32>, vector<96x196xf32>, vector<4x196xf32> -> vector<4x196xf32>
    %c1072 = arith.constant 1072 : index
    %c0_140 = arith.constant 0 : index
    %400 = vector.load %arg3[%c1072, %c0_140] : memref<1288x256xf32, #tpu.memory_space<vmem>>, vector<1x196xf32>
    %401 = vector.broadcast %400 : vector<1x196xf32> to vector<4x196xf32>
    %402 = arith.addf %399, %401 : vector<4x196xf32>
    %cst_141 = arith.constant 0.000000e+00 : f32
    %403 = vector.broadcast %cst_141 : f32 to vector<4x196xf32>
    %404 = arith.maximumf %402, %403 : vector<4x196xf32>
    %cst_142 = arith.constant 2.500000e-01 : f32
    %405 = vector.broadcast %cst_142 : f32 to vector<1x4xf32>
    %cst_143 = arith.constant dense<0.000000e+00> : vector<1x196xf32>
    %406 = tpu.matmul %405, %404, %cst_143 {dimension_numbers = #tpu.dot_dimension_numbers<[1], [0], [0], [1], [0, 0, 1, 1], [], []>} : vector<1x4xf32>, vector<4x196xf32>, vector<1x196xf32> -> vector<1x196xf32>
    %c1080 = arith.constant 1080 : index
    %c0_144 = arith.constant 0 : index
    %407 = vector.load %arg3[%c1080, %c0_144] : memref<1288x256xf32, #tpu.memory_space<vmem>>, vector<196x128xf32>
    %cst_145 = arith.constant dense<0.000000e+00> : vector<1x128xf32>
    %408 = tpu.matmul %406, %407, %cst_145 {dimension_numbers = #tpu.dot_dimension_numbers<[1], [0], [0], [1], [0, 0, 1, 1], [], []>} : vector<1x196xf32>, vector<196x128xf32>, vector<1x128xf32> -> vector<1x128xf32>
    %c1280 = arith.constant 1280 : index
    %c0_146 = arith.constant 0 : index
    %409 = vector.load %arg3[%c1280, %c0_146] : memref<1288x256xf32, #tpu.memory_space<vmem>>, vector<1x128xf32>
    %410 = arith.addf %408, %409 : vector<1x128xf32>
    %c0_147 = arith.constant 0 : index
    %c0_148 = arith.constant 0 : index
    %c0_149 = arith.constant 0 : index
    %411 = vector.load %arg4[%c0_147, %c0_148, %c0_149] : memref<1x1x128xf32, #tpu.memory_space<vmem>>, vector<1x1x128xf32>
    %412 = vector.shape_cast %411 : vector<1x1x128xf32> to vector<1x128xf32>
    %413 = vector.shape_cast %410 : vector<1x128xf32> to vector<1x1x128xf32>
    tpu.vector_store %arg4[%c0_147, %c0_148, %c0_149], %413 {strides = array<i32>} : memref<1x1x128xf32, #tpu.memory_space<vmem>>, vector<1x1x128xf32>,
    return
  }
  func.func @transform_0(%arg0: i32) -> (i32, i32, i32) {
    %c0_i32 = arith.constant 0 : i32
    %c0_i32_0 = arith.constant 0 : i32
    %c0_i32_1 = arith.constant 0 : i32
    return %arg0, %c0_i32, %c0_i32_0 : i32, i32, i32
  }
  func.func @transform_1(%arg0: i32) -> (i32, i32) {
    %c0_i32 = arith.constant 0 : i32
    %c0_i32_0 = arith.constant 0 : i32
    %c0_i32_1 = arith.constant 0 : i32
    return %c0_i32, %c0_i32_0 : i32, i32
  }
  func.func @transform_2(%arg0: i32) -> (i32, i32) {
    %c0_i32 = arith.constant 0 : i32
    %c0_i32_0 = arith.constant 0 : i32
    %c0_i32_1 = arith.constant 0 : i32
    return %c0_i32, %c0_i32_0 : i32, i32
  }
  func.func @transform_3(%arg0: i32) -> (i32, i32, i32) {
    %c0_i32 = arith.constant 0 : i32
    %c0_i32_0 = arith.constant 0 : i32
    %c0_i32_1 = arith.constant 0 : i32
    return %arg0, %c0_i32, %c0_i32_0 : i32, i32, i32
  }
}

</mosaic_0001>

<llo_original>
// kernel: _lambda_.1
$region0: #{_lambda_.1}
  #allocation0 [shape = 'u32[]', space=smem, size = 0x4, offset = 0x4, fixed_abs, tag = 'smem constant byte address 0x4 - core index']
  #allocation1 [shape = 'u32[144,128]{1,0:T(1,128)}', space=vmem, size = 0x12000, scoped, tag = 'internal scratch']
  %s0 = inlined_call_operand.vmem [shape: f32[2,128,2], index: 0, kind: input, shape index: {}]
  %s1 = inlined_call_operand.hbm [shape: f32[448,128], index: 1, kind: input, shape index: {}]
  %s2 = inlined_call_operand.hbm [shape: f32[1288,256], index: 2, kind: input, shape index: {}]
  %s3 = inlined_call_operand.hbm [shape: f32[2,1,128], index: 3, kind: output, shape index: {}]
  %s4 = sld [smem:[#allocation0]]
  $region53: #{_lambda_.1} parent=0
    _
  %s6 = ssub.s32 1, %s4
  %s7 = scalar_select 0, %s6, %s4
  $region1: #{_lambda_.1} parent=0
    #allocation2 [shape = 'u8[229376]{0}', space=vmem, size = 0x38000, scoped, tag = 'input window, operand 1, single buffered']
    #allocation3 [shape = 's32[2]{0}', space=sflag, size = 0x8, scoped, tag = 'scoped memory for _lambda_.1']
    #allocation4 [shape = 's32[2]{0}', space=sflag, size = 0x8, scoped, tag = 'scoped memory for _lambda_.1']
    #allocation5 [shape = 'u8[1318912]{0}', space=vmem, size = 0x142000, scoped, tag = 'input window, operand 2, single buffered']
    #allocation6 [shape = 's32[1]{0}', space=sflag, size = 0x4, scoped, tag = 'scoped memory for _lambda_.1']
    #allocation7 [shape = 'u8[1024]{0}', space=vmem, size = 0x400, scoped, tag = 'output window, operand 0']
    %8 = vsyncpa [#allocation3], 0
    %9 = vsyncpa [#allocation6], 0
    %10 = vsyncpa [#allocation4], 0
    %s11 = scalar_lea.sflag [#allocation4], 1
    %12 = vsyncpa %s11, 0
    loop: start=0, step=1, limit=4
    $region2: #{_lambda_.1} parent=1 // loop_pre_header
      _
    $region3: #{_lambda_.1} parent=1 // loop_header
      %s14 = sphi 0, %s18
      %p15 = scmp.ge.s32.totalorder %s14, 4
      %s24 = sphi 0, %s26
      %s27 = sphi 0, %s24
      %s28 = sphi 0, %s27
      %s44 = sphi 0, %s28
      %s48 = sphi 0, %s48
      %s50 = sphi 0, %s48
      %s51 = sphi 0, %s50
      %s65 = sphi 0, %s51
      %s69 = sphi 0, %s69
      %s71 = sphi 0, %s69
      %s72 = sphi 0, %s71
      %s86 = sphi 0, %s72
      %s92 = sphi 0, %s94
      %s95 = sphi 0, %s92
      %s96 = sphi 0, %s95
      %s112 = sphi 0, %s96
    $region4: #{_lambda_.1} parent=1 // loop_header_branch
      %17 = sbr.rel (%p15) target = $region8
    $region5: #{_lambda_.1} parent=1 // loop_body
      %s19 = ssub.s32 %s14, 1
      %s20 = ssub.s32 %s14, 2
      %s21 = sadd.s32 %s14, 1
      %s22 = ssub.s32 %s14, %s21
      %p23 = scmp.eq.s32.totalorder %s22, 0
      %s25 = sadd.s32 %s24, 1
      %s26 = scalar_select %p23, %s24, %s25
      %p29 = pneg %p23
      %p30 = scmp.eq.s32.totalorder %s14, 1
      %p31 = por %p29, %p30
      %p32 = scmp.ne.s32.totalorder %s24, %s27
      %p33 = scmp.eq.s32.totalorder %s14, 0
      %p34 = por %p32, %p33
      %p35 = scmp.ne.s32.totalorder %s24, %s27
      %p36 = scmp.eq.s32.totalorder %s19, 1
      %p37 = por %p35, %p36
      %p38 = scmp.ne.s32.totalorder %s27, %s28
      %p39 = scmp.eq.s32.totalorder %s19, 0
      %p40 = por %p38, %p39
      %p41 = scmp.ne.s32.totalorder %s27, %s28
      %p42 = scmp.eq.s32.totalorder %s20, 1
      %p43 = por %p41, %p42
      %p45 = scmp.ne.s32.totalorder %s28, %s44
      %p46 = scmp.eq.s32.totalorder %s20, 0
      %p47 = por %p45, %p46
      %s49 = sadd.s32 %s48, 1
      %p52 = scmp.eq.s32.totalorder %s14, 1
      %p53 = scmp.ne.s32.totalorder %s48, %s50
      %p54 = scmp.eq.s32.totalorder %s14, 0
      %p55 = por %p53, %p54
      %p56 = scmp.ne.s32.totalorder %s48, %s50
      %p57 = scmp.eq.s32.totalorder %s19, 1
      %p58 = por %p56, %p57
      %p59 = scmp.ne.s32.totalorder %s50, %s51
      %p60 = scmp.eq.s32.totalorder %s19, 0
      %p61 = por %p59, %p60
      %p62 = scmp.ne.s32.totalorder %s50, %s51
      %p63 = scmp.eq.s32.totalorder %s20, 1
      %p64 = por %p62, %p63
      %p66 = scmp.ne.s32.totalorder %s51, %s65
      %p67 = scmp.eq.s32.totalorder %s20, 0
      %p68 = por %p66, %p67
      %s70 = sadd.s32 %s69, 1
      %p73 = scmp.eq.s32.totalorder %s14, 1
      %p74 = scmp.ne.s32.totalorder %s69, %s71
      %p75 = scmp.eq.s32.totalorder %s14, 0
      %p76 = por %p74, %p75
      %p77 = scmp.ne.s32.totalorder %s69, %s71
      %p78 = scmp.eq.s32.totalorder %s19, 1
      %p79 = por %p77, %p78
      %p80 = scmp.ne.s32.totalorder %s71, %s72
      %p81 = scmp.eq.s32.totalorder %s19, 0
      %p82 = por %p80, %p81
      %p83 = scmp.ne.s32.totalorder %s71, %s72
      %p84 = scmp.eq.s32.totalorder %s20, 1
      %p85 = por %p83, %p84
      %p87 = scmp.ne.s32.totalorder %s72, %s86
      %p88 = scmp.eq.s32.totalorder %s20, 0
      %p89 = por %p87, %p88
      %s90 = ssub.s32 %s14, %s21
      %p91 = scmp.eq.s32.totalorder %s90, 0
      %s93 = sadd.s32 %s92, 1
      %s94 = scalar_select %p91, %s92, %s93
      %p97 = pneg %p91
      %p98 = scmp.eq.s32.totalorder %s14, 1
      %p99 = por %p97, %p98
      %p100 = scmp.ne.s32.totalorder %s92, %s95
      %p101 = scmp.eq.s32.totalorder %s14, 0
      %p102 = por %p100, %p101
      %p103 = scmp.ne.s32.totalorder %s92, %s95
      %p104 = scmp.eq.s32.totalorder %s19, 1
      %p105 = por %p103, %p104
      %p106 = scmp.ne.s32.totalorder %s95, %s96
      %p107 = scmp.eq.s32.totalorder %s19, 0
      %p108 = por %p106, %p107
      %p109 = scmp.ne.s32.totalorder %s95, %s96
      %p110 = scmp.eq.s32.totalorder %s20, 1
      %p111 = por %p109, %p110
      %p113 = scmp.ne.s32.totalorder %s96, %s112
      %p114 = scmp.eq.s32.totalorder %s20, 0
      %p115 = por %p113, %p114
      %p116 = scmp.le.s32.totalorder 1, %s14
      %p117 = scmp.lt.s32.totalorder %s14, 3
      %p118 = pnand %p116, %p117
      %p119 = pneg %p118
      // Predicated region
      $region9: #{_lambda_.1} parent=5 // pred_check
        _
      $region10: #{_lambda_.1} parent=5 // pred_check_branch
        %121 = sbr.rel (%p118) target = $region12
      $region11: #{_lambda_.1} parent=5 // pred_region
        %s122 = ssub.s32 %s14, 1
        // Predicated region
        $region13: #{_lambda_.1} parent=11 // pred_check
          %p123 = pneg %p61
        $region14: #{_lambda_.1} parent=11 // pred_check_branch
          %125 = sbr.rel (%p123) target = $region16
        $region15: #{_lambda_.1} parent=11 // pred_region
          %s127 = ssub.s32 7168, 7168
          %128 = vsyncadd [#allocation3], %s127
          %s129 = sshll.u32 [#allocation2], 4
          %s130 = int_to_ptr.vmem [resolvable:$true] %s129
          %135 = dma.hbm_to_vmem [thread:$0]  %s1, 7168, %s130, [#allocation3], 128, 128, 8
        $region16: #{_lambda_.1} parent=11 // pred_fallthru
          _
        // Predicated region
        $region17: #{_lambda_.1} parent=11 // pred_check
          %p136 = pneg %p82
        $region18: #{_lambda_.1} parent=11 // pred_check_branch
          %138 = sbr.rel (%p136) target = $region20
        $region19: #{_lambda_.1} parent=11 // pred_region
          %s140 = ssub.s32 41216, 41216
          %141 = vsyncadd [#allocation6], %s140
          %s142 = sshll.u32 [#allocation5], 4
          %s143 = int_to_ptr.vmem [resolvable:$true] %s142
          %148 = dma.hbm_to_vmem [thread:$0]  %s2, 41216, %s143, [#allocation6], 256, 256, 16
        $region20: #{_lambda_.1} parent=11 // pred_fallthru
          _
      $region12: #{_lambda_.1} parent=5 // pred_fallthru
        _
      %p149 = scmp.lt.s32.totalorder %s14, 2
      // Predicated region
      $region21: #{_lambda_.1} parent=5 // pred_check
        %p150 = pneg %p149
      $region22: #{_lambda_.1} parent=5 // pred_check_branch
        %152 = sbr.rel (%p150) target = $region24
      $region23: #{_lambda_.1} parent=5 // pred_region
        // Predicated region
        $region25: #{_lambda_.1} parent=23 // pred_check
          %p153 = pneg %p34
        $region26: #{_lambda_.1} parent=23 // pred_check_branch
          %155 = sbr.rel (%p153) target = $region28
        $region27: #{_lambda_.1} parent=23 // pred_region
          %p156 = scmp.lt.s32.totalorder %s14, 1
          %s157 = scalar_select %p156, %s14, 1
          %s158 = smul.addr %s157, 16
          %s159 = smul.addr %s158, 8
          %s160 = scalar_lea.vmem %s0, %s159
        $region28: #{_lambda_.1} parent=23 // pred_fallthru
          _
      $region24: #{_lambda_.1} parent=5 // pred_fallthru
        _
      %p161 = scmp.le.s32.totalorder 1, %s14
      %p162 = scmp.lt.s32.totalorder %s14, 3
      %p163 = pnand %p161, %p162
      %p164 = pneg %p163
      // Predicated region
      $region29: #{_lambda_.1} parent=5 // pred_check
        _
      $region30: #{_lambda_.1} parent=5 // pred_check_branch
        %166 = sbr.rel (%p163) target = $region32
      $region31: #{_lambda_.1} parent=5 // pred_region
        %s167 = ssub.s32 %s14, 1
        // Predicated region
        $region33: #{_lambda_.1} parent=31 // pred_check
          %p168 = pneg %p61
        $region34: #{_lambda_.1} parent=31 // pred_check_branch
          %170 = sbr.rel (%p168) target = $region36
        $region35: #{_lambda_.1} parent=31 // pred_region
          %171 = dma.done [#allocation3], 7168
        $region36: #{_lambda_.1} parent=31 // pred_fallthru
          _
        // Predicated region
        $region37: #{_lambda_.1} parent=31 // pred_check
          %p172 = pneg %p82
        $region38: #{_lambda_.1} parent=31 // pred_check_branch
          %174 = sbr.rel (%p172) target = $region40
        $region39: #{_lambda_.1} parent=31 // pred_region
          %175 = dma.done [#allocation6], 41216
        $region40: #{_lambda_.1} parent=31 // pred_fallthru
          _
        %p176 = scmp.lt.s32.totalorder %s19, 1
        %s177 = scalar_select %p176, %s19, 1
        %s178 = smul.addr %s177, 16
        %s179 = smul.addr %s178, 8
        %s180 = scalar_lea.vmem %s0, %s179
        %p181 = pneg %p40
        %p182 = pneg %p37
        %p183 = pneg %p61
        %p184 = pneg %p58
        %p185 = pneg %p82
        %p186 = pneg %p79
        %p187 = pneg %p108
        %p188 = pneg %p105
        %s189 = sand.u32 %s95, 1
        %s190 = scalar_lea.sflag [#allocation4], %s189
        %s191 = sand.u32 %s95, 1
        %s192 = scalar_lea.vmem [#allocation7], %s191
        %p193 = scmp.lt.s32.totalorder %s19, 1
        %s194 = scalar_select %p193, %s19, 1
        %s195 = smul.addr %s194, 16
        %s196 = smul.addr %s195, 8
        %s197 = scalar_lea.vmem %s0, %s196
        %v198 = vld [vmem:[%s197] sm:$0xff]
        %v199 = vld [vmem:[%s197 + $0x8] sm:$0xff]
        %v200 = vld [vmem:[%s197 + $0x10] sm:$0xff]
        %v201 = vld [vmem:[%s197 + $0x18] sm:$0xff]
        %v202 = vld [vmem:[%s197 + $0x20] sm:$0xff]
        %v203 = vld [vmem:[%s197 + $0x28] sm:$0xff]
        %v204 = vld [vmem:[%s197 + $0x30] sm:$0xff]
        %v205 = vld [vmem:[%s197 + $0x38] sm:$0xff]
        %v206 = vld [vmem:[%s197 + $0x40] sm:$0xff]
        %v207 = vld [vmem:[%s197 + $0x48] sm:$0xff]
        %v208 = vld [vmem:[%s197 + $0x50] sm:$0xff]
        %v209 = vld [vmem:[%s197 + $0x58] sm:$0xff]
        %v210 = vld [vmem:[%s197 + $0x60] sm:$0xff]
        %v211 = vld [vmem:[%s197 + $0x68] sm:$0xff]
        %v212 = vld [vmem:[%s197 + $0x70] sm:$0xff]
        %v213 = vld [vmem:[%s197 + $0x78] sm:$0xff]
        %v214 = vld [vmem:[#allocation2] sm:$0xff]
        %v215 = vld [vmem:[#allocation2 + $0x8] sm:$0xff]
        %v216 = vld [vmem:[#allocation2 + $0x10] sm:$0xff]
        %v217 = vld [vmem:[#allocation2 + $0x18] sm:$0xff]
        %v218 = vld [vmem:[#allocation2 + $0x20] sm:$0xff]
        %v219 = vld [vmem:[#allocation2 + $0x28] sm:$0xff]
        %v220 = vld [vmem:[#allocation2 + $0x30] sm:$0xff]
        %v221 = vld [vmem:[#allocation2 + $0x38] sm:$0xff]
        %v222 = vld [vmem:[#allocation2 + $0x40] sm:$0xff]
        %v223 = vld [vmem:[#allocation2 + $0x48] sm:$0xff]
        %v224 = vld [vmem:[#allocation2 + $0x50] sm:$0xff]
        %v225 = vld [vmem:[#allocation2 + $0x58] sm:$0xff]
        %v226 = vld [vmem:[#allocation2 + $0x60] sm:$0xff]
        %v227 = vld [vmem:[#allocation2 + $0x68] sm:$0xff]
        %v228 = vld [vmem:[#allocation2 + $0x70] sm:$0xff]
        %v229 = vld [vmem:[#allocation2 + $0x78] sm:$0xff]
        %v230 = vld [vmem:[#allocation2 + $0x80] sm:$0xff]
        %v231 = vld [vmem:[#allocation2 + $0x88] sm:$0xff]
        %v232 = vld [vmem:[#allocation2 + $0x90] sm:$0xff]
        %v233 = vld [vmem:[#allocation2 + $0x98] sm:$0xff]
        %v234 = vld [vmem:[#allocation2 + $0xa0] sm:$0xff]
        %v235 = vld [vmem:[#allocation2 + $0xa8] sm:$0xff]
        %v236 = vld [vmem:[#allocation2 + $0xb0] sm:$0xff]
        %v237 = vld [vmem:[#allocation2 + $0xb8] sm:$0xff]
        %238 = vmatprep.subr.mxu0 0.0
        %239 = vmatpush1.msra.mxu0 %v198
        %240 = vmatprep.subr.mxu0 0.0
        %241 = vmatpush1.msra.mxu0 %v199
        %242 = vmatprep.subr.mxu0 0.0
        %243 = vmatpush1.msra.mxu0 %v200
        %244 = vmatprep.subr.mxu0 0.0
        %245 = vmatpush1.msra.mxu0 %v201
        %246 = vmatprep.subr.mxu0 0.0
        %247 = vmatpush1.msra.mxu0 %v202
        %248 = vmatprep.subr.mxu0 0.0
        %249 = vmatpush1.msra.mxu0 %v203
        %250 = vmatprep.subr.mxu0 0.0
        %251 = vmatpush1.msra.mxu0 %v204
        %252 = vmatprep.subr.mxu0 0.0
        %253 = vmatpush1.msra.mxu0 %v205
        %254 = vmatprep.subr.mxu0 0.0
        %255 = vmatpush1.msra.mxu0 %v206
        %256 = vmatprep.subr.mxu0 0.0
        %257 = vmatpush1.msra.mxu0 %v207
        %258 = vmatprep.subr.mxu0 0.0
        %259 = vmatpush1.msra.mxu0 %v208
        %260 = vmatprep.subr.mxu0 0.0
        %261 = vmatpush1.msra.mxu0 %v209
        %262 = vmatprep.subr.mxu0 0.0
        %263 = vmatpush1.msra.mxu0 %v210
        %264 = vmatprep.subr.mxu0 0.0
        %265 = vmatpush1.msra.mxu0 %v211
        %266 = vmatprep.subr.mxu0 0.0
        %267 = vmatpush1.msra.mxu0 %v212
        %268 = vmatprep.subr.mxu0 0.0
        %269 = vmatpush1.msra.mxu0 %v213
        %270 = vmatprep.subr.mxu0 0.0
        %271 = vmatpush1.msra.mxu0 0.0
        %272 = vmatprep.subr.mxu0 0.0
        %273 = vmatpush1.msra.mxu0 0.0
        %274 = vmatprep.subr.mxu0 0.0
        %275 = vmatpush1.msra.mxu0 0.0
        %276 = vmatprep.subr.mxu0 0.0
        %277 = vmatpush1.msra.mxu0 0.0
        %278 = vmatprep.subr.mxu0 0.0
        %279 = vmatpush1.msra.mxu0 0.0
        %280 = vmatprep.subr.mxu0 0.0
        %281 = vmatpush1.msra.mxu0 0.0
        %282 = vmatprep.subr.mxu0 0.0
        %283 = vmatpush1.msra.mxu0 0.0
        %284 = vmatprep.subr.mxu0 0.0
        %285 = vmatpush1.msra.mxu0 0.0
        %286 = vmatprep.subr.mxu0 0.0
        %287 = vmatpush1.msra.mxu0 0.0
        %288 = vmatprep.subr.mxu0 0.0
        %289 = vmatpush1.msra.mxu0 0.0
        %290 = vmatprep.subr.mxu0 0.0
        %291 = vmatpush1.msra.mxu0 0.0
        %292 = vmatprep.subr.mxu0 0.0
        %293 = vmatpush1.msra.mxu0 0.0
        %294 = vmatprep.subr.mxu0 0.0
        %295 = vmatpush1.msra.mxu0 0.0
        %296 = vmatprep.subr.mxu0 0.0
        %297 = vmatpush1.msra.mxu0 0.0
        %298 = vmatprep.subr.mxu0 0.0
        %299 = vmatpush1.msra.mxu0 0.0
        %300 = vmatprep.subr.mxu0 0.0
        %301 = vmatpush1.msra.mxu0 0.0
        %302 = vmatprep.mubr.f32.mxu0 0.0
        %303 = vmatmul.mubr.f32.gmra.mrb[0].mxu0 %v214
        %v304 = vpop.f32.mrb[0].mxu0
        %v305 = vadd.f32 0.0, %v304
        %v306 = vpop.f32.mrb[0].mxu0
        %307 = vmatprep.mubr.f32.mxu0 0.0
        %308 = vmatmul.mubr.f32.gmra.mrb[0].mxu0 %v215
        %v309 = vpop.f32.mrb[0].mxu0
        %v310 = vadd.f32 0.0, %v309
        %v311 = vpop.f32.mrb[0].mxu0
        %312 = vmatprep.mubr.f32.mxu0 0.0
        %313 = vmatmul.mubr.f32.gmra.mrb[0].mxu0 %v216
        %v314 = vpop.f32.mrb[0].mxu0
        %v315 = vadd.f32 0.0, %v314
        %v316 = vpop.f32.mrb[0].mxu0
        %317 = vmatprep.mubr.f32.mxu0 0.0
        %318 = vmatmul.mubr.f32.gmra.mrb[0].mxu0 %v217
        %v319 = vpop.f32.mrb[0].mxu0
        %v320 = vadd.f32 0.0, %v319
        %v321 = vpop.f32.mrb[0].mxu0
        %322 = vmatprep.mubr.f32.mxu0 0.0
        %323 = vmatmul.mubr.f32.gmra.mrb[0].mxu0 %v218
        %v324 = vpop.f32.mrb[0].mxu0
        %v325 = vadd.f32 0.0, %v324
        %v326 = vpop.f32.mrb[0].mxu0
        %327 = vmatprep.mubr.f32.mxu0 0.0
        %328 = vmatmul.mubr.f32.gmra.mrb[0].mxu0 %v219
        %v329 = vpop.f32.mrb[0].mxu0
        %v330 = vadd.f32 0.0, %v329
        %v331 = vpop.f32.mrb[0].mxu0
        %332 = vmatprep.mubr.f32.mxu0 0.0
        %333 = vmatmul.mubr.f32.gmra.mrb[0].mxu0 %v220
        %v334 = vpop.f32.mrb[0].mxu0
        %v335 = vadd.f32 0.0, %v334
        %v336 = vpop.f32.mrb[0].mxu0
        %337 = vmatprep.mubr.f32.mxu0 0.0
        %338 = vmatmul.mubr.f32.gmra.mrb[0].mxu0 %v221
        %v339 = vpop.f32.mrb[0].mxu0
        %v340 = vadd.f32 0.0, %v339
        %v341 = vpop.f32.mrb[0].mxu0
        %342 = vmatprep.mubr.f32.mxu0 0.0
        %343 = vmatmul.mubr.f32.gmra.mrb[0].mxu0 %v222
        %v344 = vpop.f32.mrb[0].mxu0
        %v345 = vadd.f32 0.0, %v344
        %v346 = vpop.f32.mrb[0].mxu0
        %347 = vmatprep.mubr.f32.mxu0 0.0
        %348 = vmatmul.mubr.f32.gmra.mrb[0].mxu0 %v223
        %v349 = vpop.f32.mrb[0].mxu0
        %v350 = vadd.f32 0.0, %v349
        %v351 = vpop.f32.mrb[0].mxu0
        %352 = vmatprep.mubr.f32.mxu0 0.0
        %353 = vmatmul.mubr.f32.gmra.mrb[0].mxu0 %v224
        %v354 = vpop.f32.mrb[0].mxu0
        %v355 = vadd.f32 0.0, %v354
        %v356 = vpop.f32.mrb[0].mxu0
        %357 = vmatprep.mubr.f32.mxu0 0.0
        %358 = vmatmul.mubr.f32.gmra.mrb[0].mxu0 %v225
        %v359 = vpop.f32.mrb[0].mxu0
        %v360 = vadd.f32 0.0, %v359
        %v361 = vpop.f32.mrb[0].mxu0
        %362 = vmatprep.mubr.f32.mxu0 0.0
        %363 = vmatmul.mubr.f32.gmra.mrb[0].mxu0 %v226
        %v364 = vpop.f32.mrb[0].mxu0
        %v365 = vadd.f32 0.0, %v364
        %v366 = vpop.f32.mrb[0].mxu0
        %367 = vmatprep.mubr.f32.mxu0 0.0
        %368 = vmatmul.mubr.f32.gmra.mrb[0].mxu0 %v227
        %v369 = vpop.f32.mrb[0].mxu0
        %v370 = vadd.f32 0.0, %v369
        %v371 = vpop.f32.mrb[0].mxu0
        %372 = vmatprep.mubr.f32.mxu0 0.0
        %373 = vmatmul.mubr.f32.gmra.mrb[0].mxu0 %v228
        %v374 = vpop.f32.mrb[0].mxu0
        %v375 = vadd.f32 0.0, %v374
        %v376 = vpop.f32.mrb[0].mxu0
        %377 = vmatprep.mubr.f32.mxu0 0.0
        %378 = vmatmul.mubr.f32.gmra.mrb[0].mxu0 %v229
        %v379 = vpop.f32.mrb[0].mxu0
        %v380 = vadd.f32 0.0, %v379
        %v381 = vpop.f32.mrb[0].mxu0
        %382 = vmatprep.mubr.f32.mxu0 0.0
        %383 = vmatmul.mubr.f32.gmra.mrb[0].mxu0 %v230
        %v384 = vpop.f32.mrb[0].mxu0
        %v385 = vadd.f32 0.0, %v384
        %v386 = vpop.f32.mrb[0].mxu0
        %387 = vmatprep.mubr.f32.mxu0 0.0
        %388 = vmatmul.mubr.f32.gmra.mrb[0].mxu0 %v231
        %v389 = vpop.f32.mrb[0].mxu0
        %v390 = vadd.f32 0.0, %v389
        %v391 = vpop.f32.mrb[0].mxu0
        %392 = vmatprep.mubr.f32.mxu0 0.0
        %393 = vmatmul.mubr.f32.gmra.mrb[0].mxu0 %v232
        %v394 = vpop.f32.mrb[0].mxu0
        %v395 = vadd.f32 0.0, %v394
        %v396 = vpop.f32.mrb[0].mxu0
        %397 = vmatprep.mubr.f32.mxu0 0.0
        %398 = vmatmul.mubr.f32.gmra.mrb[0].mxu0 %v233
        %v399 = vpop.f32.mrb[0].mxu0
        %v400 = vadd.f32 0.0, %v399
        %v401 = vpop.f32.mrb[0].mxu0
        %402 = vmatprep.mubr.f32.mxu0 0.0
        %403 = vmatmul.mubr.f32.gmra.mrb[0].mxu0 %v234
        %v404 = vpop.f32.mrb[0].mxu0
        %v405 = vadd.f32 0.0, %v404
        %v406 = vpop.f32.mrb[0].mxu0
        %407 = vmatprep.mubr.f32.mxu0 0.0
        %408 = vmatmul.mubr.f32.gmra.mrb[0].mxu0 %v235
        %v409 = vpop.f32.mrb[0].mxu0
        %v410 = vadd.f32 0.0, %v409
        %v411 = vpop.f32.mrb[0].mxu0
        %412 = vmatprep.mubr.f32.mxu0 0.0
        %413 = vmatmul.mubr.f32.gmra.mrb[0].mxu0 %v236
        %v414 = vpop.f32.mrb[0].mxu0
        %v415 = vadd.f32 0.0, %v414
        %v416 = vpop.f32.mrb[0].mxu0
        %417 = vmatprep.mubr.f32.mxu0 0.0
        %418 = vmatmul.mubr.f32.gmra.mrb[0].mxu0 %v237
        %v419 = vpop.f32.mrb[0].mxu0
        %v420 = vadd.f32 0.0, %v419
        %v421 = vpop.f32.mrb[0].mxu0
        %422 = vdwg.mxu0
        %v423 = vld [vmem:[#allocation5 + $0x30] ss:$0 sm:$0xff]
        %v424 = vld [vmem:[#allocation5] sm:$0x3]
        %vm425 = vcmask 15360
        %v427 = vsel %vm425, %v305, 0
        %v430 = vsel %vm425, %v310, 0
        %v433 = vsel %vm425, %v315, 0
        %v436 = vsel %vm425, %v320, 0
        %v439 = vsel %vm425, %v325, 0
        %v442 = vsel %vm425, %v330, 0
        %v445 = vsel %vm425, %v335, 0
        %v448 = vsel %vm425, %v340, 0
        %vm450 = vcmask 1041408
        %v452 = vsel %vm450, %v424, 0
        %454 = vmatprep.subr.mxu0 0.0
        %455 = vmatpush1.msra.mxu0 %v452
        %456 = vmatprep.subr.mxu0 0.0
        %457 = vmatpush1.msra.mxu0 0.0
        %458 = vmatprep.subr.mxu0 0.0
        %459 = vmatpush1.msra.mxu0 0.0
        %460 = vmatprep.subr.mxu0 0.0
        %461 = vmatpush1.msra.mxu0 0.0
        %462 = vmatprep.subr.mxu0 0.0
        %463 = vmatpush1.msra.mxu0 0.0
        %464 = vmatprep.subr.mxu0 0.0
        %465 = vmatpush1.msra.mxu0 0.0
        %466 = vmatprep.subr.mxu0 0.0
        %467 = vmatpush1.msra.mxu0 0.0
        %468 = vmatprep.subr.mxu0 0.0
        %469 = vmatpush1.msra.mxu0 0.0
        %470 = vmatprep.subr.mxu0 0.0
        %471 = vmatpush1.msra.mxu0 0.0
        %472 = vmatprep.subr.mxu0 0.0
        %473 = vmatpush1.msra.mxu0 0.0
        %474 = vmatprep.subr.mxu0 0.0
        %475 = vmatpush1.msra.mxu0 0.0
        %476 = vmatprep.subr.mxu0 0.0
        %477 = vmatpush1.msra.mxu0 0.0
        %478 = vmatprep.subr.mxu0 0.0
        %479 = vmatpush1.msra.mxu0 0.0
        %480 = vmatprep.subr.mxu0 0.0
        %481 = vmatpush1.msra.mxu0 0.0
        %482 = vmatprep.subr.mxu0 0.0
        %483 = vmatpush1.msra.mxu0 0.0
        %484 = vmatprep.subr.mxu0 0.0
        %485 = vmatpush1.msra.mxu0 0.0
        %486 = vmatprep.subr.mxu0 0.0
        %487 = vmatpush1.msra.mxu0 0.0
        %488 = vmatprep.subr.mxu0 0.0
        %489 = vmatpush1.msra.mxu0 0.0
        %490 = vmatprep.subr.mxu0 0.0
        %491 = vmatpush1.msra.mxu0 0.0
        %492 = vmatprep.subr.mxu0 0.0
        %493 = vmatpush1.msra.mxu0 0.0
        %494 = vmatprep.subr.mxu0 0.0
        %495 = vmatpush1.msra.mxu0 0.0
        %496 = vmatprep.subr.mxu0 0.0
        %497 = vmatpush1.msra.mxu0 0.0
        %498 = vmatprep.subr.mxu0 0.0
        %499 = vmatpush1.msra.mxu0 0.0
        %500 = vmatprep.subr.mxu0 0.0
        %501 = vmatpush1.msra.mxu0 0.0
        %502 = vmatprep.subr.mxu0 0.0
        %503 = vmatpush1.msra.mxu0 0.0
        %504 = vmatprep.subr.mxu0 0.0
        %505 = vmatpush1.msra.mxu0 0.0
        %506 = vmatprep.subr.mxu0 0.0
        %507 = vmatpush1.msra.mxu0 0.0
        %508 = vmatprep.subr.mxu0 0.0
        %509 = vmatpush1.msra.mxu0 0.0
        %510 = vmatprep.subr.mxu0 0.0
        %511 = vmatpush1.msra.mxu0 0.0
        %512 = vmatprep.subr.mxu0 0.0
        %513 = vmatpush1.msra.mxu0 0.0
        %514 = vmatprep.subr.mxu0 0.0
        %515 = vmatpush1.msra.mxu0 0.0
        %516 = vmatprep.subr.mxu0 0.0
        %517 = vmatpush1.msra.mxu0 0.0
        %518 = vmatprep.mubr.f32.mxu0 0.0
        %519 = vmatmul.mubr.f32.gmra.mrb[0].mxu0 %v427
        %v520 = vpop.f32.mrb[0].mxu0
        %v521 = vadd.f32 0.0, %v520
        %v522 = vpop.f32.mrb[0].mxu0
        %523 = vmatprep.mubr.f32.mxu0 0.0
        %524 = vmatmul.mubr.f32.gmra.mrb[0].mxu0 %v430
        %v525 = vpop.f32.mrb[0].mxu0
        %v526 = vadd.f32 0.0, %v525
        %v527 = vpop.f32.mrb[0].mxu0
        %528 = vmatprep.mubr.f32.mxu0 0.0
        %529 = vmatmul.mubr.f32.gmra.mrb[0].mxu0 %v433
        %v530 = vpop.f32.mrb[0].mxu0
        %v531 = vadd.f32 0.0, %v530
        %v532 = vpop.f32.mrb[0].mxu0
        %533 = vmatprep.mubr.f32.mxu0 0.0
        %534 = vmatmul.mubr.f32.gmra.mrb[0].mxu0 %v436
        %v535 = vpop.f32.mrb[0].mxu0
        %v536 = vadd.f32 0.0, %v535
        %v537 = vpop.f32.mrb[0].mxu0
        %538 = vmatprep.mubr.f32.mxu0 0.0
        %539 = vmatmul.mubr.f32.gmra.mrb[0].mxu0 %v439
        %v540 = vpop.f32.mrb[0].mxu0
        %v541 = vadd.f32 0.0, %v540
        %v542 = vpop.f32.mrb[0].mxu0
        %543 = vmatprep.mubr.f32.mxu0 0.0
        %544 = vmatmul.mubr.f32.gmra.mrb[0].mxu0 %v442
        %v545 = vpop.f32.mrb[0].mxu0
        %v546 = vadd.f32 0.0, %v545
        %v547 = vpop.f32.mrb[0].mxu0
        %548 = vmatprep.mubr.f32.mxu0 0.0
        %549 = vmatmul.mubr.f32.gmra.mrb[0].mxu0 %v445
        %v550 = vpop.f32.mrb[0].mxu0
        %v551 = vadd.f32 0.0, %v550
        %v552 = vpop.f32.mrb[0].mxu0
        %553 = vmatprep.mubr.f32.mxu0 0.0
        %554 = vmatmul.mubr.f32.gmra.mrb[0].mxu0 %v448
        %v555 = vpop.f32.mrb[0].mxu0
        %v556 = vadd.f32 0.0, %v555
        %v557 = vpop.f32.mrb[0].mxu0
        %558 = vdwg.mxu0
        %v559 = vadd.f32 %v423, %v521
        %v560 = vadd.f32 %v423, %v526
        %v561 = vadd.f32 %v423, %v531
        %v562 = vadd.f32 %v423, %v536
        %v563 = vadd.f32 %v423, %v541
        %v564 = vadd.f32 %v423, %v546
        %v565 = vadd.f32 %v423, %v551
        %v566 = vadd.f32 %v423, %v556
        %v567 = vld [vmem:[#allocation5 + $0x10] sm:$0x3]
        %v569 = vsel %vm425, %v345, 0
        %v572 = vsel %vm425, %v350, 0
        %v575 = vsel %vm425, %v355, 0
        %v578 = vsel %vm425, %v360, 0
        %v581 = vsel %vm425, %v365, 0
        %v584 = vsel %vm425, %v370, 0
        %v587 = vsel %vm425, %v375, 0
        %v590 = vsel %vm425, %v380, 0
        %v593 = vsel %vm450, %v567, 0
        %595 = vmatprep.subr.mxu0 0.0
        %596 = vmatpush1.msra.mxu0 %v593
        %597 = vmatprep.subr.mxu0 0.0
        %598 = vmatpush1.msra.mxu0 0.0
        %599 = vmatprep.subr.mxu0 0.0
        %600 = vmatpush1.msra.mxu0 0.0
        %601 = vmatprep.subr.mxu0 0.0
        %602 = vmatpush1.msra.mxu0 0.0
        %603 = vmatprep.subr.mxu0 0.0
        %604 = vmatpush1.msra.mxu0 0.0
        %605 = vmatprep.subr.mxu0 0.0
        %606 = vmatpush1.msra.mxu0 0.0
        %607 = vmatprep.subr.mxu0 0.0
        %608 = vmatpush1.msra.mxu0 0.0
        %609 = vmatprep.subr.mxu0 0.0
        %610 = vmatpush1.msra.mxu0 0.0
        %611 = vmatprep.subr.mxu0 0.0
        %612 = vmatpush1.msra.mxu0 0.0
        %613 = vmatprep.subr.mxu0 0.0
        %614 = vmatpush1.msra.mxu0 0.0
        %615 = vmatprep.subr.mxu0 0.0
        %616 = vmatpush1.msra.mxu0 0.0
        %617 = vmatprep.subr.mxu0 0.0
        %618 = vmatpush1.msra.mxu0 0.0
        %619 = vmatprep.subr.mxu0 0.0
        %620 = vmatpush1.msra.mxu0 0.0
        %621 = vmatprep.subr.mxu0 0.0
        %622 = vmatpush1.msra.mxu0 0.0
        %623 = vmatprep.subr.mxu0 0.0
        %624 = vmatpush1.msra.mxu0 0.0
        %625 = vmatprep.subr.mxu0 0.0
        %626 = vmatpush1.msra.mxu0 0.0
        %627 = vmatprep.subr.mxu0 0.0
        %628 = vmatpush1.msra.mxu0 0.0
        %629 = vmatprep.subr.mxu0 0.0
        %630 = vmatpush1.msra.mxu0 0.0
        %631 = vmatprep.subr.mxu0 0.0
        %632 = vmatpush1.msra.mxu0 0.0
        %633 = vmatprep.subr.mxu0 0.0
        %634 = vmatpush1.msra.mxu0 0.0
        %635 = vmatprep.subr.mxu0 0.0
        %636 = vmatpush1.msra.mxu0 0.0
        %637 = vmatprep.subr.mxu0 0.0
        %638 = vmatpush1.msra.mxu0 0.0
        %639 = vmatprep.subr.mxu0 0.0
        %640 = vmatpush1.msra.mxu0 0.0
        %641 = vmatprep.subr.mxu0 0.0
        %642 = vmatpush1.msra.mxu0 0.0
        %643 = vmatprep.subr.mxu0 0.0
        %644 = vmatpush1.msra.mxu0 0.0
        %645 = vmatprep.subr.mxu0 0.0
        %646 = vmatpush1.msra.mxu0 0.0
        %647 = vmatprep.subr.mxu0 0.0
        %648 = vmatpush1.msra.mxu0 0.0
        %649 = vmatprep.subr.mxu0 0.0
        %650 = vmatpush1.msra.mxu0 0.0
        %651 = vmatprep.subr.mxu0 0.0
        %652 = vmatpush1.msra.mxu0 0.0
        %653 = vmatprep.subr.mxu0 0.0
        %654 = vmatpush1.msra.mxu0 0.0
        %655 = vmatprep.subr.mxu0 0.0
        %656 = vmatpush1.msra.mxu0 0.0
        %657 = vmatprep.subr.mxu0 0.0
        %658 = vmatpush1.msra.mxu0 0.0
        %659 = vmatprep.mubr.f32.mxu0 0.0
        %660 = vmatmul.mubr.f32.gmra.mrb[0].mxu0 %v569
        %v661 = vpop.f32.mrb[0].mxu0
        %v662 = vadd.f32 0.0, %v661
        %v663 = vpop.f32.mrb[0].mxu0
        %664 = vmatprep.mubr.f32.mxu0 0.0
        %665 = vmatmul.mubr.f32.gmra.mrb[0].mxu0 %v572
        %v666 = vpop.f32.mrb[0].mxu0
        %v667 = vadd.f32 0.0, %v666
        %v668 = vpop.f32.mrb[0].mxu0
        %669 = vmatprep.mubr.f32.mxu0 0.0
        %670 = vmatmul.mubr.f32.gmra.mrb[0].mxu0 %v575
        %v671 = vpop.f32.mrb[0].mxu0
        %v672 = vadd.f32 0.0, %v671
        %v673 = vpop.f32.mrb[0].mxu0
        %674 = vmatprep.mubr.f32.mxu0 0.0
        %675 = vmatmul.mubr.f32.gmra.mrb[0].mxu0 %v578
        %v676 = vpop.f32.mrb[0].mxu0
        %v677 = vadd.f32 0.0, %v676
        %v678 = vpop.f32.mrb[0].mxu0
        %679 = vmatprep.mubr.f32.mxu0 0.0
        %680 = vmatmul.mubr.f32.gmra.mrb[0].mxu0 %v581
        %v681 = vpop.f32.mrb[0].mxu0
        %v682 = vadd.f32 0.0, %v681
        %v683 = vpop.f32.mrb[0].mxu0
        %684 = vmatprep.mubr.f32.mxu0 0.0
        %685 = vmatmul.mubr.f32.gmra.mrb[0].mxu0 %v584
        %v686 = vpop.f32.mrb[0].mxu0
        %v687 = vadd.f32 0.0, %v686
        %v688 = vpop.f32.mrb[0].mxu0
        %689 = vmatprep.mubr.f32.mxu0 0.0
        %690 = vmatmul.mubr.f32.gmra.mrb[0].mxu0 %v587
        %v691 = vpop.f32.mrb[0].mxu0
        %v692 = vadd.f32 0.0, %v691
        %v693 = vpop.f32.mrb[0].mxu0
        %694 = vmatprep.mubr.f32.mxu0 0.0
        %695 = vmatmul.mubr.f32.gmra.mrb[0].mxu0 %v590
        %v696 = vpop.f32.mrb[0].mxu0
        %v697 = vadd.f32 0.0, %v696
        %v698 = vpop.f32.mrb[0].mxu0
        %699 = vdwg.mxu0
        %v700 = vadd.f32 %v559, %v662
        %v701 = vadd.f32 %v560, %v667
        %v702 = vadd.f32 %v561, %v672
        %v703 = vadd.f32 %v562, %v677
        %v704 = vadd.f32 %v563, %v682
        %v705 = vadd.f32 %v564, %v687
        %v706 = vadd.f32 %v565, %v692
        %v707 = vadd.f32 %v566, %v697
        %v708 = vld [vmem:[#allocation5 + $0x20] sm:$0x3]
        %v710 = vsel %vm425, %v385, 0
        %v713 = vsel %vm425, %v390, 0
        %v716 = vsel %vm425, %v395, 0
        %v719 = vsel %vm425, %v400, 0
        %v722 = vsel %vm425, %v405, 0
        %v725 = vsel %vm425, %v410, 0
        %v728 = vsel %vm425, %v415, 0
        %v731 = vsel %vm425, %v420, 0
        %v734 = vsel %vm450, %v708, 0
        %736 = vmatprep.subr.mxu0 0.0
        %737 = vmatpush1.msra.mxu0 %v734
        %738 = vmatprep.subr.mxu0 0.0
        %739 = vmatpush1.msra.mxu0 0.0
        %740 = vmatprep.subr.mxu0 0.0
        %741 = vmatpush1.msra.mxu0 0.0
        %742 = vmatprep.subr.mxu0 0.0
        %743 = vmatpush1.msra.mxu0 0.0
        %744 = vmatprep.subr.mxu0 0.0
        %745 = vmatpush1.msra.mxu0 0.0
        %746 = vmatprep.subr.mxu0 0.0
        %747 = vmatpush1.msra.mxu0 0.0
        %748 = vmatprep.subr.mxu0 0.0
        %749 = vmatpush1.msra.mxu0 0.0
        %750 = vmatprep.subr.mxu0 0.0
        %751 = vmatpush1.msra.mxu0 0.0
        %752 = vmatprep.subr.mxu0 0.0
        %753 = vmatpush1.msra.mxu0 0.0
        %754 = vmatprep.subr.mxu0 0.0
        %755 = vmatpush1.msra.mxu0 0.0
        %756 = vmatprep.subr.mxu0 0.0
        %757 = vmatpush1.msra.mxu0 0.0
        %758 = vmatprep.subr.mxu0 0.0
        %759 = vmatpush1.msra.mxu0 0.0
        %760 = vmatprep.subr.mxu0 0.0
        %761 = vmatpush1.msra.mxu0 0.0
        %762 = vmatprep.subr.mxu0 0.0
        %763 = vmatpush1.msra.mxu0 0.0
        %764 = vmatprep.subr.mxu0 0.0
        %765 = vmatpush1.msra.mxu0 0.0
        %766 = vmatprep.subr.mxu0 0.0
        %767 = vmatpush1.msra.mxu0 0.0
        %768 = vmatprep.subr.mxu0 0.0
        %769 = vmatpush1.msra.mxu0 0.0
        %770 = vmatprep.subr.mxu0 0.0
        %771 = vmatpush1.msra.mxu0 0.0
        %772 = vmatprep.subr.mxu0 0.0
        %773 = vmatpush1.msra.mxu0 0.0
        %774 = vmatprep.subr.mxu0 0.0
        %775 = vmatpush1.msra.mxu0 0.0
        %776 = vmatprep.subr.mxu0 0.0
        %777 = vmatpush1.msra.mxu0 0.0
        %778 = vmatprep.subr.mxu0 0.0
        %779 = vmatpush1.msra.mxu0 0.0
        %780 = vmatprep.subr.mxu0 0.0
        %781 = vmatpush1.msra.mxu0 0.0
        %782 = vmatprep.subr.mxu0 0.0
        %783 = vmatpush1.msra.mxu0 0.0
        %784 = vmatprep.subr.mxu0 0.0
        %785 = vmatpush1.msra.mxu0 0.0
        %786 = vmatprep.subr.mxu0 0.0
        %787 = vmatpush1.msra.mxu0 0.0
        %788 = vmatprep.subr.mxu0 0.0
        %789 = vmatpush1.msra.mxu0 0.0
        %790 = vmatprep.subr.mxu0 0.0
        %791 = vmatpush1.msra.mxu0 0.0
        %792 = vmatprep.subr.mxu0 0.0
        %793 = vmatpush1.msra.mxu0 0.0
        %794 = vmatprep.subr.mxu0 0.0
        %795 = vmatpush1.msra.mxu0 0.0
        %796 = vmatprep.subr.mxu0 0.0
        %797 = vmatpush1.msra.mxu0 0.0
        %798 = vmatprep.subr.mxu0 0.0
        %799 = vmatpush1.msra.mxu0 0.0
        %800 = vmatprep.mubr.f32.mxu0 0.0
        %801 = vmatmul.mubr.f32.gmra.mrb[0].mxu0 %v710
        %v802 = vpop.f32.mrb[0].mxu0
        %v803 = vadd.f32 0.0, %v802
        %v804 = vpop.f32.mrb[0].mxu0
        %805 = vmatprep.mubr.f32.mxu0 0.0
        %806 = vmatmul.mubr.f32.gmra.mrb[0].mxu0 %v713
        %v807 = vpop.f32.mrb[0].mxu0
        %v808 = vadd.f32 0.0, %v807
        %v809 = vpop.f32.mrb[0].mxu0
        %810 = vmatprep.mubr.f32.mxu0 0.0
        %811 = vmatmul.mubr.f32.gmra.mrb[0].mxu0 %v716
        %v812 = vpop.f32.mrb[0].mxu0
        %v813 = vadd.f32 0.0, %v812
        %v814 = vpop.f32.mrb[0].mxu0
        %815 = vmatprep.mubr.f32.mxu0 0.0
        %816 = vmatmul.mubr.f32.gmra.mrb[0].mxu0 %v719
        %v817 = vpop.f32.mrb[0].mxu0
        %v818 = vadd.f32 0.0, %v817
        %v819 = vpop.f32.mrb[0].mxu0
        %820 = vmatprep.mubr.f32.mxu0 0.0
        %821 = vmatmul.mubr.f32.gmra.mrb[0].mxu0 %v722
        %v822 = vpop.f32.mrb[0].mxu0
        %v823 = vadd.f32 0.0, %v822
        %v824 = vpop.f32.mrb[0].mxu0
        %825 = vmatprep.mubr.f32.mxu0 0.0
        %826 = vmatmul.mubr.f32.gmra.mrb[0].mxu0 %v725
        %v827 = vpop.f32.mrb[0].mxu0
        %v828 = vadd.f32 0.0, %v827
        %v829 = vpop.f32.mrb[0].mxu0
        %830 = vmatprep.mubr.f32.mxu0 0.0
        %831 = vmatmul.mubr.f32.gmra.mrb[0].mxu0 %v728
        %v832 = vpop.f32.mrb[0].mxu0
        %v833 = vadd.f32 0.0, %v832
        %v834 = vpop.f32.mrb[0].mxu0
        %835 = vmatprep.mubr.f32.mxu0 0.0
        %836 = vmatmul.mubr.f32.gmra.mrb[0].mxu0 %v731
        %v837 = vpop.f32.mrb[0].mxu0
        %v838 = vadd.f32 0.0, %v837
        %v839 = vpop.f32.mrb[0].mxu0
        %840 = vdwg.mxu0
        %v841 = vadd.f32 %v700, %v803
        %v842 = vadd.f32 %v701, %v808
        %v843 = vadd.f32 %v702, %v813
        %v844 = vadd.f32 %v703, %v818
        %v845 = vadd.f32 %v704, %v823
        %v846 = vadd.f32 %v705, %v828
        %v847 = vadd.f32 %v706, %v833
        %v848 = vadd.f32 %v707, %v838
        %v849 = vmax.f32 %v841, 0.0
        %v850 = vmax.f32 %v842, 0.0
        %v851 = vmax.f32 %v843, 0.0
        %v852 = vmax.f32 %v844, 0.0
        %v853 = vmax.f32 %v845, 0.0
        %v854 = vmax.f32 %v846, 0.0
        %v855 = vmax.f32 %v847, 0.0
        %v856 = vmax.f32 %v848, 0.0
        %v857 = vld [vmem:[#allocation2 + $0xc0] sm:$0xff]
        %v858 = vld [vmem:[#allocation2 + $0xc8] sm:$0xff]
        %v859 = vld [vmem:[#allocation2 + $0xd0] sm:$0xff]
        %v860 = vld [vmem:[#allocation2 + $0xd8] sm:$0xff]
        %v861 = vld [vmem:[#allocation2 + $0xe0] sm:$0xff]
        %v862 = vld [vmem:[#allocation2 + $0xe8] sm:$0xff]
        %v863 = vld [vmem:[#allocation2 + $0xf0] sm:$0xff]
        %v864 = vld [vmem:[#allocation2 + $0xf8] sm:$0xff]
        %v865 = vld [vmem:[#allocation2 + $0x100] sm:$0xff]
        %v866 = vld [vmem:[#allocation2 + $0x108] sm:$0xff]
        %v867 = vld [vmem:[#allocation2 + $0x110] sm:$0xff]
        %v868 = vld [vmem:[#allocation2 + $0x118] sm:$0xff]
        %vm869 = vcmask 523264
        %v871 = vsel %vm869, %v857, 0
        %v874 = vsel %vm869, %v858, 0
        %v877 = vsel %vm869, %v859, 0
        %v880 = vsel %vm869, %v860, 0
        %v883 = vsel %vm869, %v861, 0
        %v886 = vsel %vm869, %v862, 0
        %v889 = vsel %vm869, %v863, 0
        %v892 = vsel %vm869, %v864, 0
        %v895 = vsel %vm869, %v865, 0
        %v898 = vsel %vm869, %v866, 0
        %v901 = vsel %vm869, %v867, 0
        %v904 = vsel %vm869, %v868, 0
        %906 = vmatprep.subr.mxu0 0.0
        %907 = vmatpush1.msra.mxu0 %v849
        %908 = vmatprep.subr.mxu0 0.0
        %909 = vmatpush1.msra.mxu0 %v850
        %910 = vmatprep.subr.mxu0 0.0
        %911 = vmatpush1.msra.mxu0 %v851
        %912 = vmatprep.subr.mxu0 0.0
        %913 = vmatpush1.msra.mxu0 %v852
        %914 = vmatprep.subr.mxu0 0.0
        %915 = vmatpush1.msra.mxu0 %v853
        %916 = vmatprep.subr.mxu0 0.0
        %917 = vmatpush1.msra.mxu0 %v854
        %918 = vmatprep.subr.mxu0 0.0
        %919 = vmatpush1.msra.mxu0 %v855
        %920 = vmatprep.subr.mxu0 0.0
        %921 = vmatpush1.msra.mxu0 %v856
        %922 = vmatprep.subr.mxu0 0.0
        %923 = vmatpush1.msra.mxu0 0.0
        %924 = vmatprep.subr.mxu0 0.0
        %925 = vmatpush1.msra.mxu0 0.0
        %926 = vmatprep.subr.mxu0 0.0
        %927 = vmatpush1.msra.mxu0 0.0
        %928 = vmatprep.subr.mxu0 0.0
        %929 = vmatpush1.msra.mxu0 0.0
        %930 = vmatprep.subr.mxu0 0.0
        %931 = vmatpush1.msra.mxu0 0.0
        %932 = vmatprep.subr.mxu0 0.0
        %933 = vmatpush1.msra.mxu0 0.0
        %934 = vmatprep.subr.mxu0 0.0
        %935 = vmatpush1.msra.mxu0 0.0
        %936 = vmatprep.subr.mxu0 0.0
        %937 = vmatpush1.msra.mxu0 0.0
        %938 = vmatprep.subr.mxu0 0.0
        %939 = vmatpush1.msra.mxu0 0.0
        %940 = vmatprep.subr.mxu0 0.0
        %941 = vmatpush1.msra.mxu0 0.0
        %942 = vmatprep.subr.mxu0 0.0
        %943 = vmatpush1.msra.mxu0 0.0
        %944 = vmatprep.subr.mxu0 0.0
        %945 = vmatpush1.msra.mxu0 0.0
        %946 = vmatprep.subr.mxu0 0.0
        %947 = vmatpush1.msra.mxu0 0.0
        %948 = vmatprep.subr.mxu0 0.0
        %949 = vmatpush1.msra.mxu0 0.0
        %950 = vmatprep.subr.mxu0 0.0
        %951 = vmatpush1.msra.mxu0 0.0
        %952 = vmatprep.subr.mxu0 0.0
        %953 = vmatpush1.msra.mxu0 0.0
        %954 = vmatprep.subr.mxu0 0.0
        %955 = vmatpush1.msra.mxu0 0.0
        %956 = vmatprep.subr.mxu0 0.0
        %957 = vmatpush1.msra.mxu0 0.0
        %958 = vmatprep.subr.mxu0 0.0
        %959 = vmatpush1.msra.mxu0 0.0
        %960 = vmatprep.subr.mxu0 0.0
        %961 = vmatpush1.msra.mxu0 0.0
        %962 = vmatprep.subr.mxu0 0.0
        %963 = vmatpush1.msra.mxu0 0.0
        %964 = vmatprep.subr.mxu0 0.0
        %965 = vmatpush1.msra.mxu0 0.0
        %966 = vmatprep.subr.mxu0 0.0
        %967 = vmatpush1.msra.mxu0 0.0
        %968 = vmatprep.subr.mxu0 0.0
        %969 = vmatpush1.msra.mxu0 0.0
        %970 = vmatprep.mubr.f32.mxu0 0.0
        %971 = vmatmul.mubr.f32.gmra.mrb[0].mxu0 %v871
        %v972 = vpop.f32.mrb[0].mxu0
        %v973 = vadd.f32 0.0, %v972
        %v974 = vpop.f32.mrb[0].mxu0
        %975 = vmatprep.mubr.f32.mxu0 0.0
        %976 = vmatmul.mubr.f32.gmra.mrb[0].mxu0 %v874
        %v977 = vpop.f32.mrb[0].mxu0
        %v978 = vadd.f32 0.0, %v977
        %v979 = vpop.f32.mrb[0].mxu0
        %980 = vmatprep.mubr.f32.mxu0 0.0
        %981 = vmatmul.mubr.f32.gmra.mrb[0].mxu0 %v877
        %v982 = vpop.f32.mrb[0].mxu0
        %v983 = vadd.f32 0.0, %v982
        %v984 = vpop.f32.mrb[0].mxu0
        %985 = vmatprep.mubr.f32.mxu0 0.0
        %986 = vmatmul.mubr.f32.gmra.mrb[0].mxu0 %v880
        %v987 = vpop.f32.mrb[0].mxu0
        %v988 = vadd.f32 0.0, %v987
        %v989 = vpop.f32.mrb[0].mxu0
        %990 = vmatprep.mubr.f32.mxu0 0.0
        %991 = vmatmul.mubr.f32.gmra.mrb[0].mxu0 %v883
        %v992 = vpop.f32.mrb[0].mxu0
        %v993 = vadd.f32 0.0, %v992
        %v994 = vpop.f32.mrb[0].mxu0
        %995 = vmatprep.mubr.f32.mxu0 0.0
        %996 = vmatmul.mubr.f32.gmra.mrb[0].mxu0 %v886
        %v997 = vpop.f32.mrb[0].mxu0
        %v998 = vadd.f32 0.0, %v997
        %v999 = vpop.f32.mrb[0].mxu0
        %1000 = vmatprep.mubr.f32.mxu0 0.0
        %1001 = vmatmul.mubr.f32.gmra.mrb[0].mxu0 %v889
        %v1002 = vpop.f32.mrb[0].mxu0
        %v1003 = vadd.f32 0.0, %v1002
        %v1004 = vpop.f32.mrb[0].mxu0
        %1005 = vmatprep.mubr.f32.mxu0 0.0
        %1006 = vmatmul.mubr.f32.gmra.mrb[0].mxu0 %v892
        %v1007 = vpop.f32.mrb[0].mxu0
        %v1008 = vadd.f32 0.0, %v1007
        %v1009 = vpop.f32.mrb[0].mxu0
        %1010 = vmatprep.mubr.f32.mxu0 0.0
        %1011 = vmatmul.mubr.f32.gmra.mrb[0].mxu0 %v895
        %v1012 = vpop.f32.mrb[0].mxu0
        %v1013 = vadd.f32 0.0, %v1012
        %v1014 = vpop.f32.mrb[0].mxu0
        %1015 = vmatprep.mubr.f32.mxu0 0.0
        %1016 = vmatmul.mubr.f32.gmra.mrb[0].mxu0 %v898
        %v1017 = vpop.f32.mrb[0].mxu0
        %v1018 = vadd.f32 0.0, %v1017
        %v1019 = vpop.f32.mrb[0].mxu0
        %1020 = vmatprep.mubr.f32.mxu0 0.0
        %1021 = vmatmul.mubr.f32.gmra.mrb[0].mxu0 %v901
        %v1022 = vpop.f32.mrb[0].mxu0
        %v1023 = vadd.f32 0.0, %v1022
        %v1024 = vpop.f32.mrb[0].mxu0
        %1025 = vmatprep.mubr.f32.mxu0 0.0
        %1026 = vmatmul.mubr.f32.gmra.mrb[0].mxu0 %v904
        %v1027 = vpop.f32.mrb[0].mxu0
        %v1028 = vadd.f32 0.0, %v1027
        %v1029 = vpop.f32.mrb[0].mxu0
        %1030 = vdwg.mxu0
        %v1031 = vmax.f32 %v973, %v993
        %v1032 = vmax.f32 %v978, %v998
        %v1033 = vmax.f32 %v983, %v1003
        %v1034 = vmax.f32 %v988, %v1008
        %v1035 = vmax.f32 %v1031, %v1013
        %v1036 = vmax.f32 %v1032, %v1018
        %v1037 = vmax.f32 %v1033, %v1023
        %v1038 = vmax.f32 %v1034, %v1028
        %v1039 = vld [vmem:[#allocation5 + $0x40] sm:$0xf]
        %v1040 = vld [vmem:[#allocation2 + $0x120] sm:$0xff]
        %v1041 = vld [vmem:[#allocation2 + $0x128] sm:$0xff]
        %v1042 = vld [vmem:[#allocation2 + $0x130] sm:$0xff]
        %v1043 = vld [vmem:[#allocation2 + $0x138] sm:$0xff]
        %v1044 = vld [vmem:[#allocation2 + $0x140] sm:$0xff]
        %v1045 = vld [vmem:[#allocation2 + $0x148] sm:$0xff]
        %vm1046 = vcmask 261120
        %v1048 = vsel %vm1046, %v1040, 0
        %v1051 = vsel %vm1046, %v1041, 0
        %v1054 = vsel %vm1046, %v1042, 0
        %v1057 = vsel %vm1046, %v1043, 0
        %v1060 = vsel %vm1046, %v1044, 0
        %v1063 = vsel %vm1046, %v1045, 0
        %1065 = vmatprep.subr.mxu0 0.0
        %1066 = vmatpush1.msra.mxu0 %v1035
        %1067 = vmatprep.subr.mxu0 0.0
        %1068 = vmatpush1.msra.mxu0 %v1036
        %1069 = vmatprep.subr.mxu0 0.0
        %1070 = vmatpush1.msra.mxu0 %v1037
        %1071 = vmatprep.subr.mxu0 0.0
        %1072 = vmatpush1.msra.mxu0 %v1038
        %1073 = vmatprep.subr.mxu0 0.0
        %1074 = vmatpush1.msra.mxu0 0.0
        %1075 = vmatprep.subr.mxu0 0.0
        %1076 = vmatpush1.msra.mxu0 0.0
        %1077 = vmatprep.subr.mxu0 0.0
        %1078 = vmatpush1.msra.mxu0 0.0
        %1079 = vmatprep.subr.mxu0 0.0
        %1080 = vmatpush1.msra.mxu0 0.0
        %1081 = vmatprep.subr.mxu0 0.0
        %1082 = vmatpush1.msra.mxu0 0.0
        %1083 = vmatprep.subr.mxu0 0.0
        %1084 = vmatpush1.msra.mxu0 0.0
        %1085 = vmatprep.subr.mxu0 0.0
        %1086 = vmatpush1.msra.mxu0 0.0
        %1087 = vmatprep.subr.mxu0 0.0
        %1088 = vmatpush1.msra.mxu0 0.0
        %1089 = vmatprep.subr.mxu0 0.0
        %1090 = vmatpush1.msra.mxu0 0.0
        %1091 = vmatprep.subr.mxu0 0.0
        %1092 = vmatpush1.msra.mxu0 0.0
        %1093 = vmatprep.subr.mxu0 0.0
        %1094 = vmatpush1.msra.mxu0 0.0
        %1095 = vmatprep.subr.mxu0 0.0
        %1096 = vmatpush1.msra.mxu0 0.0
        %1097 = vmatprep.subr.mxu0 0.0
        %1098 = vmatpush1.msra.mxu0 0.0
        %1099 = vmatprep.subr.mxu0 0.0
        %1100 = vmatpush1.msra.mxu0 0.0
        %1101 = vmatprep.subr.mxu0 0.0
        %1102 = vmatpush1.msra.mxu0 0.0
        %1103 = vmatprep.subr.mxu0 0.0
        %1104 = vmatpush1.msra.mxu0 0.0
        %1105 = vmatprep.subr.mxu0 0.0
        %1106 = vmatpush1.msra.mxu0 0.0
        %1107 = vmatprep.subr.mxu0 0.0
        %1108 = vmatpush1.msra.mxu0 0.0
        %1109 = vmatprep.subr.mxu0 0.0
        %1110 = vmatpush1.msra.mxu0 0.0
        %1111 = vmatprep.subr.mxu0 0.0
        %1112 = vmatpush1.msra.mxu0 0.0
        %1113 = vmatprep.subr.mxu0 0.0
        %1114 = vmatpush1.msra.mxu0 0.0
        %1115 = vmatprep.subr.mxu0 0.0
        %1116 = vmatpush1.msra.mxu0 0.0
        %1117 = vmatprep.subr.mxu0 0.0
        %1118 = vmatpush1.msra.mxu0 0.0
        %1119 = vmatprep.subr.mxu0 0.0
        %1120 = vmatpush1.msra.mxu0 0.0
        %1121 = vmatprep.subr.mxu0 0.0
        %1122 = vmatpush1.msra.mxu0 0.0
        %1123 = vmatprep.subr.mxu0 0.0
        %1124 = vmatpush1.msra.mxu0 0.0
        %1125 = vmatprep.subr.mxu0 0.0
        %1126 = vmatpush1.msra.mxu0 0.0
        %1127 = vmatprep.subr.mxu0 0.0
        %1128 = vmatpush1.msra.mxu0 0.0
        %1129 = vmatprep.mubr.f32.mxu0 0.0
        %1130 = vmatmul.mubr.f32.gmra.mrb[0].mxu0 %v1048
        %v1131 = vpop.f32.mrb[0].mxu0
        %v1132 = vadd.f32 0.0, %v1131
        %v1133 = vpop.f32.mrb[0].mxu0
        %1134 = vmatprep.mubr.f32.mxu0 0.0
        %1135 = vmatmul.mubr.f32.gmra.mrb[0].mxu0 %v1051
        %v1136 = vpop.f32.mrb[0].mxu0
        %v1137 = vadd.f32 0.0, %v1136
        %v1138 = vpop.f32.mrb[0].mxu0
        %1139 = vmatprep.mubr.f32.mxu0 0.0
        %1140 = vmatmul.mubr.f32.gmra.mrb[0].mxu0 %v1054
        %v1141 = vpop.f32.mrb[0].mxu0
        %v1142 = vadd.f32 0.0, %v1141
        %v1143 = vpop.f32.mrb[0].mxu0
        %1144 = vmatprep.mubr.f32.mxu0 0.0
        %1145 = vmatmul.mubr.f32.gmra.mrb[0].mxu0 %v1057
        %v1146 = vpop.f32.mrb[0].mxu0
        %v1147 = vadd.f32 0.0, %v1146
        %v1148 = vpop.f32.mrb[0].mxu0
        %1149 = vmatprep.mubr.f32.mxu0 0.0
        %1150 = vmatmul.mubr.f32.gmra.mrb[0].mxu0 %v1060
        %v1151 = vpop.f32.mrb[0].mxu0
        %v1152 = vadd.f32 0.0, %v1151
        %v1153 = vpop.f32.mrb[0].mxu0
        %1154 = vmatprep.mubr.f32.mxu0 0.0
        %1155 = vmatmul.mubr.f32.gmra.mrb[0].mxu0 %v1063
        %v1156 = vpop.f32.mrb[0].mxu0
        %v1157 = vadd.f32 0.0, %v1156
        %v1158 = vpop.f32.mrb[0].mxu0
        %1159 = vdwg.mxu0
        %v1160 = vlaneseq
        %v1161 = vshrl.u32 %v1160, 7
        %v1162 = vsub.s32 0, %v1161
        %v1163 = vrot.slane %v1039, %v1162
        %v1164 = vmul.f32 %v1132, %v1163
        %v1165 = vmul.f32 %v1137, %v1163
        %v1166 = vlaneseq
        %v1167 = vshrl.u32 %v1166, 7
        %v1168 = vsub.s32 1, %v1167
        %v1169 = vrot.slane %v1039, %v1168
        %v1170 = vmul.f32 %v1142, %v1169
        %v1171 = vmul.f32 %v1147, %v1169
        %v1172 = vadd.f32 %v1164, %v1170
        %v1173 = vadd.f32 %v1165, %v1171
        %v1174 = vlaneseq
        %v1175 = vshrl.u32 %v1174, 7
        %v1176 = vsub.s32 2, %v1175
        %v1177 = vrot.slane %v1039, %v1176
        %v1178 = vmul.f32 %v1152, %v1177
        %v1179 = vmul.f32 %v1157, %v1177
        %v1180 = vadd.f32 %v1172, %v1178
        %v1181 = vadd.f32 %v1173, %v1179
        %v1182 = vlaneseq
        %v1183 = vshrl.u32 %v1182, 7
        %v1184 = vsub.s32 3, %v1183
        %v1185 = vrot.slane %v1039, %v1184
        %v1186 = vadd.f32 %v1180, %v1185
        %v1187 = vadd.f32 %v1181, %v1185
        %v1188 = vld [vmem:[#allocation5 + $0x50] sm:$0xff]
        %v1189 = vld [vmem:[#allocation5 + $0x60] sm:$0xf]
        %v1190 = vld [vmem:[#allocation5 + $0x70] ss:$0 sm:$0xff]
        %vm1191 = vcmask 97280
        %v1193 = vsel %vm1191, %v1186, 0
        %v1196 = vsel %vm1191, %v1187, 0
        %vm1198 = vcmask 1043456
        %v1200 = vsel %vm1198, %v1189, 0
        %1202 = vmatprep.subr.mxu0 0.0
        %1203 = vmatpush1.msra.mxu0 %v1188
        %1204 = vmatprep.subr.mxu0 0.0
        %1205 = vmatpush1.msra.mxu0 %v1200
        %1206 = vmatprep.subr.mxu0 0.0
        %1207 = vmatpush1.msra.mxu0 0.0
        %1208 = vmatprep.subr.mxu0 0.0
        %1209 = vmatpush1.msra.mxu0 0.0
        %1210 = vmatprep.subr.mxu0 0.0
        %1211 = vmatpush1.msra.mxu0 0.0
        %1212 = vmatprep.subr.mxu0 0.0
        %1213 = vmatpush1.msra.mxu0 0.0
        %1214 = vmatprep.subr.mxu0 0.0
        %1215 = vmatpush1.msra.mxu0 0.0
        %1216 = vmatprep.subr.mxu0 0.0
        %1217 = vmatpush1.msra.mxu0 0.0
        %1218 = vmatprep.subr.mxu0 0.0
        %1219 = vmatpush1.msra.mxu0 0.0
        %1220 = vmatprep.subr.mxu0 0.0
        %1221 = vmatpush1.msra.mxu0 0.0
        %1222 = vmatprep.subr.mxu0 0.0
        %1223 = vmatpush1.msra.mxu0 0.0
        %1224 = vmatprep.subr.mxu0 0.0
        %1225 = vmatpush1.msra.mxu0 0.0
        %1226 = vmatprep.subr.mxu0 0.0
        %1227 = vmatpush1.msra.mxu0 0.0
        %1228 = vmatprep.subr.mxu0 0.0
        %1229 = vmatpush1.msra.mxu0 0.0
        %1230 = vmatprep.subr.mxu0 0.0
        %1231 = vmatpush1.msra.mxu0 0.0
        %1232 = vmatprep.subr.mxu0 0.0
        %1233 = vmatpush1.msra.mxu0 0.0
        %1234 = vmatprep.subr.mxu0 0.0
        %1235 = vmatpush1.msra.mxu0 0.0
        %1236 = vmatprep.subr.mxu0 0.0
        %1237 = vmatpush1.msra.mxu0 0.0
        %1238 = vmatprep.subr.mxu0 0.0
        %1239 = vmatpush1.msra.mxu0 0.0
        %1240 = vmatprep.subr.mxu0 0.0
        %1241 = vmatpush1.msra.mxu0 0.0
        %1242 = vmatprep.subr.mxu0 0.0
        %1243 = vmatpush1.msra.mxu0 0.0
        %1244 = vmatprep.subr.mxu0 0.0
        %1245 = vmatpush1.msra.mxu0 0.0
        %1246 = vmatprep.subr.mxu0 0.0
        %1247 = vmatpush1.msra.mxu0 0.0
        %1248 = vmatprep.subr.mxu0 0.0
        %1249 = vmatpush1.msra.mxu0 0.0
        %1250 = vmatprep.subr.mxu0 0.0
        %1251 = vmatpush1.msra.mxu0 0.0
        %1252 = vmatprep.subr.mxu0 0.0
        %1253 = vmatpush1.msra.mxu0 0.0
        %1254 = vmatprep.subr.mxu0 0.0
        %1255 = vmatpush1.msra.mxu0 0.0
        %1256 = vmatprep.subr.mxu0 0.0
        %1257 = vmatpush1.msra.mxu0 0.0
        %1258 = vmatprep.subr.mxu0 0.0
        %1259 = vmatpush1.msra.mxu0 0.0
        %1260 = vmatprep.subr.mxu0 0.0
        %1261 = vmatpush1.msra.mxu0 0.0
        %1262 = vmatprep.subr.mxu0 0.0
        %1263 = vmatpush1.msra.mxu0 0.0
        %1264 = vmatprep.subr.mxu0 0.0
        %1265 = vmatpush1.msra.mxu0 0.0
        %1266 = vmatprep.mubr.f32.mxu0 0.0
        %1267 = vmatmul.mubr.f32.gmra.mrb[0].mxu0 %v1193
        %v1268 = vpop.f32.mrb[0].mxu0
        %v1269 = vadd.f32 %v1190, %v1268
        %v1270 = vpop.f32.mrb[0].mxu0
        %1271 = vmatprep.mubr.f32.mxu0 0.0
        %1272 = vmatmul.mubr.f32.gmra.mrb[0].mxu0 %v1196
        %v1273 = vpop.f32.mrb[0].mxu0
        %v1274 = vadd.f32 %v1190, %v1273
        %v1275 = vpop.f32.mrb[0].mxu0
        %1276 = vdwg.mxu0
        %v1277 = vmax.f32 %v1269, 0.0
        %v1278 = vmax.f32 %v1274, 0.0
        %v1279 = vld [vmem:[#allocation5 + $0x80] sm:$0xff]
        %v1280 = vld [vmem:[#allocation5 + $0x90] sm:$0xf]
        %v1281 = vld [vmem:[#allocation5 + $0xa0] ss:$0 sm:$0xff]
        %v1283 = vsel %vm1191, %v1035, 0
        %v1286 = vsel %vm1191, %v1036, 0
        %v1289 = vsel %vm1191, %v1037, 0
        %v1292 = vsel %vm1191, %v1038, 0
        %v1295 = vsel %vm1198, %v1280, 0
        %1297 = vmatprep.subr.mxu0 0.0
        %1298 = vmatpush1.msra.mxu0 %v1279
        %1299 = vmatprep.subr.mxu0 0.0
        %1300 = vmatpush1.msra.mxu0 %v1295
        %1301 = vmatprep.subr.mxu0 0.0
        %1302 = vmatpush1.msra.mxu0 0.0
        %1303 = vmatprep.subr.mxu0 0.0
        %1304 = vmatpush1.msra.mxu0 0.0
        %1305 = vmatprep.subr.mxu0 0.0
        %1306 = vmatpush1.msra.mxu0 0.0
        %1307 = vmatprep.subr.mxu0 0.0
        %1308 = vmatpush1.msra.mxu0 0.0
        %1309 = vmatprep.subr.mxu0 0.0
        %1310 = vmatpush1.msra.mxu0 0.0
        %1311 = vmatprep.subr.mxu0 0.0
        %1312 = vmatpush1.msra.mxu0 0.0
        %1313 = vmatprep.subr.mxu0 0.0
        %1314 = vmatpush1.msra.mxu0 0.0
        %1315 = vmatprep.subr.mxu0 0.0
        %1316 = vmatpush1.msra.mxu0 0.0
        %1317 = vmatprep.subr.mxu0 0.0
        %1318 = vmatpush1.msra.mxu0 0.0
        %1319 = vmatprep.subr.mxu0 0.0
        %1320 = vmatpush1.msra.mxu0 0.0
        %1321 = vmatprep.subr.mxu0 0.0
        %1322 = vmatpush1.msra.mxu0 0.0
        %1323 = vmatprep.subr.mxu0 0.0
        %1324 = vmatpush1.msra.mxu0 0.0
        %1325 = vmatprep.subr.mxu0 0.0
        %1326 = vmatpush1.msra.mxu0 0.0
        %1327 = vmatprep.subr.mxu0 0.0
        %1328 = vmatpush1.msra.mxu0 0.0
        %1329 = vmatprep.subr.mxu0 0.0
        %1330 = vmatpush1.msra.mxu0 0.0
        %1331 = vmatprep.subr.mxu0 0.0
        %1332 = vmatpush1.msra.mxu0 0.0
        %1333 = vmatprep.subr.mxu0 0.0
        %1334 = vmatpush1.msra.mxu0 0.0
        %1335 = vmatprep.subr.mxu0 0.0
        %1336 = vmatpush1.msra.mxu0 0.0
        %1337 = vmatprep.subr.mxu0 0.0
        %1338 = vmatpush1.msra.mxu0 0.0
        %1339 = vmatprep.subr.mxu0 0.0
        %1340 = vmatpush1.msra.mxu0 0.0
        %1341 = vmatprep.subr.mxu0 0.0
        %1342 = vmatpush1.msra.mxu0 0.0
        %1343 = vmatprep.subr.mxu0 0.0
        %1344 = vmatpush1.msra.mxu0 0.0
        %1345 = vmatprep.subr.mxu0 0.0
        %1346 = vmatpush1.msra.mxu0 0.0
        %1347 = vmatprep.subr.mxu0 0.0
        %1348 = vmatpush1.msra.mxu0 0.0
        %1349 = vmatprep.subr.mxu0 0.0
        %1350 = vmatpush1.msra.mxu0 0.0
        %1351 = vmatprep.subr.mxu0 0.0
        %1352 = vmatpush1.msra.mxu0 0.0
        %1353 = vmatprep.subr.mxu0 0.0
        %1354 = vmatpush1.msra.mxu0 0.0
        %1355 = vmatprep.subr.mxu0 0.0
        %1356 = vmatpush1.msra.mxu0 0.0
        %1357 = vmatprep.subr.mxu0 0.0
        %1358 = vmatpush1.msra.mxu0 0.0
        %1359 = vmatprep.subr.mxu0 0.0
        %1360 = vmatpush1.msra.mxu0 0.0
        %1361 = vmatprep.mubr.f32.mxu0 0.0
        %1362 = vmatmul.mubr.f32.gmra.mrb[0].mxu0 %v1283
        %v1363 = vpop.f32.mrb[0].mxu0
        %v1364 = vadd.f32 %v1281, %v1363
        %v1365 = vpop.f32.mrb[0].mxu0
        %1366 = vmatprep.mubr.f32.mxu0 0.0
        %1367 = vmatmul.mubr.f32.gmra.mrb[0].mxu0 %v1286
        %v1368 = vpop.f32.mrb[0].mxu0
        %v1369 = vadd.f32 %v1281, %v1368
        %v1370 = vpop.f32.mrb[0].mxu0
        %1371 = vmatprep.mubr.f32.mxu0 0.0
        %1372 = vmatmul.mubr.f32.gmra.mrb[0].mxu0 %v1289
        %v1373 = vpop.f32.mrb[0].mxu0
        %v1374 = vadd.f32 %v1281, %v1373
        %v1375 = vpop.f32.mrb[0].mxu0
        %1376 = vmatprep.mubr.f32.mxu0 0.0
        %1377 = vmatmul.mubr.f32.gmra.mrb[0].mxu0 %v1292
        %v1378 = vpop.f32.mrb[0].mxu0
        %v1379 = vadd.f32 %v1281, %v1378
        %v1380 = vpop.f32.mrb[0].mxu0
        %1381 = vdwg.mxu0
        %v1382 = vmax.f32 %v1364, 0.0
        %v1383 = vmax.f32 %v1369, 0.0
        %v1384 = vmax.f32 %v1374, 0.0
        %v1385 = vmax.f32 %v1379, 0.0
        %v1386 = vld [vmem:[#allocation5 + $0xb0] sm:$0xf]
        %1387 = vmatprep.subr.mxu0 0.0
        %1388 = vmatpush1.msra.mxu0 %v1382
        %1389 = vmatprep.subr.mxu0 0.0
        %1390 = vmatpush1.msra.mxu0 %v1383
        %1391 = vmatprep.subr.mxu0 0.0
        %1392 = vmatpush1.msra.mxu0 %v1384
        %1393 = vmatprep.subr.mxu0 0.0
        %1394 = vmatpush1.msra.mxu0 %v1385
        %1395 = vmatprep.subr.mxu0 0.0
        %1396 = vmatpush1.msra.mxu0 0.0
        %1397 = vmatprep.subr.mxu0 0.0
        %1398 = vmatpush1.msra.mxu0 0.0
        %1399 = vmatprep.subr.mxu0 0.0
        %1400 = vmatpush1.msra.mxu0 0.0
        %1401 = vmatprep.subr.mxu0 0.0
        %1402 = vmatpush1.msra.mxu0 0.0
        %1403 = vmatprep.subr.mxu0 0.0
        %1404 = vmatpush1.msra.mxu0 0.0
        %1405 = vmatprep.subr.mxu0 0.0
        %1406 = vmatpush1.msra.mxu0 0.0
        %1407 = vmatprep.subr.mxu0 0.0
        %1408 = vmatpush1.msra.mxu0 0.0
        %1409 = vmatprep.subr.mxu0 0.0
        %1410 = vmatpush1.msra.mxu0 0.0
        %1411 = vmatprep.subr.mxu0 0.0
        %1412 = vmatpush1.msra.mxu0 0.0
        %1413 = vmatprep.subr.mxu0 0.0
        %1414 = vmatpush1.msra.mxu0 0.0
        %1415 = vmatprep.subr.mxu0 0.0
        %1416 = vmatpush1.msra.mxu0 0.0
        %1417 = vmatprep.subr.mxu0 0.0
        %1418 = vmatpush1.msra.mxu0 0.0
        %1419 = vmatprep.subr.mxu0 0.0
        %1420 = vmatpush1.msra.mxu0 0.0
        %1421 = vmatprep.subr.mxu0 0.0
        %1422 = vmatpush1.msra.mxu0 0.0
        %1423 = vmatprep.subr.mxu0 0.0
        %1424 = vmatpush1.msra.mxu0 0.0
        %1425 = vmatprep.subr.mxu0 0.0
        %1426 = vmatpush1.msra.mxu0 0.0
        %1427 = vmatprep.subr.mxu0 0.0
        %1428 = vmatpush1.msra.mxu0 0.0
        %1429 = vmatprep.subr.mxu0 0.0
        %1430 = vmatpush1.msra.mxu0 0.0
        %1431 = vmatprep.subr.mxu0 0.0
        %1432 = vmatpush1.msra.mxu0 0.0
        %1433 = vmatprep.subr.mxu0 0.0
        %1434 = vmatpush1.msra.mxu0 0.0
        %1435 = vmatprep.subr.mxu0 0.0
        %1436 = vmatpush1.msra.mxu0 0.0
        %1437 = vmatprep.subr.mxu0 0.0
        %1438 = vmatpush1.msra.mxu0 0.0
        %1439 = vmatprep.subr.mxu0 0.0
        %1440 = vmatpush1.msra.mxu0 0.0
        %1441 = vmatprep.subr.mxu0 0.0
        %1442 = vmatpush1.msra.mxu0 0.0
        %1443 = vmatprep.subr.mxu0 0.0
        %1444 = vmatpush1.msra.mxu0 0.0
        %1445 = vmatprep.subr.mxu0 0.0
        %1446 = vmatpush1.msra.mxu0 0.0
        %1447 = vmatprep.subr.mxu0 0.0
        %1448 = vmatpush1.msra.mxu0 0.0
        %1449 = vmatprep.subr.mxu0 0.0
        %1450 = vmatpush1.msra.mxu0 0.0
        %1451 = vmatprep.mubr.f32.mxu0 0.0
        %1452 = vmatmul.mubr.f32.gmra.mrb[0].mxu0 %v1048
        %v1453 = vpop.f32.mrb[0].mxu0
        %v1454 = vadd.f32 0.0, %v1453
        %v1455 = vpop.f32.mrb[0].mxu0
        %1456 = vmatprep.mubr.f32.mxu0 0.0
        %1457 = vmatmul.mubr.f32.gmra.mrb[0].mxu0 %v1051
        %v1458 = vpop.f32.mrb[0].mxu0
        %v1459 = vadd.f32 0.0, %v1458
        %v1460 = vpop.f32.mrb[0].mxu0
        %1461 = vmatprep.mubr.f32.mxu0 0.0
        %1462 = vmatmul.mubr.f32.gmra.mrb[0].mxu0 %v1054
        %v1463 = vpop.f32.mrb[0].mxu0
        %v1464 = vadd.f32 0.0, %v1463
        %v1465 = vpop.f32.mrb[0].mxu0
        %1466 = vmatprep.mubr.f32.mxu0 0.0
        %1467 = vmatmul.mubr.f32.gmra.mrb[0].mxu0 %v1057
        %v1468 = vpop.f32.mrb[0].mxu0
        %v1469 = vadd.f32 0.0, %v1468
        %v1470 = vpop.f32.mrb[0].mxu0
        %1471 = vmatprep.mubr.f32.mxu0 0.0
        %1472 = vmatmul.mubr.f32.gmra.mrb[0].mxu0 %v1060
        %v1473 = vpop.f32.mrb[0].mxu0
        %v1474 = vadd.f32 0.0, %v1473
        %v1475 = vpop.f32.mrb[0].mxu0
        %1476 = vmatprep.mubr.f32.mxu0 0.0
        %1477 = vmatmul.mubr.f32.gmra.mrb[0].mxu0 %v1063
        %v1478 = vpop.f32.mrb[0].mxu0
        %v1479 = vadd.f32 0.0, %v1478
        %v1480 = vpop.f32.mrb[0].mxu0
        %1481 = vdwg.mxu0
        %v1482 = vlaneseq
        %v1483 = vshrl.u32 %v1482, 7
        %v1484 = vsub.s32 0, %v1483
        %v1485 = vrot.slane %v1386, %v1484
        %v1486 = vmul.f32 %v1454, %v1485
        %v1487 = vmul.f32 %v1459, %v1485
        %v1488 = vlaneseq
        %v1489 = vshrl.u32 %v1488, 7
        %v1490 = vsub.s32 1, %v1489
        %v1491 = vrot.slane %v1386, %v1490
        %v1492 = vmul.f32 %v1464, %v1491
        %v1493 = vmul.f32 %v1469, %v1491
        %v1494 = vadd.f32 %v1486, %v1492
        %v1495 = vadd.f32 %v1487, %v1493
        %v1496 = vlaneseq
        %v1497 = vshrl.u32 %v1496, 7
        %v1498 = vsub.s32 2, %v1497
        %v1499 = vrot.slane %v1386, %v1498
        %v1500 = vmul.f32 %v1474, %v1499
        %v1501 = vmul.f32 %v1479, %v1499
        %v1502 = vadd.f32 %v1494, %v1500
        %v1503 = vadd.f32 %v1495, %v1501
        %v1504 = vlaneseq
        %v1505 = vshrl.u32 %v1504, 7
        %v1506 = vsub.s32 3, %v1505
        %v1507 = vrot.slane %v1386, %v1506
        %v1508 = vadd.f32 %v1502, %v1507
        %v1509 = vadd.f32 %v1503, %v1507
        %v1510 = vld [vmem:[#allocation5 + $0xc0] sm:$0xff]
        %v1511 = vld [vmem:[#allocation5 + $0xd0] sm:$0xf]
        %v1512 = vld [vmem:[#allocation5 + $0xe0] ss:$0 sm:$0xff]
        %v1514 = vsel %vm1191, %v1508, 0
        %v1517 = vsel %vm1191, %v1509, 0
        %v1520 = vsel %vm1198, %v1511, 0
        %1522 = vmatprep.subr.mxu0 0.0
        %1523 = vmatpush1.msra.mxu0 %v1510
        %1524 = vmatprep.subr.mxu0 0.0
        %1525 = vmatpush1.msra.mxu0 %v1520
        %1526 = vmatprep.subr.mxu0 0.0
        %1527 = vmatpush1.msra.mxu0 0.0
        %1528 = vmatprep.subr.mxu0 0.0
        %1529 = vmatpush1.msra.mxu0 0.0
        %1530 = vmatprep.subr.mxu0 0.0
        %1531 = vmatpush1.msra.mxu0 0.0
        %1532 = vmatprep.subr.mxu0 0.0
        %1533 = vmatpush1.msra.mxu0 0.0
        %1534 = vmatprep.subr.mxu0 0.0
        %1535 = vmatpush1.msra.mxu0 0.0
        %1536 = vmatprep.subr.mxu0 0.0
        %1537 = vmatpush1.msra.mxu0 0.0
        %1538 = vmatprep.subr.mxu0 0.0
        %1539 = vmatpush1.msra.mxu0 0.0
        %1540 = vmatprep.subr.mxu0 0.0
        %1541 = vmatpush1.msra.mxu0 0.0
        %1542 = vmatprep.subr.mxu0 0.0
        %1543 = vmatpush1.msra.mxu0 0.0
        %1544 = vmatprep.subr.mxu0 0.0
        %1545 = vmatpush1.msra.mxu0 0.0
        %1546 = vmatprep.subr.mxu0 0.0
        %1547 = vmatpush1.msra.mxu0 0.0
        %1548 = vmatprep.subr.mxu0 0.0
        %1549 = vmatpush1.msra.mxu0 0.0
        %1550 = vmatprep.subr.mxu0 0.0
        %1551 = vmatpush1.msra.mxu0 0.0
        %1552 = vmatprep.subr.mxu0 0.0
        %1553 = vmatpush1.msra.mxu0 0.0
        %1554 = vmatprep.subr.mxu0 0.0
        %1555 = vmatpush1.msra.mxu0 0.0
        %1556 = vmatprep.subr.mxu0 0.0
        %1557 = vmatpush1.msra.mxu0 0.0
        %1558 = vmatprep.subr.mxu0 0.0
        %1559 = vmatpush1.msra.mxu0 0.0
        %1560 = vmatprep.subr.mxu0 0.0
        %1561 = vmatpush1.msra.mxu0 0.0
        %1562 = vmatprep.subr.mxu0 0.0
        %1563 = vmatpush1.msra.mxu0 0.0
        %1564 = vmatprep.subr.mxu0 0.0
        %1565 = vmatpush1.msra.mxu0 0.0
        %1566 = vmatprep.subr.mxu0 0.0
        %1567 = vmatpush1.msra.mxu0 0.0
        %1568 = vmatprep.subr.mxu0 0.0
        %1569 = vmatpush1.msra.mxu0 0.0
        %1570 = vmatprep.subr.mxu0 0.0
        %1571 = vmatpush1.msra.mxu0 0.0
        %1572 = vmatprep.subr.mxu0 0.0
        %1573 = vmatpush1.msra.mxu0 0.0
        %1574 = vmatprep.subr.mxu0 0.0
        %1575 = vmatpush1.msra.mxu0 0.0
        %1576 = vmatprep.subr.mxu0 0.0
        %1577 = vmatpush1.msra.mxu0 0.0
        %1578 = vmatprep.subr.mxu0 0.0
        %1579 = vmatpush1.msra.mxu0 0.0
        %1580 = vmatprep.subr.mxu0 0.0
        %1581 = vmatpush1.msra.mxu0 0.0
        %1582 = vmatprep.subr.mxu0 0.0
        %1583 = vmatpush1.msra.mxu0 0.0
        %1584 = vmatprep.subr.mxu0 0.0
        %1585 = vmatpush1.msra.mxu0 0.0
        %1586 = vmatprep.mubr.f32.mxu0 0.0
        %1587 = vmatmul.mubr.f32.gmra.mrb[0].mxu0 %v1514
        %v1588 = vpop.f32.mrb[0].mxu0
        %v1589 = vadd.f32 %v1512, %v1588
        %v1590 = vpop.f32.mrb[0].mxu0
        %1591 = vmatprep.mubr.f32.mxu0 0.0
        %1592 = vmatmul.mubr.f32.gmra.mrb[0].mxu0 %v1517
        %v1593 = vpop.f32.mrb[0].mxu0
        %v1594 = vadd.f32 %v1512, %v1593
        %v1595 = vpop.f32.mrb[0].mxu0
        %1596 = vdwg.mxu0
        %v1597 = vmax.f32 %v1589, 0.0
        %v1598 = vmax.f32 %v1594, 0.0
        %v1599 = vadd.f32 %v1277, %v1597
        %v1600 = vadd.f32 %v1278, %v1598
        %v1601 = vld [vmem:[#allocation5 + $0xf0] sm:$0xff]
        %v1602 = vld [vmem:[#allocation5 + $0x100] sm:$0xff]
        %v1603 = vld [vmem:[#allocation5 + $0x110] sm:$0xff]
        %v1604 = vld [vmem:[#allocation5 + $0x120] ss:$0 sm:$0xff]
        %vm1605 = vcmask 195584
        %v1607 = vsel %vm1605, %v1599, 0
        %v1610 = vsel %vm1605, %v1600, 0
        %1612 = vmatprep.subr.mxu0 0.0
        %1613 = vmatpush1.msra.mxu0 %v1601
        %1614 = vmatprep.subr.mxu0 0.0
        %1615 = vmatpush1.msra.mxu0 %v1602
        %1616 = vmatprep.subr.mxu0 0.0
        %1617 = vmatpush1.msra.mxu0 %v1603
        %1618 = vmatprep.subr.mxu0 0.0
        %1619 = vmatpush1.msra.mxu0 0.0
        %1620 = vmatprep.subr.mxu0 0.0
        %1621 = vmatpush1.msra.mxu0 0.0
        %1622 = vmatprep.subr.mxu0 0.0
        %1623 = vmatpush1.msra.mxu0 0.0
        %1624 = vmatprep.subr.mxu0 0.0
        %1625 = vmatpush1.msra.mxu0 0.0
        %1626 = vmatprep.subr.mxu0 0.0
        %1627 = vmatpush1.msra.mxu0 0.0
        %1628 = vmatprep.subr.mxu0 0.0
        %1629 = vmatpush1.msra.mxu0 0.0
        %1630 = vmatprep.subr.mxu0 0.0
        %1631 = vmatpush1.msra.mxu0 0.0
        %1632 = vmatprep.subr.mxu0 0.0
        %1633 = vmatpush1.msra.mxu0 0.0
        %1634 = vmatprep.subr.mxu0 0.0
        %1635 = vmatpush1.msra.mxu0 0.0
        %1636 = vmatprep.subr.mxu0 0.0
        %1637 = vmatpush1.msra.mxu0 0.0
        %1638 = vmatprep.subr.mxu0 0.0
        %1639 = vmatpush1.msra.mxu0 0.0
        %1640 = vmatprep.subr.mxu0 0.0
        %1641 = vmatpush1.msra.mxu0 0.0
        %1642 = vmatprep.subr.mxu0 0.0
        %1643 = vmatpush1.msra.mxu0 0.0
        %1644 = vmatprep.subr.mxu0 0.0
        %1645 = vmatpush1.msra.mxu0 0.0
        %1646 = vmatprep.subr.mxu0 0.0
        %1647 = vmatpush1.msra.mxu0 0.0
        %1648 = vmatprep.subr.mxu0 0.0
        %1649 = vmatpush1.msra.mxu0 0.0
        %1650 = vmatprep.subr.mxu0 0.0
        %1651 = vmatpush1.msra.mxu0 0.0
        %1652 = vmatprep.subr.mxu0 0.0
        %1653 = vmatpush1.msra.mxu0 0.0
        %1654 = vmatprep.subr.mxu0 0.0
        %1655 = vmatpush1.msra.mxu0 0.0
        %1656 = vmatprep.subr.mxu0 0.0
        %1657 = vmatpush1.msra.mxu0 0.0
        %1658 = vmatprep.subr.mxu0 0.0
        %1659 = vmatpush1.msra.mxu0 0.0
        %1660 = vmatprep.subr.mxu0 0.0
        %1661 = vmatpush1.msra.mxu0 0.0
        %1662 = vmatprep.subr.mxu0 0.0
        %1663 = vmatpush1.msra.mxu0 0.0
        %1664 = vmatprep.subr.mxu0 0.0
        %1665 = vmatpush1.msra.mxu0 0.0
        %1666 = vmatprep.subr.mxu0 0.0
        %1667 = vmatpush1.msra.mxu0 0.0
        %1668 = vmatprep.subr.mxu0 0.0
        %1669 = vmatpush1.msra.mxu0 0.0
        %1670 = vmatprep.subr.mxu0 0.0
        %1671 = vmatpush1.msra.mxu0 0.0
        %1672 = vmatprep.subr.mxu0 0.0
        %1673 = vmatpush1.msra.mxu0 0.0
        %1674 = vmatprep.subr.mxu0 0.0
        %1675 = vmatpush1.msra.mxu0 0.0
        %1676 = vmatprep.mubr.f32.mxu0 0.0
        %1677 = vmatmul.mubr.f32.gmra.mrb[0].mxu0 %v1607
        %v1678 = vpop.f32.mrb[0].mxu0
        %v1679 = vadd.f32 %v1604, %v1678
        %v1680 = vpop.f32.mrb[0].mxu0
        %1681 = vmatprep.mubr.f32.mxu0 0.0
        %1682 = vmatmul.mubr.f32.gmra.mrb[0].mxu0 %v1610
        %v1683 = vpop.f32.mrb[0].mxu0
        %v1684 = vadd.f32 %v1604, %v1683
        %v1685 = vpop.f32.mrb[0].mxu0
        %1686 = vdwg.mxu0
        %v1687 = vmax.f32 %v1679, 0.0
        %v1688 = vmax.f32 %v1684, 0.0
        %v1689 = vld [vmem:[#allocation5 + $0x130] sm:$0xf]
        %v1690 = vld [vmem:[#allocation2 + $0x150] sm:$0xff]
        %v1691 = vld [vmem:[#allocation2 + $0x158] sm:$0xff]
        %v1692 = vld [vmem:[#allocation2 + $0x160] sm:$0xff]
        %v1693 = vld [vmem:[#allocation2 + $0x168] sm:$0xff]
        %vm1694 = vcmask 130048
        %v1696 = vsel %vm1694, %v1690, 0
        %v1699 = vsel %vm1694, %v1691, 0
        %v1702 = vsel %vm1694, %v1692, 0
        %v1705 = vsel %vm1694, %v1693, 0
        %1707 = vmatprep.subr.mxu0 0.0
        %1708 = vmatpush1.msra.mxu0 %v1687
        %1709 = vmatprep.subr.mxu0 0.0
        %1710 = vmatpush1.msra.mxu0 %v1688
        %1711 = vmatprep.subr.mxu0 0.0
        %1712 = vmatpush1.msra.mxu0 0.0
        %1713 = vmatprep.subr.mxu0 0.0
        %1714 = vmatpush1.msra.mxu0 0.0
        %1715 = vmatprep.subr.mxu0 0.0
        %1716 = vmatpush1.msra.mxu0 0.0
        %1717 = vmatprep.subr.mxu0 0.0
        %1718 = vmatpush1.msra.mxu0 0.0
        %1719 = vmatprep.subr.mxu0 0.0
        %1720 = vmatpush1.msra.mxu0 0.0
        %1721 = vmatprep.subr.mxu0 0.0
        %1722 = vmatpush1.msra.mxu0 0.0
        %1723 = vmatprep.subr.mxu0 0.0
        %1724 = vmatpush1.msra.mxu0 0.0
        %1725 = vmatprep.subr.mxu0 0.0
        %1726 = vmatpush1.msra.mxu0 0.0
        %1727 = vmatprep.subr.mxu0 0.0
        %1728 = vmatpush1.msra.mxu0 0.0
        %1729 = vmatprep.subr.mxu0 0.0
        %1730 = vmatpush1.msra.mxu0 0.0
        %1731 = vmatprep.subr.mxu0 0.0
        %1732 = vmatpush1.msra.mxu0 0.0
        %1733 = vmatprep.subr.mxu0 0.0
        %1734 = vmatpush1.msra.mxu0 0.0
        %1735 = vmatprep.subr.mxu0 0.0
        %1736 = vmatpush1.msra.mxu0 0.0
        %1737 = vmatprep.subr.mxu0 0.0
        %1738 = vmatpush1.msra.mxu0 0.0
        %1739 = vmatprep.subr.mxu0 0.0
        %1740 = vmatpush1.msra.mxu0 0.0
        %1741 = vmatprep.subr.mxu0 0.0
        %1742 = vmatpush1.msra.mxu0 0.0
        %1743 = vmatprep.subr.mxu0 0.0
        %1744 = vmatpush1.msra.mxu0 0.0
        %1745 = vmatprep.subr.mxu0 0.0
        %1746 = vmatpush1.msra.mxu0 0.0
        %1747 = vmatprep.subr.mxu0 0.0
        %1748 = vmatpush1.msra.mxu0 0.0
        %1749 = vmatprep.subr.mxu0 0.0
        %1750 = vmatpush1.msra.mxu0 0.0
        %1751 = vmatprep.subr.mxu0 0.0
        %1752 = vmatpush1.msra.mxu0 0.0
        %1753 = vmatprep.subr.mxu0 0.0
        %1754 = vmatpush1.msra.mxu0 0.0
        %1755 = vmatprep.subr.mxu0 0.0
        %1756 = vmatpush1.msra.mxu0 0.0
        %1757 = vmatprep.subr.mxu0 0.0
        %1758 = vmatpush1.msra.mxu0 0.0
        %1759 = vmatprep.subr.mxu0 0.0
        %1760 = vmatpush1.msra.mxu0 0.0
        %1761 = vmatprep.subr.mxu0 0.0
        %1762 = vmatpush1.msra.mxu0 0.0
        %1763 = vmatprep.subr.mxu0 0.0
        %1764 = vmatpush1.msra.mxu0 0.0
        %1765 = vmatprep.subr.mxu0 0.0
        %1766 = vmatpush1.msra.mxu0 0.0
        %1767 = vmatprep.subr.mxu0 0.0
        %1768 = vmatpush1.msra.mxu0 0.0
        %1769 = vmatprep.subr.mxu0 0.0
        %1770 = vmatpush1.msra.mxu0 0.0
        %1771 = vmatprep.mubr.f32.mxu0 0.0
        %1772 = vmatmul.mubr.f32.gmra.mrb[0].mxu0 %v1696
        %v1773 = vpop.f32.mrb[0].mxu0
        %v1774 = vadd.f32 0.0, %v1773
        %v1775 = vpop.f32.mrb[0].mxu0
        %1776 = vmatprep.mubr.f32.mxu0 0.0
        %1777 = vmatmul.mubr.f32.gmra.mrb[0].mxu0 %v1699
        %v1778 = vpop.f32.mrb[0].mxu0
        %v1779 = vadd.f32 0.0, %v1778
        %v1780 = vpop.f32.mrb[0].mxu0
        %1781 = vmatprep.mubr.f32.mxu0 0.0
        %1782 = vmatmul.mubr.f32.gmra.mrb[0].mxu0 %v1702
        %v1783 = vpop.f32.mrb[0].mxu0
        %v1784 = vadd.f32 0.0, %v1783
        %v1785 = vpop.f32.mrb[0].mxu0
        %1786 = vmatprep.mubr.f32.mxu0 0.0
        %1787 = vmatmul.mubr.f32.gmra.mrb[0].mxu0 %v1705
        %v1788 = vpop.f32.mrb[0].mxu0
        %v1789 = vadd.f32 0.0, %v1788
        %v1790 = vpop.f32.mrb[0].mxu0
        %1791 = vdwg.mxu0
        %v1792 = vlaneseq
        %v1793 = vshrl.u32 %v1792, 7
        %v1794 = vsub.s32 0, %v1793
        %v1795 = vrot.slane %v1689, %v1794
        %v1796 = vmul.f32 %v1774, %v1795
        %v1797 = vmul.f32 %v1779, %v1795
        %v1798 = vlaneseq
        %v1799 = vshrl.u32 %v1798, 7
        %v1800 = vsub.s32 1, %v1799
        %v1801 = vrot.slane %v1689, %v1800
        %v1802 = vmul.f32 %v1687, %v1801
        %v1803 = vmul.f32 %v1688, %v1801
        %v1804 = vadd.f32 %v1796, %v1802
        %v1805 = vadd.f32 %v1797, %v1803
        %v1806 = vlaneseq
        %v1807 = vshrl.u32 %v1806, 7
        %v1808 = vsub.s32 2, %v1807
        %v1809 = vrot.slane %v1689, %v1808
        %v1810 = vmul.f32 %v1784, %v1809
        %v1811 = vmul.f32 %v1789, %v1809
        %v1812 = vadd.f32 %v1804, %v1810
        %v1813 = vadd.f32 %v1805, %v1811
        %v1814 = vlaneseq
        %v1815 = vshrl.u32 %v1814, 7
        %v1816 = vsub.s32 3, %v1815
        %v1817 = vrot.slane %v1689, %v1816
        %v1818 = vadd.f32 %v1812, %v1817
        %v1819 = vadd.f32 %v1813, %v1817
        %v1820 = vld [vmem:[#allocation5 + $0x140] sm:$0xff]
        %v1821 = vld [vmem:[#allocation5 + $0x150] sm:$0xf]
        %v1822 = vld [vmem:[#allocation5 + $0x160] ss:$0 sm:$0xff]
        %v1824 = vsel %vm1191, %v1818, 0
        %v1827 = vsel %vm1191, %v1819, 0
        %v1830 = vsel %vm1198, %v1821, 0
        %1832 = vmatprep.subr.mxu0 0.0
        %1833 = vmatpush1.msra.mxu0 %v1820
        %1834 = vmatprep.subr.mxu0 0.0
        %1835 = vmatpush1.msra.mxu0 %v1830
        %1836 = vmatprep.subr.mxu0 0.0
        %1837 = vmatpush1.msra.mxu0 0.0
        %1838 = vmatprep.subr.mxu0 0.0
        %1839 = vmatpush1.msra.mxu0 0.0
        %1840 = vmatprep.subr.mxu0 0.0
        %1841 = vmatpush1.msra.mxu0 0.0
        %1842 = vmatprep.subr.mxu0 0.0
        %1843 = vmatpush1.msra.mxu0 0.0
        %1844 = vmatprep.subr.mxu0 0.0
        %1845 = vmatpush1.msra.mxu0 0.0
        %1846 = vmatprep.subr.mxu0 0.0
        %1847 = vmatpush1.msra.mxu0 0.0
        %1848 = vmatprep.subr.mxu0 0.0
        %1849 = vmatpush1.msra.mxu0 0.0
        %1850 = vmatprep.subr.mxu0 0.0
        %1851 = vmatpush1.msra.mxu0 0.0
        %1852 = vmatprep.subr.mxu0 0.0
        %1853 = vmatpush1.msra.mxu0 0.0
        %1854 = vmatprep.subr.mxu0 0.0
        %1855 = vmatpush1.msra.mxu0 0.0
        %1856 = vmatprep.subr.mxu0 0.0
        %1857 = vmatpush1.msra.mxu0 0.0
        %1858 = vmatprep.subr.mxu0 0.0
        %1859 = vmatpush1.msra.mxu0 0.0
        %1860 = vmatprep.subr.mxu0 0.0
        %1861 = vmatpush1.msra.mxu0 0.0
        %1862 = vmatprep.subr.mxu0 0.0
        %1863 = vmatpush1.msra.mxu0 0.0
        %1864 = vmatprep.subr.mxu0 0.0
        %1865 = vmatpush1.msra.mxu0 0.0
        %1866 = vmatprep.subr.mxu0 0.0
        %1867 = vmatpush1.msra.mxu0 0.0
        %1868 = vmatprep.subr.mxu0 0.0
        %1869 = vmatpush1.msra.mxu0 0.0
        %1870 = vmatprep.subr.mxu0 0.0
        %1871 = vmatpush1.msra.mxu0 0.0
        %1872 = vmatprep.subr.mxu0 0.0
        %1873 = vmatpush1.msra.mxu0 0.0
        %1874 = vmatprep.subr.mxu0 0.0
        %1875 = vmatpush1.msra.mxu0 0.0
        %1876 = vmatprep.subr.mxu0 0.0
        %1877 = vmatpush1.msra.mxu0 0.0
        %1878 = vmatprep.subr.mxu0 0.0
        %1879 = vmatpush1.msra.mxu0 0.0
        %1880 = vmatprep.subr.mxu0 0.0
        %1881 = vmatpush1.msra.mxu0 0.0
        %1882 = vmatprep.subr.mxu0 0.0
        %1883 = vmatpush1.msra.mxu0 0.0
        %1884 = vmatprep.subr.mxu0 0.0
        %1885 = vmatpush1.msra.mxu0 0.0
        %1886 = vmatprep.subr.mxu0 0.0
        %1887 = vmatpush1.msra.mxu0 0.0
        %1888 = vmatprep.subr.mxu0 0.0
        %1889 = vmatpush1.msra.mxu0 0.0
        %1890 = vmatprep.subr.mxu0 0.0
        %1891 = vmatpush1.msra.mxu0 0.0
        %1892 = vmatprep.subr.mxu0 0.0
        %1893 = vmatpush1.msra.mxu0 0.0
        %1894 = vmatprep.subr.mxu0 0.0
        %1895 = vmatpush1.msra.mxu0 0.0
        %1896 = vmatprep.mubr.f32.mxu0 0.0
        %1897 = vmatmul.mubr.f32.gmra.mrb[0].mxu0 %v1824
        %v1898 = vpop.f32.mrb[0].mxu0
        %v1899 = vadd.f32 %v1822, %v1898
        %v1900 = vpop.f32.mrb[0].mxu0
        %1901 = vmatprep.mubr.f32.mxu0 0.0
        %1902 = vmatmul.mubr.f32.gmra.mrb[0].mxu0 %v1827
        %v1903 = vpop.f32.mrb[0].mxu0
        %v1904 = vadd.f32 %v1822, %v1903
        %v1905 = vpop.f32.mrb[0].mxu0
        %1906 = vdwg.mxu0
        %v1907 = vmax.f32 %v1899, 0.0
        %v1908 = vmax.f32 %v1904, 0.0
        %v1909 = vld [vmem:[#allocation5 + $0x170] ss:$0 sm:$0xff]
        %v1910 = vmul.f32 %v1599, %v1909
        %v1911 = vmul.f32 %v1600, %v1909
        %v1912 = vadd.f32 %v1910, %v1907
        %v1913 = vadd.f32 %v1911, %v1908
        %v1914 = vld [vmem:[#allocation5 + $0x180] sm:$0xf]
        %v1915 = vld [vmem:[#allocation2 + $0x170] sm:$0xff]
        %v1916 = vld [vmem:[#allocation2 + $0x178] sm:$0xff]
        %v1917 = vld [vmem:[#allocation2 + $0x180] sm:$0xff]
        %v1919 = vsel %vm1694, %v1915, 0
        %v1922 = vsel %vm1694, %v1916, 0
        %v1925 = vsel %vm1694, %v1917, 0
        %1927 = vmatprep.subr.mxu0 0.0
        %1928 = vmatpush1.msra.mxu0 %v1912
        %1929 = vmatprep.subr.mxu0 0.0
        %1930 = vmatpush1.msra.mxu0 %v1913
        %1931 = vmatprep.subr.mxu0 0.0
        %1932 = vmatpush1.msra.mxu0 0.0
        %1933 = vmatprep.subr.mxu0 0.0
        %1934 = vmatpush1.msra.mxu0 0.0
        %1935 = vmatprep.subr.mxu0 0.0
        %1936 = vmatpush1.msra.mxu0 0.0
        %1937 = vmatprep.subr.mxu0 0.0
        %1938 = vmatpush1.msra.mxu0 0.0
        %1939 = vmatprep.subr.mxu0 0.0
        %1940 = vmatpush1.msra.mxu0 0.0
        %1941 = vmatprep.subr.mxu0 0.0
        %1942 = vmatpush1.msra.mxu0 0.0
        %1943 = vmatprep.subr.mxu0 0.0
        %1944 = vmatpush1.msra.mxu0 0.0
        %1945 = vmatprep.subr.mxu0 0.0
        %1946 = vmatpush1.msra.mxu0 0.0
        %1947 = vmatprep.subr.mxu0 0.0
        %1948 = vmatpush1.msra.mxu0 0.0
        %1949 = vmatprep.subr.mxu0 0.0
        %1950 = vmatpush1.msra.mxu0 0.0
        %1951 = vmatprep.subr.mxu0 0.0
        %1952 = vmatpush1.msra.mxu0 0.0
        %1953 = vmatprep.subr.mxu0 0.0
        %1954 = vmatpush1.msra.mxu0 0.0
        %1955 = vmatprep.subr.mxu0 0.0
        %1956 = vmatpush1.msra.mxu0 0.0
        %1957 = vmatprep.subr.mxu0 0.0
        %1958 = vmatpush1.msra.mxu0 0.0
        %1959 = vmatprep.subr.mxu0 0.0
        %1960 = vmatpush1.msra.mxu0 0.0
        %1961 = vmatprep.subr.mxu0 0.0
        %1962 = vmatpush1.msra.mxu0 0.0
        %1963 = vmatprep.subr.mxu0 0.0
        %1964 = vmatpush1.msra.mxu0 0.0
        %1965 = vmatprep.subr.mxu0 0.0
        %1966 = vmatpush1.msra.mxu0 0.0
        %1967 = vmatprep.subr.mxu0 0.0
        %1968 = vmatpush1.msra.mxu0 0.0
        %1969 = vmatprep.subr.mxu0 0.0
        %1970 = vmatpush1.msra.mxu0 0.0
        %1971 = vmatprep.subr.mxu0 0.0
        %1972 = vmatpush1.msra.mxu0 0.0
        %1973 = vmatprep.subr.mxu0 0.0
        %1974 = vmatpush1.msra.mxu0 0.0
        %1975 = vmatprep.subr.mxu0 0.0
        %1976 = vmatpush1.msra.mxu0 0.0
        %1977 = vmatprep.subr.mxu0 0.0
        %1978 = vmatpush1.msra.mxu0 0.0
        %1979 = vmatprep.subr.mxu0 0.0
        %1980 = vmatpush1.msra.mxu0 0.0
        %1981 = vmatprep.subr.mxu0 0.0
        %1982 = vmatpush1.msra.mxu0 0.0
        %1983 = vmatprep.subr.mxu0 0.0
        %1984 = vmatpush1.msra.mxu0 0.0
        %1985 = vmatprep.subr.mxu0 0.0
        %1986 = vmatpush1.msra.mxu0 0.0
        %1987 = vmatprep.subr.mxu0 0.0
        %1988 = vmatpush1.msra.mxu0 0.0
        %1989 = vmatprep.subr.mxu0 0.0
        %1990 = vmatpush1.msra.mxu0 0.0
        %1991 = vmatprep.mubr.f32.mxu0 0.0
        %1992 = vmatmul.mubr.f32.gmra.mrb[0].mxu0 %v1919
        %v1993 = vpop.f32.mrb[0].mxu0
        %v1994 = vadd.f32 0.0, %v1993
        %v1995 = vpop.f32.mrb[0].mxu0
        %1996 = vmatprep.mubr.f32.mxu0 0.0
        %1997 = vmatmul.mubr.f32.gmra.mrb[0].mxu0 %v1922
        %v1998 = vpop.f32.mrb[0].mxu0
        %v1999 = vadd.f32 0.0, %v1998
        %v2000 = vpop.f32.mrb[0].mxu0
        %2001 = vmatprep.mubr.f32.mxu0 0.0
        %2002 = vmatmul.mubr.f32.gmra.mrb[0].mxu0 %v1925
        %v2003 = vpop.f32.mrb[0].mxu0
        %v2004 = vadd.f32 0.0, %v2003
        %v2005 = vpop.f32.mrb[0].mxu0
        %2006 = vdwg.mxu0
        %v2007 = vlaneseq
        %v2008 = vshrl.u32 %v2007, 7
        %v2009 = vsub.s32 0, %v2008
        %v2010 = vrot.slane %v1914, %v2009
        %v2011 = vmul.f32 %v1994, %v2010
        %v2012 = vlaneseq
        %v2013 = vshrl.u32 %v2012, 7
        %v2014 = vsub.s32 1, %v2013
        %v2015 = vrot.slane %v1914, %v2014
        %v2016 = vmul.f32 %v1999, %v2015
        %v2017 = vadd.f32 %v2011, %v2016
        %v2018 = vlaneseq
        %v2019 = vshrl.u32 %v2018, 7
        %v2020 = vsub.s32 2, %v2019
        %v2021 = vrot.slane %v1914, %v2020
        %v2022 = vmul.f32 %v2004, %v2021
        %v2023 = vadd.f32 %v2017, %v2022
        %v2024 = vlaneseq
        %v2025 = vshrl.u32 %v2024, 7
        %v2026 = vsub.s32 3, %v2025
        %v2027 = vrot.slane %v1914, %v2026
        %v2028 = vadd.f32 %v2023, %v2027
        %v2029 = vld [vmem:[#allocation5 + $0x190] sm:$0xff]
        %v2030 = vld [vmem:[#allocation5 + $0x1a0] sm:$0xff]
        %v2031 = vld [vmem:[#allocation5 + $0x1b0] sm:$0xff]
        %v2032 = vld [vmem:[#allocation5 + $0x1c0] ss:$0 sm:$0xff]
        %v2034 = vsel %vm1605, %v2028, 0
        %2036 = vmatprep.subr.mxu0 0.0
        %2037 = vmatpush1.msra.mxu0 %v2029
        %2038 = vmatprep.subr.mxu0 0.0
        %2039 = vmatpush1.msra.mxu0 %v2030
        %2040 = vmatprep.subr.mxu0 0.0
        %2041 = vmatpush1.msra.mxu0 %v2031
        %2042 = vmatprep.subr.mxu0 0.0
        %2043 = vmatpush1.msra.mxu0 0.0
        %2044 = vmatprep.subr.mxu0 0.0
        %2045 = vmatpush1.msra.mxu0 0.0
        %2046 = vmatprep.subr.mxu0 0.0
        %2047 = vmatpush1.msra.mxu0 0.0
        %2048 = vmatprep.subr.mxu0 0.0
        %2049 = vmatpush1.msra.mxu0 0.0
        %2050 = vmatprep.subr.mxu0 0.0
        %2051 = vmatpush1.msra.mxu0 0.0
        %2052 = vmatprep.subr.mxu0 0.0
        %2053 = vmatpush1.msra.mxu0 0.0
        %2054 = vmatprep.subr.mxu0 0.0
        %2055 = vmatpush1.msra.mxu0 0.0
        %2056 = vmatprep.subr.mxu0 0.0
        %2057 = vmatpush1.msra.mxu0 0.0
        %2058 = vmatprep.subr.mxu0 0.0
        %2059 = vmatpush1.msra.mxu0 0.0
        %2060 = vmatprep.subr.mxu0 0.0
        %2061 = vmatpush1.msra.mxu0 0.0
        %2062 = vmatprep.subr.mxu0 0.0
        %2063 = vmatpush1.msra.mxu0 0.0
        %2064 = vmatprep.subr.mxu0 0.0
        %2065 = vmatpush1.msra.mxu0 0.0
        %2066 = vmatprep.subr.mxu0 0.0
        %2067 = vmatpush1.msra.mxu0 0.0
        %2068 = vmatprep.subr.mxu0 0.0
        %2069 = vmatpush1.msra.mxu0 0.0
        %2070 = vmatprep.subr.mxu0 0.0
        %2071 = vmatpush1.msra.mxu0 0.0
        %2072 = vmatprep.subr.mxu0 0.0
        %2073 = vmatpush1.msra.mxu0 0.0
        %2074 = vmatprep.subr.mxu0 0.0
        %2075 = vmatpush1.msra.mxu0 0.0
        %2076 = vmatprep.subr.mxu0 0.0
        %2077 = vmatpush1.msra.mxu0 0.0
        %2078 = vmatprep.subr.mxu0 0.0
        %2079 = vmatpush1.msra.mxu0 0.0
        %2080 = vmatprep.subr.mxu0 0.0
        %2081 = vmatpush1.msra.mxu0 0.0
        %2082 = vmatprep.subr.mxu0 0.0
        %2083 = vmatpush1.msra.mxu0 0.0
        %2084 = vmatprep.subr.mxu0 0.0
        %2085 = vmatpush1.msra.mxu0 0.0
        %2086 = vmatprep.subr.mxu0 0.0
        %2087 = vmatpush1.msra.mxu0 0.0
        %2088 = vmatprep.subr.mxu0 0.0
        %2089 = vmatpush1.msra.mxu0 0.0
        %2090 = vmatprep.subr.mxu0 0.0
        %2091 = vmatpush1.msra.mxu0 0.0
        %2092 = vmatprep.subr.mxu0 0.0
        %2093 = vmatpush1.msra.mxu0 0.0
        %2094 = vmatprep.subr.mxu0 0.0
        %2095 = vmatpush1.msra.mxu0 0.0
        %2096 = vmatprep.subr.mxu0 0.0
        %2097 = vmatpush1.msra.mxu0 0.0
        %2098 = vmatprep.subr.mxu0 0.0
        %2099 = vmatpush1.msra.mxu0 0.0
        %2100 = vmatprep.mubr.f32.mxu0 0.0
        %2101 = vmatmul.mubr.f32.gmra.mrb[0].mxu0 %v2034
        %v2102 = vpop.f32.mrb[0].mxu0
        %v2103 = vadd.f32 %v2032, %v2102
        %v2104 = vpop.f32.mrb[0].mxu0
        %2105 = vdwg.mxu0
        %v2106 = vmax.f32 %v2103, 0.0
        %v2107 = vld [vmem:[#allocation5 + $0x1d0] sm:$0xff]
        %v2108 = vld [vmem:[#allocation5 + $0x1e0] sm:$0xff]
        %v2109 = vld [vmem:[#allocation5 + $0x1f0] sm:$0xff]
        %v2110 = vld [vmem:[#allocation5 + $0x200] ss:$0 sm:$0xff]
        %v2112 = vsel %vm1605, %v1912, 0
        %v2115 = vsel %vm1605, %v1913, 0
        %2117 = vmatprep.subr.mxu0 0.0
        %2118 = vmatpush1.msra.mxu0 %v2107
        %2119 = vmatprep.subr.mxu0 0.0
        %2120 = vmatpush1.msra.mxu0 %v2108
        %2121 = vmatprep.subr.mxu0 0.0
        %2122 = vmatpush1.msra.mxu0 %v2109
        %2123 = vmatprep.subr.mxu0 0.0
        %2124 = vmatpush1.msra.mxu0 0.0
        %2125 = vmatprep.subr.mxu0 0.0
        %2126 = vmatpush1.msra.mxu0 0.0
        %2127 = vmatprep.subr.mxu0 0.0
        %2128 = vmatpush1.msra.mxu0 0.0
        %2129 = vmatprep.subr.mxu0 0.0
        %2130 = vmatpush1.msra.mxu0 0.0
        %2131 = vmatprep.subr.mxu0 0.0
        %2132 = vmatpush1.msra.mxu0 0.0
        %2133 = vmatprep.subr.mxu0 0.0
        %2134 = vmatpush1.msra.mxu0 0.0
        %2135 = vmatprep.subr.mxu0 0.0
        %2136 = vmatpush1.msra.mxu0 0.0
        %2137 = vmatprep.subr.mxu0 0.0
        %2138 = vmatpush1.msra.mxu0 0.0
        %2139 = vmatprep.subr.mxu0 0.0
        %2140 = vmatpush1.msra.mxu0 0.0
        %2141 = vmatprep.subr.mxu0 0.0
        %2142 = vmatpush1.msra.mxu0 0.0
        %2143 = vmatprep.subr.mxu0 0.0
        %2144 = vmatpush1.msra.mxu0 0.0
        %2145 = vmatprep.subr.mxu0 0.0
        %2146 = vmatpush1.msra.mxu0 0.0
        %2147 = vmatprep.subr.mxu0 0.0
        %2148 = vmatpush1.msra.mxu0 0.0
        %2149 = vmatprep.subr.mxu0 0.0
        %2150 = vmatpush1.msra.mxu0 0.0
        %2151 = vmatprep.subr.mxu0 0.0
        %2152 = vmatpush1.msra.mxu0 0.0
        %2153 = vmatprep.subr.mxu0 0.0
        %2154 = vmatpush1.msra.mxu0 0.0
        %2155 = vmatprep.subr.mxu0 0.0
        %2156 = vmatpush1.msra.mxu0 0.0
        %2157 = vmatprep.subr.mxu0 0.0
        %2158 = vmatpush1.msra.mxu0 0.0
        %2159 = vmatprep.subr.mxu0 0.0
        %2160 = vmatpush1.msra.mxu0 0.0
        %2161 = vmatprep.subr.mxu0 0.0
        %2162 = vmatpush1.msra.mxu0 0.0
        %2163 = vmatprep.subr.mxu0 0.0
        %2164 = vmatpush1.msra.mxu0 0.0
        %2165 = vmatprep.subr.mxu0 0.0
        %2166 = vmatpush1.msra.mxu0 0.0
        %2167 = vmatprep.subr.mxu0 0.0
        %2168 = vmatpush1.msra.mxu0 0.0
        %2169 = vmatprep.subr.mxu0 0.0
        %2170 = vmatpush1.msra.mxu0 0.0
        %2171 = vmatprep.subr.mxu0 0.0
        %2172 = vmatpush1.msra.mxu0 0.0
        %2173 = vmatprep.subr.mxu0 0.0
        %2174 = vmatpush1.msra.mxu0 0.0
        %2175 = vmatprep.subr.mxu0 0.0
        %2176 = vmatpush1.msra.mxu0 0.0
        %2177 = vmatprep.subr.mxu0 0.0
        %2178 = vmatpush1.msra.mxu0 0.0
        %2179 = vmatprep.subr.mxu0 0.0
        %2180 = vmatpush1.msra.mxu0 0.0
        %2181 = vmatprep.mubr.f32.mxu0 0.0
        %2182 = vmatmul.mubr.f32.gmra.mrb[0].mxu0 %v2112
        %v2183 = vpop.f32.mrb[0].mxu0
        %v2184 = vadd.f32 %v2110, %v2183
        %v2185 = vpop.f32.mrb[0].mxu0
        %2186 = vmatprep.mubr.f32.mxu0 0.0
        %2187 = vmatmul.mubr.f32.gmra.mrb[0].mxu0 %v2115
        %v2188 = vpop.f32.mrb[0].mxu0
        %v2189 = vadd.f32 %v2110, %v2188
        %v2190 = vpop.f32.mrb[0].mxu0
        %2191 = vdwg.mxu0
        %v2192 = vmax.f32 %v2184, 0.0
        %v2193 = vmax.f32 %v2189, 0.0
        %v2194 = vld [vmem:[#allocation5 + $0x210] sm:$0xf]
        %2195 = vmatprep.subr.mxu0 0.0
        %2196 = vmatpush1.msra.mxu0 %v2192
        %2197 = vmatprep.subr.mxu0 0.0
        %2198 = vmatpush1.msra.mxu0 %v2193
        %2199 = vmatprep.subr.mxu0 0.0
        %2200 = vmatpush1.msra.mxu0 0.0
        %2201 = vmatprep.subr.mxu0 0.0
        %2202 = vmatpush1.msra.mxu0 0.0
        %2203 = vmatprep.subr.mxu0 0.0
        %2204 = vmatpush1.msra.mxu0 0.0
        %2205 = vmatprep.subr.mxu0 0.0
        %2206 = vmatpush1.msra.mxu0 0.0
        %2207 = vmatprep.subr.mxu0 0.0
        %2208 = vmatpush1.msra.mxu0 0.0
        %2209 = vmatprep.subr.mxu0 0.0
        %2210 = vmatpush1.msra.mxu0 0.0
        %2211 = vmatprep.subr.mxu0 0.0
        %2212 = vmatpush1.msra.mxu0 0.0
        %2213 = vmatprep.subr.mxu0 0.0
        %2214 = vmatpush1.msra.mxu0 0.0
        %2215 = vmatprep.subr.mxu0 0.0
        %2216 = vmatpush1.msra.mxu0 0.0
        %2217 = vmatprep.subr.mxu0 0.0
        %2218 = vmatpush1.msra.mxu0 0.0
        %2219 = vmatprep.subr.mxu0 0.0
        %2220 = vmatpush1.msra.mxu0 0.0
        %2221 = vmatprep.subr.mxu0 0.0
        %2222 = vmatpush1.msra.mxu0 0.0
        %2223 = vmatprep.subr.mxu0 0.0
        %2224 = vmatpush1.msra.mxu0 0.0
        %2225 = vmatprep.subr.mxu0 0.0
        %2226 = vmatpush1.msra.mxu0 0.0
        %2227 = vmatprep.subr.mxu0 0.0
        %2228 = vmatpush1.msra.mxu0 0.0
        %2229 = vmatprep.subr.mxu0 0.0
        %2230 = vmatpush1.msra.mxu0 0.0
        %2231 = vmatprep.subr.mxu0 0.0
        %2232 = vmatpush1.msra.mxu0 0.0
        %2233 = vmatprep.subr.mxu0 0.0
        %2234 = vmatpush1.msra.mxu0 0.0
        %2235 = vmatprep.subr.mxu0 0.0
        %2236 = vmatpush1.msra.mxu0 0.0
        %2237 = vmatprep.subr.mxu0 0.0
        %2238 = vmatpush1.msra.mxu0 0.0
        %2239 = vmatprep.subr.mxu0 0.0
        %2240 = vmatpush1.msra.mxu0 0.0
        %2241 = vmatprep.subr.mxu0 0.0
        %2242 = vmatpush1.msra.mxu0 0.0
        %2243 = vmatprep.subr.mxu0 0.0
        %2244 = vmatpush1.msra.mxu0 0.0
        %2245 = vmatprep.subr.mxu0 0.0
        %2246 = vmatpush1.msra.mxu0 0.0
        %2247 = vmatprep.subr.mxu0 0.0
        %2248 = vmatpush1.msra.mxu0 0.0
        %2249 = vmatprep.subr.mxu0 0.0
        %2250 = vmatpush1.msra.mxu0 0.0
        %2251 = vmatprep.subr.mxu0 0.0
        %2252 = vmatpush1.msra.mxu0 0.0
        %2253 = vmatprep.subr.mxu0 0.0
        %2254 = vmatpush1.msra.mxu0 0.0
        %2255 = vmatprep.subr.mxu0 0.0
        %2256 = vmatpush1.msra.mxu0 0.0
        %2257 = vmatprep.subr.mxu0 0.0
        %2258 = vmatpush1.msra.mxu0 0.0
        %2259 = vmatprep.mubr.f32.mxu0 0.0
        %2260 = vmatmul.mubr.f32.gmra.mrb[0].mxu0 %v1919
        %v2261 = vpop.f32.mrb[0].mxu0
        %v2262 = vadd.f32 0.0, %v2261
        %v2263 = vpop.f32.mrb[0].mxu0
        %2264 = vmatprep.mubr.f32.mxu0 0.0
        %2265 = vmatmul.mubr.f32.gmra.mrb[0].mxu0 %v1922
        %v2266 = vpop.f32.mrb[0].mxu0
        %v2267 = vadd.f32 0.0, %v2266
        %v2268 = vpop.f32.mrb[0].mxu0
        %2269 = vmatprep.mubr.f32.mxu0 0.0
        %2270 = vmatmul.mubr.f32.gmra.mrb[0].mxu0 %v1925
        %v2271 = vpop.f32.mrb[0].mxu0
        %v2272 = vadd.f32 0.0, %v2271
        %v2273 = vpop.f32.mrb[0].mxu0
        %2274 = vdwg.mxu0
        %v2275 = vlaneseq
        %v2276 = vshrl.u32 %v2275, 7
        %v2277 = vsub.s32 0, %v2276
        %v2278 = vrot.slane %v2194, %v2277
        %v2279 = vmul.f32 %v2262, %v2278
        %v2280 = vlaneseq
        %v2281 = vshrl.u32 %v2280, 7
        %v2282 = vsub.s32 1, %v2281
        %v2283 = vrot.slane %v2194, %v2282
        %v2284 = vmul.f32 %v2267, %v2283
        %v2285 = vadd.f32 %v2279, %v2284
        %v2286 = vlaneseq
        %v2287 = vshrl.u32 %v2286, 7
        %v2288 = vsub.s32 2, %v2287
        %v2289 = vrot.slane %v2194, %v2288
        %v2290 = vmul.f32 %v2272, %v2289
        %v2291 = vadd.f32 %v2285, %v2290
        %v2292 = vlaneseq
        %v2293 = vshrl.u32 %v2292, 7
        %v2294 = vsub.s32 3, %v2293
        %v2295 = vrot.slane %v2194, %v2294
        %v2296 = vadd.f32 %v2291, %v2295
        %v2297 = vld [vmem:[#allocation5 + $0x220] sm:$0xff]
        %v2298 = vld [vmem:[#allocation5 + $0x230] sm:$0xff]
        %v2299 = vld [vmem:[#allocation5 + $0x240] sm:$0xff]
        %v2300 = vld [vmem:[#allocation5 + $0x250] ss:$0 sm:$0xff]
        %v2302 = vsel %vm1605, %v2296, 0
        %2304 = vmatprep.subr.mxu0 0.0
        %2305 = vmatpush1.msra.mxu0 %v2297
        %2306 = vmatprep.subr.mxu0 0.0
        %2307 = vmatpush1.msra.mxu0 %v2298
        %2308 = vmatprep.subr.mxu0 0.0
        %2309 = vmatpush1.msra.mxu0 %v2299
        %2310 = vmatprep.subr.mxu0 0.0
        %2311 = vmatpush1.msra.mxu0 0.0
        %2312 = vmatprep.subr.mxu0 0.0
        %2313 = vmatpush1.msra.mxu0 0.0
        %2314 = vmatprep.subr.mxu0 0.0
        %2315 = vmatpush1.msra.mxu0 0.0
        %2316 = vmatprep.subr.mxu0 0.0
        %2317 = vmatpush1.msra.mxu0 0.0
        %2318 = vmatprep.subr.mxu0 0.0
        %2319 = vmatpush1.msra.mxu0 0.0
        %2320 = vmatprep.subr.mxu0 0.0
        %2321 = vmatpush1.msra.mxu0 0.0
        %2322 = vmatprep.subr.mxu0 0.0
        %2323 = vmatpush1.msra.mxu0 0.0
        %2324 = vmatprep.subr.mxu0 0.0
        %2325 = vmatpush1.msra.mxu0 0.0
        %2326 = vmatprep.subr.mxu0 0.0
        %2327 = vmatpush1.msra.mxu0 0.0
        %2328 = vmatprep.subr.mxu0 0.0
        %2329 = vmatpush1.msra.mxu0 0.0
        %2330 = vmatprep.subr.mxu0 0.0
        %2331 = vmatpush1.msra.mxu0 0.0
        %2332 = vmatprep.subr.mxu0 0.0
        %2333 = vmatpush1.msra.mxu0 0.0
        %2334 = vmatprep.subr.mxu0 0.0
        %2335 = vmatpush1.msra.mxu0 0.0
        %2336 = vmatprep.subr.mxu0 0.0
        %2337 = vmatpush1.msra.mxu0 0.0
        %2338 = vmatprep.subr.mxu0 0.0
        %2339 = vmatpush1.msra.mxu0 0.0
        %2340 = vmatprep.subr.mxu0 0.0
        %2341 = vmatpush1.msra.mxu0 0.0
        %2342 = vmatprep.subr.mxu0 0.0
        %2343 = vmatpush1.msra.mxu0 0.0
        %2344 = vmatprep.subr.mxu0 0.0
        %2345 = vmatpush1.msra.mxu0 0.0
        %2346 = vmatprep.subr.mxu0 0.0
        %2347 = vmatpush1.msra.mxu0 0.0
        %2348 = vmatprep.subr.mxu0 0.0
        %2349 = vmatpush1.msra.mxu0 0.0
        %2350 = vmatprep.subr.mxu0 0.0
        %2351 = vmatpush1.msra.mxu0 0.0
        %2352 = vmatprep.subr.mxu0 0.0
        %2353 = vmatpush1.msra.mxu0 0.0
        %2354 = vmatprep.subr.mxu0 0.0
        %2355 = vmatpush1.msra.mxu0 0.0
        %2356 = vmatprep.subr.mxu0 0.0
        %2357 = vmatpush1.msra.mxu0 0.0
        %2358 = vmatprep.subr.mxu0 0.0
        %2359 = vmatpush1.msra.mxu0 0.0
        %2360 = vmatprep.subr.mxu0 0.0
        %2361 = vmatpush1.msra.mxu0 0.0
        %2362 = vmatprep.subr.mxu0 0.0
        %2363 = vmatpush1.msra.mxu0 0.0
        %2364 = vmatprep.subr.mxu0 0.0
        %2365 = vmatpush1.msra.mxu0 0.0
        %2366 = vmatprep.subr.mxu0 0.0
        %2367 = vmatpush1.msra.mxu0 0.0
        %2368 = vmatprep.mubr.f32.mxu0 0.0
        %2369 = vmatmul.mubr.f32.gmra.mrb[0].mxu0 %v2302
        %v2370 = vpop.f32.mrb[0].mxu0
        %v2371 = vadd.f32 %v2300, %v2370
        %v2372 = vpop.f32.mrb[0].mxu0
        %2373 = vdwg.mxu0
        %v2374 = vmax.f32 %v2371, 0.0
        %v2375 = vadd.f32 %v2106, %v2374
        %v2376 = vld [vmem:[#allocation5 + $0x260] sm:$0xff]
        %v2377 = vld [vmem:[#allocation5 + $0x270] sm:$0xff]
        %v2378 = vld [vmem:[#allocation5 + $0x280] sm:$0xff]
        %v2379 = vld [vmem:[#allocation5 + $0x290] sm:$0xff]
        %v2380 = vld [vmem:[#allocation5 + $0x2a0] sm:$0xff]
        %v2381 = vld [vmem:[#allocation5 + $0x2b0] sm:$0xff]
        %v2382 = vld [vmem:[#allocation5 + $0x2c0] ss:$0 sm:$0xff]
        %vm2383 = vcmask 392192
        %v2385 = vsel %vm2383, %v2375, 0
        %2387 = vmatprep.subr.mxu0 0.0
        %2388 = vmatpush1.msra.mxu0 %v2376
        %2389 = vmatprep.subr.mxu0 0.0
        %2390 = vmatpush1.msra.mxu0 %v2377
        %2391 = vmatprep.subr.mxu0 0.0
        %2392 = vmatpush1.msra.mxu0 %v2378
        %2393 = vmatprep.subr.mxu0 0.0
        %2394 = vmatpush1.msra.mxu0 %v2379
        %2395 = vmatprep.subr.mxu0 0.0
        %2396 = vmatpush1.msra.mxu0 %v2380
        %2397 = vmatprep.subr.mxu0 0.0
        %2398 = vmatpush1.msra.mxu0 %v2381
        %2399 = vmatprep.subr.mxu0 0.0
        %2400 = vmatpush1.msra.mxu0 0.0
        %2401 = vmatprep.subr.mxu0 0.0
        %2402 = vmatpush1.msra.mxu0 0.0
        %2403 = vmatprep.subr.mxu0 0.0
        %2404 = vmatpush1.msra.mxu0 0.0
        %2405 = vmatprep.subr.mxu0 0.0
        %2406 = vmatpush1.msra.mxu0 0.0
        %2407 = vmatprep.subr.mxu0 0.0
        %2408 = vmatpush1.msra.mxu0 0.0
        %2409 = vmatprep.subr.mxu0 0.0
        %2410 = vmatpush1.msra.mxu0 0.0
        %2411 = vmatprep.subr.mxu0 0.0
        %2412 = vmatpush1.msra.mxu0 0.0
        %2413 = vmatprep.subr.mxu0 0.0
        %2414 = vmatpush1.msra.mxu0 0.0
        %2415 = vmatprep.subr.mxu0 0.0
        %2416 = vmatpush1.msra.mxu0 0.0
        %2417 = vmatprep.subr.mxu0 0.0
        %2418 = vmatpush1.msra.mxu0 0.0
        %2419 = vmatprep.subr.mxu0 0.0
        %2420 = vmatpush1.msra.mxu0 0.0
        %2421 = vmatprep.subr.mxu0 0.0
        %2422 = vmatpush1.msra.mxu0 0.0
        %2423 = vmatprep.subr.mxu0 0.0
        %2424 = vmatpush1.msra.mxu0 0.0
        %2425 = vmatprep.subr.mxu0 0.0
        %2426 = vmatpush1.msra.mxu0 0.0
        %2427 = vmatprep.subr.mxu0 0.0
        %2428 = vmatpush1.msra.mxu0 0.0
        %2429 = vmatprep.subr.mxu0 0.0
        %2430 = vmatpush1.msra.mxu0 0.0
        %2431 = vmatprep.subr.mxu0 0.0
        %2432 = vmatpush1.msra.mxu0 0.0
        %2433 = vmatprep.subr.mxu0 0.0
        %2434 = vmatpush1.msra.mxu0 0.0
        %2435 = vmatprep.subr.mxu0 0.0
        %2436 = vmatpush1.msra.mxu0 0.0
        %2437 = vmatprep.subr.mxu0 0.0
        %2438 = vmatpush1.msra.mxu0 0.0
        %2439 = vmatprep.subr.mxu0 0.0
        %2440 = vmatpush1.msra.mxu0 0.0
        %2441 = vmatprep.subr.mxu0 0.0
        %2442 = vmatpush1.msra.mxu0 0.0
        %2443 = vmatprep.subr.mxu0 0.0
        %2444 = vmatpush1.msra.mxu0 0.0
        %2445 = vmatprep.subr.mxu0 0.0
        %2446 = vmatpush1.msra.mxu0 0.0
        %2447 = vmatprep.subr.mxu0 0.0
        %2448 = vmatpush1.msra.mxu0 0.0
        %2449 = vmatprep.subr.mxu0 0.0
        %2450 = vmatpush1.msra.mxu0 0.0
        %2451 = vmatprep.mubr.f32.mxu0 0.0
        %2452 = vmatmul.mubr.f32.gmra.mrb[0].mxu0 %v2385
        %v2453 = vpop.f32.mrb[0].mxu0
        %v2454 = vadd.f32 %v2382, %v2453
        %v2455 = vpop.f32.mrb[0].mxu0
        %2456 = vdwg.mxu0
        %v2457 = vmax.f32 %v2454, 0.0
        %v2458 = vld [vmem:[#allocation5 + $0x2d0] sm:$0xf]
        %v2459 = vld [vmem:[#allocation2 + $0x188] sm:$0xff]
        %v2460 = vld [vmem:[#allocation2 + $0x190] sm:$0xff]
        %vm2461 = vcmask 64512
        %v2463 = vsel %vm2461, %v2459, 0
        %v2466 = vsel %vm2461, %v2460, 0
        %2468 = vmatprep.subr.mxu0 0.0
        %2469 = vmatpush1.msra.mxu0 %v2457
        %2470 = vmatprep.subr.mxu0 0.0
        %2471 = vmatpush1.msra.mxu0 0.0
        %2472 = vmatprep.subr.mxu0 0.0
        %2473 = vmatpush1.msra.mxu0 0.0
        %2474 = vmatprep.subr.mxu0 0.0
        %2475 = vmatpush1.msra.mxu0 0.0
        %2476 = vmatprep.subr.mxu0 0.0
        %2477 = vmatpush1.msra.mxu0 0.0
        %2478 = vmatprep.subr.mxu0 0.0
        %2479 = vmatpush1.msra.mxu0 0.0
        %2480 = vmatprep.subr.mxu0 0.0
        %2481 = vmatpush1.msra.mxu0 0.0
        %2482 = vmatprep.subr.mxu0 0.0
        %2483 = vmatpush1.msra.mxu0 0.0
        %2484 = vmatprep.subr.mxu0 0.0
        %2485 = vmatpush1.msra.mxu0 0.0
        %2486 = vmatprep.subr.mxu0 0.0
        %2487 = vmatpush1.msra.mxu0 0.0
        %2488 = vmatprep.subr.mxu0 0.0
        %2489 = vmatpush1.msra.mxu0 0.0
        %2490 = vmatprep.subr.mxu0 0.0
        %2491 = vmatpush1.msra.mxu0 0.0
        %2492 = vmatprep.subr.mxu0 0.0
        %2493 = vmatpush1.msra.mxu0 0.0
        %2494 = vmatprep.subr.mxu0 0.0
        %2495 = vmatpush1.msra.mxu0 0.0
        %2496 = vmatprep.subr.mxu0 0.0
        %2497 = vmatpush1.msra.mxu0 0.0
        %2498 = vmatprep.subr.mxu0 0.0
        %2499 = vmatpush1.msra.mxu0 0.0
        %2500 = vmatprep.subr.mxu0 0.0
        %2501 = vmatpush1.msra.mxu0 0.0
        %2502 = vmatprep.subr.mxu0 0.0
        %2503 = vmatpush1.msra.mxu0 0.0
        %2504 = vmatprep.subr.mxu0 0.0
        %2505 = vmatpush1.msra.mxu0 0.0
        %2506 = vmatprep.subr.mxu0 0.0
        %2507 = vmatpush1.msra.mxu0 0.0
        %2508 = vmatprep.subr.mxu0 0.0
        %2509 = vmatpush1.msra.mxu0 0.0
        %2510 = vmatprep.subr.mxu0 0.0
        %2511 = vmatpush1.msra.mxu0 0.0
        %2512 = vmatprep.subr.mxu0 0.0
        %2513 = vmatpush1.msra.mxu0 0.0
        %2514 = vmatprep.subr.mxu0 0.0
        %2515 = vmatpush1.msra.mxu0 0.0
        %2516 = vmatprep.subr.mxu0 0.0
        %2517 = vmatpush1.msra.mxu0 0.0
        %2518 = vmatprep.subr.mxu0 0.0
        %2519 = vmatpush1.msra.mxu0 0.0
        %2520 = vmatprep.subr.mxu0 0.0
        %2521 = vmatpush1.msra.mxu0 0.0
        %2522 = vmatprep.subr.mxu0 0.0
        %2523 = vmatpush1.msra.mxu0 0.0
        %2524 = vmatprep.subr.mxu0 0.0
        %2525 = vmatpush1.msra.mxu0 0.0
        %2526 = vmatprep.subr.mxu0 0.0
        %2527 = vmatpush1.msra.mxu0 0.0
        %2528 = vmatprep.subr.mxu0 0.0
        %2529 = vmatpush1.msra.mxu0 0.0
        %2530 = vmatprep.subr.mxu0 0.0
        %2531 = vmatpush1.msra.mxu0 0.0
        %2532 = vmatprep.mubr.f32.mxu0 0.0
        %2533 = vmatmul.mubr.f32.gmra.mrb[0].mxu0 %v2463
        %v2534 = vpop.f32.mrb[0].mxu0
        %v2535 = vadd.f32 0.0, %v2534
        %v2536 = vpop.f32.mrb[0].mxu0
        %2537 = vmatprep.mubr.f32.mxu0 0.0
        %2538 = vmatmul.mubr.f32.gmra.mrb[0].mxu0 %v2466
        %v2539 = vpop.f32.mrb[0].mxu0
        %v2540 = vadd.f32 0.0, %v2539
        %v2541 = vpop.f32.mrb[0].mxu0
        %2542 = vdwg.mxu0
        %v2543 = vlaneseq
        %v2544 = vshrl.u32 %v2543, 7
        %v2545 = vsub.s32 0, %v2544
        %v2546 = vrot.slane %v2458, %v2545
        %v2547 = vmul.f32 %v2535, %v2546
        %v2548 = vlaneseq
        %v2549 = vshrl.u32 %v2548, 7
        %v2550 = vsub.s32 1, %v2549
        %v2551 = vrot.slane %v2458, %v2550
        %v2552 = vmul.f32 %v2457, %v2551
        %v2553 = vadd.f32 %v2547, %v2552
        %v2554 = vlaneseq
        %v2555 = vshrl.u32 %v2554, 7
        %v2556 = vsub.s32 2, %v2555
        %v2557 = vrot.slane %v2458, %v2556
        %v2558 = vmul.f32 %v2540, %v2557
        %v2559 = vadd.f32 %v2553, %v2558
        %v2560 = vlaneseq
        %v2561 = vshrl.u32 %v2560, 7
        %v2562 = vsub.s32 3, %v2561
        %v2563 = vrot.slane %v2458, %v2562
        %v2564 = vadd.f32 %v2559, %v2563
        %v2565 = vld [vmem:[#allocation5 + $0x2e0] sm:$0xff]
        %v2566 = vld [vmem:[#allocation5 + $0x2f0] sm:$0xff]
        %v2567 = vld [vmem:[#allocation5 + $0x300] sm:$0xff]
        %v2568 = vld [vmem:[#allocation5 + $0x310] ss:$0 sm:$0xff]
        %v2570 = vsel %vm1605, %v2564, 0
        %2572 = vmatprep.subr.mxu0 0.0
        %2573 = vmatpush1.msra.mxu0 %v2565
        %2574 = vmatprep.subr.mxu0 0.0
        %2575 = vmatpush1.msra.mxu0 %v2566
        %2576 = vmatprep.subr.mxu0 0.0
        %2577 = vmatpush1.msra.mxu0 %v2567
        %2578 = vmatprep.subr.mxu0 0.0
        %2579 = vmatpush1.msra.mxu0 0.0
        %2580 = vmatprep.subr.mxu0 0.0
        %2581 = vmatpush1.msra.mxu0 0.0
        %2582 = vmatprep.subr.mxu0 0.0
        %2583 = vmatpush1.msra.mxu0 0.0
        %2584 = vmatprep.subr.mxu0 0.0
        %2585 = vmatpush1.msra.mxu0 0.0
        %2586 = vmatprep.subr.mxu0 0.0
        %2587 = vmatpush1.msra.mxu0 0.0
        %2588 = vmatprep.subr.mxu0 0.0
        %2589 = vmatpush1.msra.mxu0 0.0
        %2590 = vmatprep.subr.mxu0 0.0
        %2591 = vmatpush1.msra.mxu0 0.0
        %2592 = vmatprep.subr.mxu0 0.0
        %2593 = vmatpush1.msra.mxu0 0.0
        %2594 = vmatprep.subr.mxu0 0.0
        %2595 = vmatpush1.msra.mxu0 0.0
        %2596 = vmatprep.subr.mxu0 0.0
        %2597 = vmatpush1.msra.mxu0 0.0
        %2598 = vmatprep.subr.mxu0 0.0
        %2599 = vmatpush1.msra.mxu0 0.0
        %2600 = vmatprep.subr.mxu0 0.0
        %2601 = vmatpush1.msra.mxu0 0.0
        %2602 = vmatprep.subr.mxu0 0.0
        %2603 = vmatpush1.msra.mxu0 0.0
        %2604 = vmatprep.subr.mxu0 0.0
        %2605 = vmatpush1.msra.mxu0 0.0
        %2606 = vmatprep.subr.mxu0 0.0
        %2607 = vmatpush1.msra.mxu0 0.0
        %2608 = vmatprep.subr.mxu0 0.0
        %2609 = vmatpush1.msra.mxu0 0.0
        %2610 = vmatprep.subr.mxu0 0.0
        %2611 = vmatpush1.msra.mxu0 0.0
        %2612 = vmatprep.subr.mxu0 0.0
        %2613 = vmatpush1.msra.mxu0 0.0
        %2614 = vmatprep.subr.mxu0 0.0
        %2615 = vmatpush1.msra.mxu0 0.0
        %2616 = vmatprep.subr.mxu0 0.0
        %2617 = vmatpush1.msra.mxu0 0.0
        %2618 = vmatprep.subr.mxu0 0.0
        %2619 = vmatpush1.msra.mxu0 0.0
        %2620 = vmatprep.subr.mxu0 0.0
        %2621 = vmatpush1.msra.mxu0 0.0
        %2622 = vmatprep.subr.mxu0 0.0
        %2623 = vmatpush1.msra.mxu0 0.0
        %2624 = vmatprep.subr.mxu0 0.0
        %2625 = vmatpush1.msra.mxu0 0.0
        %2626 = vmatprep.subr.mxu0 0.0
        %2627 = vmatpush1.msra.mxu0 0.0
        %2628 = vmatprep.subr.mxu0 0.0
        %2629 = vmatpush1.msra.mxu0 0.0
        %2630 = vmatprep.subr.mxu0 0.0
        %2631 = vmatpush1.msra.mxu0 0.0
        %2632 = vmatprep.subr.mxu0 0.0
        %2633 = vmatpush1.msra.mxu0 0.0
        %2634 = vmatprep.subr.mxu0 0.0
        %2635 = vmatpush1.msra.mxu0 0.0
        %2636 = vmatprep.mubr.f32.mxu0 0.0
        %2637 = vmatmul.mubr.f32.gmra.mrb[0].mxu0 %v2570
        %v2638 = vpop.f32.mrb[0].mxu0
        %v2639 = vadd.f32 %v2568, %v2638
        %v2640 = vpop.f32.mrb[0].mxu0
        %2641 = vdwg.mxu0
        %v2642 = vmax.f32 %v2639, 0.0
        %v2643 = vld [vmem:[#allocation5 + $0x320] ss:$0 sm:$0xff]
        %v2644 = vmul.f32 %v2375, %v2643
        %v2645 = vadd.f32 %v2644, %v2642
        %v2646 = vld [vmem:[#allocation5 + $0x330] sm:$0xff]
        %v2647 = vld [vmem:[#allocation5 + $0x340] sm:$0xff]
        %v2648 = vld [vmem:[#allocation5 + $0x350] sm:$0xff]
        %v2649 = vld [vmem:[#allocation5 + $0x360] sm:$0xff]
        %v2650 = vld [vmem:[#allocation5 + $0x370] sm:$0xff]
        %v2651 = vld [vmem:[#allocation5 + $0x380] sm:$0xff]
        %v2652 = vld [vmem:[#allocation5 + $0x390] ss:$0 sm:$0xff]
        %v2654 = vsel %vm2383, %v2645, 0
        %2656 = vmatprep.subr.mxu0 0.0
        %2657 = vmatpush1.msra.mxu0 %v2646
        %2658 = vmatprep.subr.mxu0 0.0
        %2659 = vmatpush1.msra.mxu0 %v2647
        %2660 = vmatprep.subr.mxu0 0.0
        %2661 = vmatpush1.msra.mxu0 %v2648
        %2662 = vmatprep.subr.mxu0 0.0
        %2663 = vmatpush1.msra.mxu0 %v2649
        %2664 = vmatprep.subr.mxu0 0.0
        %2665 = vmatpush1.msra.mxu0 %v2650
        %2666 = vmatprep.subr.mxu0 0.0
        %2667 = vmatpush1.msra.mxu0 %v2651
        %2668 = vmatprep.subr.mxu0 0.0
        %2669 = vmatpush1.msra.mxu0 0.0
        %2670 = vmatprep.subr.mxu0 0.0
        %2671 = vmatpush1.msra.mxu0 0.0
        %2672 = vmatprep.subr.mxu0 0.0
        %2673 = vmatpush1.msra.mxu0 0.0
        %2674 = vmatprep.subr.mxu0 0.0
        %2675 = vmatpush1.msra.mxu0 0.0
        %2676 = vmatprep.subr.mxu0 0.0
        %2677 = vmatpush1.msra.mxu0 0.0
        %2678 = vmatprep.subr.mxu0 0.0
        %2679 = vmatpush1.msra.mxu0 0.0
        %2680 = vmatprep.subr.mxu0 0.0
        %2681 = vmatpush1.msra.mxu0 0.0
        %2682 = vmatprep.subr.mxu0 0.0
        %2683 = vmatpush1.msra.mxu0 0.0
        %2684 = vmatprep.subr.mxu0 0.0
        %2685 = vmatpush1.msra.mxu0 0.0
        %2686 = vmatprep.subr.mxu0 0.0
        %2687 = vmatpush1.msra.mxu0 0.0
        %2688 = vmatprep.subr.mxu0 0.0
        %2689 = vmatpush1.msra.mxu0 0.0
        %2690 = vmatprep.subr.mxu0 0.0
        %2691 = vmatpush1.msra.mxu0 0.0
        %2692 = vmatprep.subr.mxu0 0.0
        %2693 = vmatpush1.msra.mxu0 0.0
        %2694 = vmatprep.subr.mxu0 0.0
        %2695 = vmatpush1.msra.mxu0 0.0
        %2696 = vmatprep.subr.mxu0 0.0
        %2697 = vmatpush1.msra.mxu0 0.0
        %2698 = vmatprep.subr.mxu0 0.0
        %2699 = vmatpush1.msra.mxu0 0.0
        %2700 = vmatprep.subr.mxu0 0.0
        %2701 = vmatpush1.msra.mxu0 0.0
        %2702 = vmatprep.subr.mxu0 0.0
        %2703 = vmatpush1.msra.mxu0 0.0
        %2704 = vmatprep.subr.mxu0 0.0
        %2705 = vmatpush1.msra.mxu0 0.0
        %2706 = vmatprep.subr.mxu0 0.0
        %2707 = vmatpush1.msra.mxu0 0.0
        %2708 = vmatprep.subr.mxu0 0.0
        %2709 = vmatpush1.msra.mxu0 0.0
        %2710 = vmatprep.subr.mxu0 0.0
        %2711 = vmatpush1.msra.mxu0 0.0
        %2712 = vmatprep.subr.mxu0 0.0
        %2713 = vmatpush1.msra.mxu0 0.0
        %2714 = vmatprep.subr.mxu0 0.0
        %2715 = vmatpush1.msra.mxu0 0.0
        %2716 = vmatprep.subr.mxu0 0.0
        %2717 = vmatpush1.msra.mxu0 0.0
        %2718 = vmatprep.subr.mxu0 0.0
        %2719 = vmatpush1.msra.mxu0 0.0
        %2720 = vmatprep.mubr.f32.mxu0 0.0
        %2721 = vmatmul.mubr.f32.gmra.mrb[0].mxu0 %v2654
        %v2722 = vpop.f32.mrb[0].mxu0
        %v2723 = vadd.f32 %v2652, %v2722
        %v2724 = vpop.f32.mrb[0].mxu0
        %2725 = vdwg.mxu0
        %v2726 = vmax.f32 %v2723, 0.0
        %v2727 = vld [vmem:[#allocation5 + $0x3a0] sm:$0xf]
        %2728 = vmatprep.subr.mxu0 0.0
        %2729 = vmatpush1.msra.mxu0 %v2726
        %2730 = vmatprep.subr.mxu0 0.0
        %2731 = vmatpush1.msra.mxu0 0.0
        %2732 = vmatprep.subr.mxu0 0.0
        %2733 = vmatpush1.msra.mxu0 0.0
        %2734 = vmatprep.subr.mxu0 0.0
        %2735 = vmatpush1.msra.mxu0 0.0
        %2736 = vmatprep.subr.mxu0 0.0
        %2737 = vmatpush1.msra.mxu0 0.0
        %2738 = vmatprep.subr.mxu0 0.0
        %2739 = vmatpush1.msra.mxu0 0.0
        %2740 = vmatprep.subr.mxu0 0.0
        %2741 = vmatpush1.msra.mxu0 0.0
        %2742 = vmatprep.subr.mxu0 0.0
        %2743 = vmatpush1.msra.mxu0 0.0
        %2744 = vmatprep.subr.mxu0 0.0
        %2745 = vmatpush1.msra.mxu0 0.0
        %2746 = vmatprep.subr.mxu0 0.0
        %2747 = vmatpush1.msra.mxu0 0.0
        %2748 = vmatprep.subr.mxu0 0.0
        %2749 = vmatpush1.msra.mxu0 0.0
        %2750 = vmatprep.subr.mxu0 0.0
        %2751 = vmatpush1.msra.mxu0 0.0
        %2752 = vmatprep.subr.mxu0 0.0
        %2753 = vmatpush1.msra.mxu0 0.0
        %2754 = vmatprep.subr.mxu0 0.0
        %2755 = vmatpush1.msra.mxu0 0.0
        %2756 = vmatprep.subr.mxu0 0.0
        %2757 = vmatpush1.msra.mxu0 0.0
        %2758 = vmatprep.subr.mxu0 0.0
        %2759 = vmatpush1.msra.mxu0 0.0
        %2760 = vmatprep.subr.mxu0 0.0
        %2761 = vmatpush1.msra.mxu0 0.0
        %2762 = vmatprep.subr.mxu0 0.0
        %2763 = vmatpush1.msra.mxu0 0.0
        %2764 = vmatprep.subr.mxu0 0.0
        %2765 = vmatpush1.msra.mxu0 0.0
        %2766 = vmatprep.subr.mxu0 0.0
        %2767 = vmatpush1.msra.mxu0 0.0
        %2768 = vmatprep.subr.mxu0 0.0
        %2769 = vmatpush1.msra.mxu0 0.0
        %2770 = vmatprep.subr.mxu0 0.0
        %2771 = vmatpush1.msra.mxu0 0.0
        %2772 = vmatprep.subr.mxu0 0.0
        %2773 = vmatpush1.msra.mxu0 0.0
        %2774 = vmatprep.subr.mxu0 0.0
        %2775 = vmatpush1.msra.mxu0 0.0
        %2776 = vmatprep.subr.mxu0 0.0
        %2777 = vmatpush1.msra.mxu0 0.0
        %2778 = vmatprep.subr.mxu0 0.0
        %2779 = vmatpush1.msra.mxu0 0.0
        %2780 = vmatprep.subr.mxu0 0.0
        %2781 = vmatpush1.msra.mxu0 0.0
        %2782 = vmatprep.subr.mxu0 0.0
        %2783 = vmatpush1.msra.mxu0 0.0
        %2784 = vmatprep.subr.mxu0 0.0
        %2785 = vmatpush1.msra.mxu0 0.0
        %2786 = vmatprep.subr.mxu0 0.0
        %2787 = vmatpush1.msra.mxu0 0.0
        %2788 = vmatprep.subr.mxu0 0.0
        %2789 = vmatpush1.msra.mxu0 0.0
        %2790 = vmatprep.subr.mxu0 0.0
        %2791 = vmatpush1.msra.mxu0 0.0
        %2792 = vmatprep.mubr.f32.mxu0 0.0
        %2793 = vmatmul.mubr.f32.gmra.mrb[0].mxu0 %v2463
        %v2794 = vpop.f32.mrb[0].mxu0
        %v2795 = vadd.f32 0.0, %v2794
        %v2796 = vpop.f32.mrb[0].mxu0
        %2797 = vmatprep.mubr.f32.mxu0 0.0
        %2798 = vmatmul.mubr.f32.gmra.mrb[0].mxu0 %v2466
        %v2799 = vpop.f32.mrb[0].mxu0
        %v2800 = vadd.f32 0.0, %v2799
        %v2801 = vpop.f32.mrb[0].mxu0
        %2802 = vdwg.mxu0
        %v2803 = vlaneseq
        %v2804 = vshrl.u32 %v2803, 7
        %v2805 = vsub.s32 0, %v2804
        %v2806 = vrot.slane %v2727, %v2805
        %v2807 = vmul.f32 %v2795, %v2806
        %v2808 = vlaneseq
        %v2809 = vshrl.u32 %v2808, 7
        %v2810 = vsub.s32 1, %v2809
        %v2811 = vrot.slane %v2727, %v2810
        %v2812 = vmul.f32 %v2726, %v2811
        %v2813 = vadd.f32 %v2807, %v2812
        %v2814 = vlaneseq
        %v2815 = vshrl.u32 %v2814, 7
        %v2816 = vsub.s32 2, %v2815
        %v2817 = vrot.slane %v2727, %v2816
        %v2818 = vmul.f32 %v2800, %v2817
        %v2819 = vadd.f32 %v2813, %v2818
        %v2820 = vlaneseq
        %v2821 = vshrl.u32 %v2820, 7
        %v2822 = vsub.s32 3, %v2821
        %v2823 = vrot.slane %v2727, %v2822
        %v2824 = vadd.f32 %v2819, %v2823
        %v2825 = vld [vmem:[#allocation5 + $0x3b0] sm:$0xff]
        %v2826 = vld [vmem:[#allocation5 + $0x3c0] sm:$0xff]
        %v2827 = vld [vmem:[#allocation5 + $0x3d0] sm:$0xff]
        %v2828 = vld [vmem:[#allocation5 + $0x3e0] ss:$0 sm:$0xff]
        %v2830 = vsel %vm1605, %v2824, 0
        %2832 = vmatprep.subr.mxu0 0.0
        %2833 = vmatpush1.msra.mxu0 %v2825
        %2834 = vmatprep.subr.mxu0 0.0
        %2835 = vmatpush1.msra.mxu0 %v2826
        %2836 = vmatprep.subr.mxu0 0.0
        %2837 = vmatpush1.msra.mxu0 %v2827
        %2838 = vmatprep.subr.mxu0 0.0
        %2839 = vmatpush1.msra.mxu0 0.0
        %2840 = vmatprep.subr.mxu0 0.0
        %2841 = vmatpush1.msra.mxu0 0.0
        %2842 = vmatprep.subr.mxu0 0.0
        %2843 = vmatpush1.msra.mxu0 0.0
        %2844 = vmatprep.subr.mxu0 0.0
        %2845 = vmatpush1.msra.mxu0 0.0
        %2846 = vmatprep.subr.mxu0 0.0
        %2847 = vmatpush1.msra.mxu0 0.0
        %2848 = vmatprep.subr.mxu0 0.0
        %2849 = vmatpush1.msra.mxu0 0.0
        %2850 = vmatprep.subr.mxu0 0.0
        %2851 = vmatpush1.msra.mxu0 0.0
        %2852 = vmatprep.subr.mxu0 0.0
        %2853 = vmatpush1.msra.mxu0 0.0
        %2854 = vmatprep.subr.mxu0 0.0
        %2855 = vmatpush1.msra.mxu0 0.0
        %2856 = vmatprep.subr.mxu0 0.0
        %2857 = vmatpush1.msra.mxu0 0.0
        %2858 = vmatprep.subr.mxu0 0.0
        %2859 = vmatpush1.msra.mxu0 0.0
        %2860 = vmatprep.subr.mxu0 0.0
        %2861 = vmatpush1.msra.mxu0 0.0
        %2862 = vmatprep.subr.mxu0 0.0
        %2863 = vmatpush1.msra.mxu0 0.0
        %2864 = vmatprep.subr.mxu0 0.0
        %2865 = vmatpush1.msra.mxu0 0.0
        %2866 = vmatprep.subr.mxu0 0.0
        %2867 = vmatpush1.msra.mxu0 0.0
        %2868 = vmatprep.subr.mxu0 0.0
        %2869 = vmatpush1.msra.mxu0 0.0
        %2870 = vmatprep.subr.mxu0 0.0
        %2871 = vmatpush1.msra.mxu0 0.0
        %2872 = vmatprep.subr.mxu0 0.0
        %2873 = vmatpush1.msra.mxu0 0.0
        %2874 = vmatprep.subr.mxu0 0.0
        %2875 = vmatpush1.msra.mxu0 0.0
        %2876 = vmatprep.subr.mxu0 0.0
        %2877 = vmatpush1.msra.mxu0 0.0
        %2878 = vmatprep.subr.mxu0 0.0
        %2879 = vmatpush1.msra.mxu0 0.0
        %2880 = vmatprep.subr.mxu0 0.0
        %2881 = vmatpush1.msra.mxu0 0.0
        %2882 = vmatprep.subr.mxu0 0.0
        %2883 = vmatpush1.msra.mxu0 0.0
        %2884 = vmatprep.subr.mxu0 0.0
        %2885 = vmatpush1.msra.mxu0 0.0
        %2886 = vmatprep.subr.mxu0 0.0
        %2887 = vmatpush1.msra.mxu0 0.0
        %2888 = vmatprep.subr.mxu0 0.0
        %2889 = vmatpush1.msra.mxu0 0.0
        %2890 = vmatprep.subr.mxu0 0.0
        %2891 = vmatpush1.msra.mxu0 0.0
        %2892 = vmatprep.subr.mxu0 0.0
        %2893 = vmatpush1.msra.mxu0 0.0
        %2894 = vmatprep.subr.mxu0 0.0
        %2895 = vmatpush1.msra.mxu0 0.0
        %2896 = vmatprep.mubr.f32.mxu0 0.0
        %2897 = vmatmul.mubr.f32.gmra.mrb[0].mxu0 %v2830
        %v2898 = vpop.f32.mrb[0].mxu0
        %v2899 = vadd.f32 %v2828, %v2898
        %v2900 = vpop.f32.mrb[0].mxu0
        %2901 = vdwg.mxu0
        %v2902 = vmax.f32 %v2899, 0.0
        %v2903 = vld [vmem:[#allocation5 + $0x3f0] ss:$0 sm:$0xff]
        %v2904 = vmul.f32 %v2645, %v2903
        %v2905 = vadd.f32 %v2904, %v2902
        %v2906 = vld [vmem:[#allocation5 + $0x400] sm:$0xff]
        %v2907 = vld [vmem:[#allocation5 + $0x410] sm:$0xff]
        %v2908 = vld [vmem:[#allocation5 + $0x420] sm:$0xff]
        %v2909 = vld [vmem:[#allocation5 + $0x430] sm:$0xff]
        %v2910 = vld [vmem:[#allocation5 + $0x440] sm:$0xff]
        %v2911 = vld [vmem:[#allocation5 + $0x450] sm:$0xff]
        %v2912 = vld [vmem:[#allocation5 + $0x460] ss:$0 sm:$0xff]
        %v2914 = vsel %vm2383, %v2905, 0
        %2916 = vmatprep.subr.mxu0 0.0
        %2917 = vmatpush1.msra.mxu0 %v2906
        %2918 = vmatprep.subr.mxu0 0.0
        %2919 = vmatpush1.msra.mxu0 %v2907
        %2920 = vmatprep.subr.mxu0 0.0
        %2921 = vmatpush1.msra.mxu0 %v2908
        %2922 = vmatprep.subr.mxu0 0.0
        %2923 = vmatpush1.msra.mxu0 %v2909
        %2924 = vmatprep.subr.mxu0 0.0
        %2925 = vmatpush1.msra.mxu0 %v2910
        %2926 = vmatprep.subr.mxu0 0.0
        %2927 = vmatpush1.msra.mxu0 %v2911
        %2928 = vmatprep.subr.mxu0 0.0
        %2929 = vmatpush1.msra.mxu0 0.0
        %2930 = vmatprep.subr.mxu0 0.0
        %2931 = vmatpush1.msra.mxu0 0.0
        %2932 = vmatprep.subr.mxu0 0.0
        %2933 = vmatpush1.msra.mxu0 0.0
        %2934 = vmatprep.subr.mxu0 0.0
        %2935 = vmatpush1.msra.mxu0 0.0
        %2936 = vmatprep.subr.mxu0 0.0
        %2937 = vmatpush1.msra.mxu0 0.0
        %2938 = vmatprep.subr.mxu0 0.0
        %2939 = vmatpush1.msra.mxu0 0.0
        %2940 = vmatprep.subr.mxu0 0.0
        %2941 = vmatpush1.msra.mxu0 0.0
        %2942 = vmatprep.subr.mxu0 0.0
        %2943 = vmatpush1.msra.mxu0 0.0
        %2944 = vmatprep.subr.mxu0 0.0
        %2945 = vmatpush1.msra.mxu0 0.0
        %2946 = vmatprep.subr.mxu0 0.0
        %2947 = vmatpush1.msra.mxu0 0.0
        %2948 = vmatprep.subr.mxu0 0.0
        %2949 = vmatpush1.msra.mxu0 0.0
        %2950 = vmatprep.subr.mxu0 0.0
        %2951 = vmatpush1.msra.mxu0 0.0
        %2952 = vmatprep.subr.mxu0 0.0
        %2953 = vmatpush1.msra.mxu0 0.0
        %2954 = vmatprep.subr.mxu0 0.0
        %2955 = vmatpush1.msra.mxu0 0.0
        %2956 = vmatprep.subr.mxu0 0.0
        %2957 = vmatpush1.msra.mxu0 0.0
        %2958 = vmatprep.subr.mxu0 0.0
        %2959 = vmatpush1.msra.mxu0 0.0
        %2960 = vmatprep.subr.mxu0 0.0
        %2961 = vmatpush1.msra.mxu0 0.0
        %2962 = vmatprep.subr.mxu0 0.0
        %2963 = vmatpush1.msra.mxu0 0.0
        %2964 = vmatprep.subr.mxu0 0.0
        %2965 = vmatpush1.msra.mxu0 0.0
        %2966 = vmatprep.subr.mxu0 0.0
        %2967 = vmatpush1.msra.mxu0 0.0
        %2968 = vmatprep.subr.mxu0 0.0
        %2969 = vmatpush1.msra.mxu0 0.0
        %2970 = vmatprep.subr.mxu0 0.0
        %2971 = vmatpush1.msra.mxu0 0.0
        %2972 = vmatprep.subr.mxu0 0.0
        %2973 = vmatpush1.msra.mxu0 0.0
        %2974 = vmatprep.subr.mxu0 0.0
        %2975 = vmatpush1.msra.mxu0 0.0
        %2976 = vmatprep.subr.mxu0 0.0
        %2977 = vmatpush1.msra.mxu0 0.0
        %2978 = vmatprep.subr.mxu0 0.0
        %2979 = vmatpush1.msra.mxu0 0.0
        %2980 = vmatprep.mubr.f32.mxu0 0.0
        %2981 = vmatmul.mubr.f32.gmra.mrb[0].mxu0 %v2914
        %v2982 = vpop.f32.mrb[0].mxu0
        %v2983 = vadd.f32 %v2912, %v2982
        %v2984 = vpop.f32.mrb[0].mxu0
        %2985 = vdwg.mxu0
        %v2986 = vmax.f32 %v2983, 0.0
        %v2987 = vld [vmem:[#allocation5 + $0x470] sm:$0xf]
        %2988 = vmatprep.subr.mxu0 0.0
        %2989 = vmatpush1.msra.mxu0 %v2986
        %2990 = vmatprep.subr.mxu0 0.0
        %2991 = vmatpush1.msra.mxu0 0.0
        %2992 = vmatprep.subr.mxu0 0.0
        %2993 = vmatpush1.msra.mxu0 0.0
        %2994 = vmatprep.subr.mxu0 0.0
        %2995 = vmatpush1.msra.mxu0 0.0
        %2996 = vmatprep.subr.mxu0 0.0
        %2997 = vmatpush1.msra.mxu0 0.0
        %2998 = vmatprep.subr.mxu0 0.0
        %2999 = vmatpush1.msra.mxu0 0.0
        %3000 = vmatprep.subr.mxu0 0.0
        %3001 = vmatpush1.msra.mxu0 0.0
        %3002 = vmatprep.subr.mxu0 0.0
        %3003 = vmatpush1.msra.mxu0 0.0
        %3004 = vmatprep.subr.mxu0 0.0
        %3005 = vmatpush1.msra.mxu0 0.0
        %3006 = vmatprep.subr.mxu0 0.0
        %3007 = vmatpush1.msra.mxu0 0.0
        %3008 = vmatprep.subr.mxu0 0.0
        %3009 = vmatpush1.msra.mxu0 0.0
        %3010 = vmatprep.subr.mxu0 0.0
        %3011 = vmatpush1.msra.mxu0 0.0
        %3012 = vmatprep.subr.mxu0 0.0
        %3013 = vmatpush1.msra.mxu0 0.0
        %3014 = vmatprep.subr.mxu0 0.0
        %3015 = vmatpush1.msra.mxu0 0.0
        %3016 = vmatprep.subr.mxu0 0.0
        %3017 = vmatpush1.msra.mxu0 0.0
        %3018 = vmatprep.subr.mxu0 0.0
        %3019 = vmatpush1.msra.mxu0 0.0
        %3020 = vmatprep.subr.mxu0 0.0
        %3021 = vmatpush1.msra.mxu0 0.0
        %3022 = vmatprep.subr.mxu0 0.0
        %3023 = vmatpush1.msra.mxu0 0.0
        %3024 = vmatprep.subr.mxu0 0.0
        %3025 = vmatpush1.msra.mxu0 0.0
        %3026 = vmatprep.subr.mxu0 0.0
        %3027 = vmatpush1.msra.mxu0 0.0
        %3028 = vmatprep.subr.mxu0 0.0
        %3029 = vmatpush1.msra.mxu0 0.0
        %3030 = vmatprep.subr.mxu0 0.0
        %3031 = vmatpush1.msra.mxu0 0.0
        %3032 = vmatprep.subr.mxu0 0.0
        %3033 = vmatpush1.msra.mxu0 0.0
        %3034 = vmatprep.subr.mxu0 0.0
        %3035 = vmatpush1.msra.mxu0 0.0
        %3036 = vmatprep.subr.mxu0 0.0
        %3037 = vmatpush1.msra.mxu0 0.0
        %3038 = vmatprep.subr.mxu0 0.0
        %3039 = vmatpush1.msra.mxu0 0.0
        %3040 = vmatprep.subr.mxu0 0.0
        %3041 = vmatpush1.msra.mxu0 0.0
        %3042 = vmatprep.subr.mxu0 0.0
        %3043 = vmatpush1.msra.mxu0 0.0
        %3044 = vmatprep.subr.mxu0 0.0
        %3045 = vmatpush1.msra.mxu0 0.0
        %3046 = vmatprep.subr.mxu0 0.0
        %3047 = vmatpush1.msra.mxu0 0.0
        %3048 = vmatprep.subr.mxu0 0.0
        %3049 = vmatpush1.msra.mxu0 0.0
        %3050 = vmatprep.subr.mxu0 0.0
        %3051 = vmatpush1.msra.mxu0 0.0
        %3052 = vmatprep.mubr.f32.mxu0 0.0
        %3053 = vmatmul.mubr.f32.gmra.mrb[0].mxu0 %v2463
        %v3054 = vpop.f32.mrb[0].mxu0
        %v3055 = vadd.f32 0.0, %v3054
        %v3056 = vpop.f32.mrb[0].mxu0
        %3057 = vmatprep.mubr.f32.mxu0 0.0
        %3058 = vmatmul.mubr.f32.gmra.mrb[0].mxu0 %v2466
        %v3059 = vpop.f32.mrb[0].mxu0
        %v3060 = vadd.f32 0.0, %v3059
        %v3061 = vpop.f32.mrb[0].mxu0
        %3062 = vdwg.mxu0
        %v3063 = vlaneseq
        %v3064 = vshrl.u32 %v3063, 7
        %v3065 = vsub.s32 0, %v3064
        %v3066 = vrot.slane %v2987, %v3065
        %v3067 = vmul.f32 %v3055, %v3066
        %v3068 = vlaneseq
        %v3069 = vshrl.u32 %v3068, 7
        %v3070 = vsub.s32 1, %v3069
        %v3071 = vrot.slane %v2987, %v3070
        %v3072 = vmul.f32 %v2986, %v3071
        %v3073 = vadd.f32 %v3067, %v3072
        %v3074 = vlaneseq
        %v3075 = vshrl.u32 %v3074, 7
        %v3076 = vsub.s32 2, %v3075
        %v3077 = vrot.slane %v2987, %v3076
        %v3078 = vmul.f32 %v3060, %v3077
        %v3079 = vadd.f32 %v3073, %v3078
        %v3080 = vlaneseq
        %v3081 = vshrl.u32 %v3080, 7
        %v3082 = vsub.s32 3, %v3081
        %v3083 = vrot.slane %v2987, %v3082
        %v3084 = vadd.f32 %v3079, %v3083
        %v3085 = vld [vmem:[#allocation5 + $0x480] sm:$0xff]
        %v3086 = vld [vmem:[#allocation5 + $0x490] sm:$0xff]
        %v3087 = vld [vmem:[#allocation5 + $0x4a0] sm:$0xff]
        %v3088 = vld [vmem:[#allocation5 + $0x4b0] ss:$0 sm:$0xff]
        %v3090 = vsel %vm1605, %v3084, 0
        %3092 = vmatprep.subr.mxu0 0.0
        %3093 = vmatpush1.msra.mxu0 %v3085
        %3094 = vmatprep.subr.mxu0 0.0
        %3095 = vmatpush1.msra.mxu0 %v3086
        %3096 = vmatprep.subr.mxu0 0.0
        %3097 = vmatpush1.msra.mxu0 %v3087
        %3098 = vmatprep.subr.mxu0 0.0
        %3099 = vmatpush1.msra.mxu0 0.0
        %3100 = vmatprep.subr.mxu0 0.0
        %3101 = vmatpush1.msra.mxu0 0.0
        %3102 = vmatprep.subr.mxu0 0.0
        %3103 = vmatpush1.msra.mxu0 0.0
        %3104 = vmatprep.subr.mxu0 0.0
        %3105 = vmatpush1.msra.mxu0 0.0
        %3106 = vmatprep.subr.mxu0 0.0
        %3107 = vmatpush1.msra.mxu0 0.0
        %3108 = vmatprep.subr.mxu0 0.0
        %3109 = vmatpush1.msra.mxu0 0.0
        %3110 = vmatprep.subr.mxu0 0.0
        %3111 = vmatpush1.msra.mxu0 0.0
        %3112 = vmatprep.subr.mxu0 0.0
        %3113 = vmatpush1.msra.mxu0 0.0
        %3114 = vmatprep.subr.mxu0 0.0
        %3115 = vmatpush1.msra.mxu0 0.0
        %3116 = vmatprep.subr.mxu0 0.0
        %3117 = vmatpush1.msra.mxu0 0.0
        %3118 = vmatprep.subr.mxu0 0.0
        %3119 = vmatpush1.msra.mxu0 0.0
        %3120 = vmatprep.subr.mxu0 0.0
        %3121 = vmatpush1.msra.mxu0 0.0
        %3122 = vmatprep.subr.mxu0 0.0
        %3123 = vmatpush1.msra.mxu0 0.0
        %3124 = vmatprep.subr.mxu0 0.0
        %3125 = vmatpush1.msra.mxu0 0.0
        %3126 = vmatprep.subr.mxu0 0.0
        %3127 = vmatpush1.msra.mxu0 0.0
        %3128 = vmatprep.subr.mxu0 0.0
        %3129 = vmatpush1.msra.mxu0 0.0
        %3130 = vmatprep.subr.mxu0 0.0
        %3131 = vmatpush1.msra.mxu0 0.0
        %3132 = vmatprep.subr.mxu0 0.0
        %3133 = vmatpush1.msra.mxu0 0.0
        %3134 = vmatprep.subr.mxu0 0.0
        %3135 = vmatpush1.msra.mxu0 0.0
        %3136 = vmatprep.subr.mxu0 0.0
        %3137 = vmatpush1.msra.mxu0 0.0
        %3138 = vmatprep.subr.mxu0 0.0
        %3139 = vmatpush1.msra.mxu0 0.0
        %3140 = vmatprep.subr.mxu0 0.0
        %3141 = vmatpush1.msra.mxu0 0.0
        %3142 = vmatprep.subr.mxu0 0.0
        %3143 = vmatpush1.msra.mxu0 0.0
        %3144 = vmatprep.subr.mxu0 0.0
        %3145 = vmatpush1.msra.mxu0 0.0
        %3146 = vmatprep.subr.mxu0 0.0
        %3147 = vmatpush1.msra.mxu0 0.0
        %3148 = vmatprep.subr.mxu0 0.0
        %3149 = vmatpush1.msra.mxu0 0.0
        %3150 = vmatprep.subr.mxu0 0.0
        %3151 = vmatpush1.msra.mxu0 0.0
        %3152 = vmatprep.subr.mxu0 0.0
        %3153 = vmatpush1.msra.mxu0 0.0
        %3154 = vmatprep.subr.mxu0 0.0
        %3155 = vmatpush1.msra.mxu0 0.0
        %3156 = vmatprep.mubr.f32.mxu0 0.0
        %3157 = vmatmul.mubr.f32.gmra.mrb[0].mxu0 %v3090
        %v3158 = vpop.f32.mrb[0].mxu0
        %v3159 = vadd.f32 %v3088, %v3158
        %v3160 = vpop.f32.mrb[0].mxu0
        %3161 = vdwg.mxu0
        %v3162 = vmax.f32 %v3159, 0.0
        %v3163 = vld [vmem:[#allocation5 + $0x4c0] ss:$0 sm:$0xff]
        %v3164 = vmul.f32 %v2905, %v3163
        %v3165 = vadd.f32 %v3164, %v3162
        %v3166 = vld [vmem:[#allocation5 + $0x4d0] sm:$0xf]
        %v3167 = vld [vmem:[#allocation2 + $0x198] sm:$0xff]
        %v3168 = vld [vmem:[#allocation2 + $0x1a0] sm:$0xff]
        %v3169 = vld [vmem:[#allocation2 + $0x1a8] sm:$0xff]
        %v3171 = vsel %vm2461, %v3167, 0
        %v3174 = vsel %vm2461, %v3168, 0
        %v3177 = vsel %vm2461, %v3169, 0
        %3179 = vmatprep.subr.mxu0 0.0
        %3180 = vmatpush1.msra.mxu0 %v3165
        %3181 = vmatprep.subr.mxu0 0.0
        %3182 = vmatpush1.msra.mxu0 0.0
        %3183 = vmatprep.subr.mxu0 0.0
        %3184 = vmatpush1.msra.mxu0 0.0
        %3185 = vmatprep.subr.mxu0 0.0
        %3186 = vmatpush1.msra.mxu0 0.0
        %3187 = vmatprep.subr.mxu0 0.0
        %3188 = vmatpush1.msra.mxu0 0.0
        %3189 = vmatprep.subr.mxu0 0.0
        %3190 = vmatpush1.msra.mxu0 0.0
        %3191 = vmatprep.subr.mxu0 0.0
        %3192 = vmatpush1.msra.mxu0 0.0
        %3193 = vmatprep.subr.mxu0 0.0
        %3194 = vmatpush1.msra.mxu0 0.0
        %3195 = vmatprep.subr.mxu0 0.0
        %3196 = vmatpush1.msra.mxu0 0.0
        %3197 = vmatprep.subr.mxu0 0.0
        %3198 = vmatpush1.msra.mxu0 0.0
        %3199 = vmatprep.subr.mxu0 0.0
        %3200 = vmatpush1.msra.mxu0 0.0
        %3201 = vmatprep.subr.mxu0 0.0
        %3202 = vmatpush1.msra.mxu0 0.0
        %3203 = vmatprep.subr.mxu0 0.0
        %3204 = vmatpush1.msra.mxu0 0.0
        %3205 = vmatprep.subr.mxu0 0.0
        %3206 = vmatpush1.msra.mxu0 0.0
        %3207 = vmatprep.subr.mxu0 0.0
        %3208 = vmatpush1.msra.mxu0 0.0
        %3209 = vmatprep.subr.mxu0 0.0
        %3210 = vmatpush1.msra.mxu0 0.0
        %3211 = vmatprep.subr.mxu0 0.0
        %3212 = vmatpush1.msra.mxu0 0.0
        %3213 = vmatprep.subr.mxu0 0.0
        %3214 = vmatpush1.msra.mxu0 0.0
        %3215 = vmatprep.subr.mxu0 0.0
        %3216 = vmatpush1.msra.mxu0 0.0
        %3217 = vmatprep.subr.mxu0 0.0
        %3218 = vmatpush1.msra.mxu0 0.0
        %3219 = vmatprep.subr.mxu0 0.0
        %3220 = vmatpush1.msra.mxu0 0.0
        %3221 = vmatprep.subr.mxu0 0.0
        %3222 = vmatpush1.msra.mxu0 0.0
        %3223 = vmatprep.subr.mxu0 0.0
        %3224 = vmatpush1.msra.mxu0 0.0
        %3225 = vmatprep.subr.mxu0 0.0
        %3226 = vmatpush1.msra.mxu0 0.0
        %3227 = vmatprep.subr.mxu0 0.0
        %3228 = vmatpush1.msra.mxu0 0.0
        %3229 = vmatprep.subr.mxu0 0.0
        %3230 = vmatpush1.msra.mxu0 0.0
        %3231 = vmatprep.subr.mxu0 0.0
        %3232 = vmatpush1.msra.mxu0 0.0
        %3233 = vmatprep.subr.mxu0 0.0
        %3234 = vmatpush1.msra.mxu0 0.0
        %3235 = vmatprep.subr.mxu0 0.0
        %3236 = vmatpush1.msra.mxu0 0.0
        %3237 = vmatprep.subr.mxu0 0.0
        %3238 = vmatpush1.msra.mxu0 0.0
        %3239 = vmatprep.subr.mxu0 0.0
        %3240 = vmatpush1.msra.mxu0 0.0
        %3241 = vmatprep.subr.mxu0 0.0
        %3242 = vmatpush1.msra.mxu0 0.0
        %3243 = vmatprep.mubr.f32.mxu0 0.0
        %3244 = vmatmul.mubr.f32.gmra.mrb[0].mxu0 %v3171
        %v3245 = vpop.f32.mrb[0].mxu0
        %v3246 = vadd.f32 0.0, %v3245
        %v3247 = vpop.f32.mrb[0].mxu0
        %3248 = vmatprep.mubr.f32.mxu0 0.0
        %3249 = vmatmul.mubr.f32.gmra.mrb[0].mxu0 %v3174
        %v3250 = vpop.f32.mrb[0].mxu0
        %v3251 = vadd.f32 0.0, %v3250
        %v3252 = vpop.f32.mrb[0].mxu0
        %3253 = vmatprep.mubr.f32.mxu0 0.0
        %3254 = vmatmul.mubr.f32.gmra.mrb[0].mxu0 %v3177
        %v3255 = vpop.f32.mrb[0].mxu0
        %v3256 = vadd.f32 0.0, %v3255
        %v3257 = vpop.f32.mrb[0].mxu0
        %3258 = vdwg.mxu0
        %v3259 = vlaneseq
        %v3260 = vshrl.u32 %v3259, 7
        %v3261 = vsub.s32 0, %v3260
        %v3262 = vrot.slane %v3166, %v3261
        %v3263 = vmul.f32 %v3246, %v3262
        %v3264 = vlaneseq
        %v3265 = vshrl.u32 %v3264, 7
        %v3266 = vsub.s32 1, %v3265
        %v3267 = vrot.slane %v3166, %v3266
        %v3268 = vmul.f32 %v3251, %v3267
        %v3269 = vadd.f32 %v3263, %v3268
        %v3270 = vlaneseq
        %v3271 = vshrl.u32 %v3270, 7
        %v3272 = vsub.s32 2, %v3271
        %v3273 = vrot.slane %v3166, %v3272
        %v3274 = vmul.f32 %v3256, %v3273
        %v3275 = vadd.f32 %v3269, %v3274
        %v3276 = vlaneseq
        %v3277 = vshrl.u32 %v3276, 7
        %v3278 = vsub.s32 3, %v3277
        %v3279 = vrot.slane %v3166, %v3278
        %v3280 = vadd.f32 %v3275, %v3279
        %v3281 = vld [vmem:[#allocation5 + $0x4e0] sm:$0xff]
        %v3282 = vld [vmem:[#allocation5 + $0x4f0] sm:$0xff]
        %v3283 = vld [vmem:[#allocation5 + $0x500] sm:$0xff]
        %v3284 = vld [vmem:[#allocation5 + $0x510] sm:$0xff]
        %v3285 = vld [vmem:[#allocation5 + $0x520] sm:$0xff]
        %v3286 = vld [vmem:[#allocation5 + $0x530] sm:$0xff]
        %v3287 = vld [vmem:[#allocation5 + $0x540] ss:$0 sm:$0xff]
        %v3289 = vsel %vm2383, %v3280, 0
        %3291 = vmatprep.subr.mxu0 0.0
        %3292 = vmatpush1.msra.mxu0 %v3281
        %3293 = vmatprep.subr.mxu0 0.0
        %3294 = vmatpush1.msra.mxu0 %v3282
        %3295 = vmatprep.subr.mxu0 0.0
        %3296 = vmatpush1.msra.mxu0 %v3283
        %3297 = vmatprep.subr.mxu0 0.0
        %3298 = vmatpush1.msra.mxu0 %v3284
        %3299 = vmatprep.subr.mxu0 0.0
        %3300 = vmatpush1.msra.mxu0 %v3285
        %3301 = vmatprep.subr.mxu0 0.0
        %3302 = vmatpush1.msra.mxu0 %v3286
        %3303 = vmatprep.subr.mxu0 0.0
        %3304 = vmatpush1.msra.mxu0 0.0
        %3305 = vmatprep.subr.mxu0 0.0
        %3306 = vmatpush1.msra.mxu0 0.0
        %3307 = vmatprep.subr.mxu0 0.0
        %3308 = vmatpush1.msra.mxu0 0.0
        %3309 = vmatprep.subr.mxu0 0.0
        %3310 = vmatpush1.msra.mxu0 0.0
        %3311 = vmatprep.subr.mxu0 0.0
        %3312 = vmatpush1.msra.mxu0 0.0
        %3313 = vmatprep.subr.mxu0 0.0
        %3314 = vmatpush1.msra.mxu0 0.0
        %3315 = vmatprep.subr.mxu0 0.0
        %3316 = vmatpush1.msra.mxu0 0.0
        %3317 = vmatprep.subr.mxu0 0.0
        %3318 = vmatpush1.msra.mxu0 0.0
        %3319 = vmatprep.subr.mxu0 0.0
        %3320 = vmatpush1.msra.mxu0 0.0
        %3321 = vmatprep.subr.mxu0 0.0
        %3322 = vmatpush1.msra.mxu0 0.0
        %3323 = vmatprep.subr.mxu0 0.0
        %3324 = vmatpush1.msra.mxu0 0.0
        %3325 = vmatprep.subr.mxu0 0.0
        %3326 = vmatpush1.msra.mxu0 0.0
        %3327 = vmatprep.subr.mxu0 0.0
        %3328 = vmatpush1.msra.mxu0 0.0
        %3329 = vmatprep.subr.mxu0 0.0
        %3330 = vmatpush1.msra.mxu0 0.0
        %3331 = vmatprep.subr.mxu0 0.0
        %3332 = vmatpush1.msra.mxu0 0.0
        %3333 = vmatprep.subr.mxu0 0.0
        %3334 = vmatpush1.msra.mxu0 0.0
        %3335 = vmatprep.subr.mxu0 0.0
        %3336 = vmatpush1.msra.mxu0 0.0
        %3337 = vmatprep.subr.mxu0 0.0
        %3338 = vmatpush1.msra.mxu0 0.0
        %3339 = vmatprep.subr.mxu0 0.0
        %3340 = vmatpush1.msra.mxu0 0.0
        %3341 = vmatprep.subr.mxu0 0.0
        %3342 = vmatpush1.msra.mxu0 0.0
        %3343 = vmatprep.subr.mxu0 0.0
        %3344 = vmatpush1.msra.mxu0 0.0
        %3345 = vmatprep.subr.mxu0 0.0
        %3346 = vmatpush1.msra.mxu0 0.0
        %3347 = vmatprep.subr.mxu0 0.0
        %3348 = vmatpush1.msra.mxu0 0.0
        %3349 = vmatprep.subr.mxu0 0.0
        %3350 = vmatpush1.msra.mxu0 0.0
        %3351 = vmatprep.subr.mxu0 0.0
        %3352 = vmatpush1.msra.mxu0 0.0
        %3353 = vmatprep.subr.mxu0 0.0
        %3354 = vmatpush1.msra.mxu0 0.0
        %3355 = vmatprep.mubr.f32.mxu0 0.0
        %3356 = vmatmul.mubr.f32.gmra.mrb[0].mxu0 %v3289
        %v3357 = vpop.f32.mrb[0].mxu0
        %v3358 = vadd.f32 %v3287, %v3357
        %v3359 = vpop.f32.mrb[0].mxu0
        %3360 = vdwg.mxu0
        %v3361 = vmax.f32 %v3358, 0.0
        %v3362 = vld [vmem:[#allocation5 + $0x550] sm:$0xff]
        %v3363 = vld [vmem:[#allocation5 + $0x560] sm:$0xff]
        %v3364 = vld [vmem:[#allocation5 + $0x570] sm:$0xff]
        %v3365 = vld [vmem:[#allocation5 + $0x580] sm:$0xff]
        %v3366 = vld [vmem:[#allocation5 + $0x590] sm:$0xff]
        %v3367 = vld [vmem:[#allocation5 + $0x5a0] sm:$0xff]
        %v3368 = vld [vmem:[#allocation5 + $0x5b0] ss:$0 sm:$0xff]
        %v3370 = vsel %vm2383, %v3165, 0
        %3372 = vmatprep.subr.mxu0 0.0
        %3373 = vmatpush1.msra.mxu0 %v3362
        %3374 = vmatprep.subr.mxu0 0.0
        %3375 = vmatpush1.msra.mxu0 %v3363
        %3376 = vmatprep.subr.mxu0 0.0
        %3377 = vmatpush1.msra.mxu0 %v3364
        %3378 = vmatprep.subr.mxu0 0.0
        %3379 = vmatpush1.msra.mxu0 %v3365
        %3380 = vmatprep.subr.mxu0 0.0
        %3381 = vmatpush1.msra.mxu0 %v3366
        %3382 = vmatprep.subr.mxu0 0.0
        %3383 = vmatpush1.msra.mxu0 %v3367
        %3384 = vmatprep.subr.mxu0 0.0
        %3385 = vmatpush1.msra.mxu0 0.0
        %3386 = vmatprep.subr.mxu0 0.0
        %3387 = vmatpush1.msra.mxu0 0.0
        %3388 = vmatprep.subr.mxu0 0.0
        %3389 = vmatpush1.msra.mxu0 0.0
        %3390 = vmatprep.subr.mxu0 0.0
        %3391 = vmatpush1.msra.mxu0 0.0
        %3392 = vmatprep.subr.mxu0 0.0
        %3393 = vmatpush1.msra.mxu0 0.0
        %3394 = vmatprep.subr.mxu0 0.0
        %3395 = vmatpush1.msra.mxu0 0.0
        %3396 = vmatprep.subr.mxu0 0.0
        %3397 = vmatpush1.msra.mxu0 0.0
        %3398 = vmatprep.subr.mxu0 0.0
        %3399 = vmatpush1.msra.mxu0 0.0
        %3400 = vmatprep.subr.mxu0 0.0
        %3401 = vmatpush1.msra.mxu0 0.0
        %3402 = vmatprep.subr.mxu0 0.0
        %3403 = vmatpush1.msra.mxu0 0.0
        %3404 = vmatprep.subr.mxu0 0.0
        %3405 = vmatpush1.msra.mxu0 0.0
        %3406 = vmatprep.subr.mxu0 0.0
        %3407 = vmatpush1.msra.mxu0 0.0
        %3408 = vmatprep.subr.mxu0 0.0
        %3409 = vmatpush1.msra.mxu0 0.0
        %3410 = vmatprep.subr.mxu0 0.0
        %3411 = vmatpush1.msra.mxu0 0.0
        %3412 = vmatprep.subr.mxu0 0.0
        %3413 = vmatpush1.msra.mxu0 0.0
        %3414 = vmatprep.subr.mxu0 0.0
        %3415 = vmatpush1.msra.mxu0 0.0
        %3416 = vmatprep.subr.mxu0 0.0
        %3417 = vmatpush1.msra.mxu0 0.0
        %3418 = vmatprep.subr.mxu0 0.0
        %3419 = vmatpush1.msra.mxu0 0.0
        %3420 = vmatprep.subr.mxu0 0.0
        %3421 = vmatpush1.msra.mxu0 0.0
        %3422 = vmatprep.subr.mxu0 0.0
        %3423 = vmatpush1.msra.mxu0 0.0
        %3424 = vmatprep.subr.mxu0 0.0
        %3425 = vmatpush1.msra.mxu0 0.0
        %3426 = vmatprep.subr.mxu0 0.0
        %3427 = vmatpush1.msra.mxu0 0.0
        %3428 = vmatprep.subr.mxu0 0.0
        %3429 = vmatpush1.msra.mxu0 0.0
        %3430 = vmatprep.subr.mxu0 0.0
        %3431 = vmatpush1.msra.mxu0 0.0
        %3432 = vmatprep.subr.mxu0 0.0
        %3433 = vmatpush1.msra.mxu0 0.0
        %3434 = vmatprep.subr.mxu0 0.0
        %3435 = vmatpush1.msra.mxu0 0.0
        %3436 = vmatprep.mubr.f32.mxu0 0.0
        %3437 = vmatmul.mubr.f32.gmra.mrb[0].mxu0 %v3370
        %v3438 = vpop.f32.mrb[0].mxu0
        %v3439 = vadd.f32 %v3368, %v3438
        %v3440 = vpop.f32.mrb[0].mxu0
        %3441 = vdwg.mxu0
        %v3442 = vmax.f32 %v3439, 0.0
        %v3443 = vld [vmem:[#allocation5 + $0x5c0] sm:$0xf]
        %3444 = vmatprep.subr.mxu0 0.0
        %3445 = vmatpush1.msra.mxu0 %v3442
        %3446 = vmatprep.subr.mxu0 0.0
        %3447 = vmatpush1.msra.mxu0 0.0
        %3448 = vmatprep.subr.mxu0 0.0
        %3449 = vmatpush1.msra.mxu0 0.0
        %3450 = vmatprep.subr.mxu0 0.0
        %3451 = vmatpush1.msra.mxu0 0.0
        %3452 = vmatprep.subr.mxu0 0.0
        %3453 = vmatpush1.msra.mxu0 0.0
        %3454 = vmatprep.subr.mxu0 0.0
        %3455 = vmatpush1.msra.mxu0 0.0
        %3456 = vmatprep.subr.mxu0 0.0
        %3457 = vmatpush1.msra.mxu0 0.0
        %3458 = vmatprep.subr.mxu0 0.0
        %3459 = vmatpush1.msra.mxu0 0.0
        %3460 = vmatprep.subr.mxu0 0.0
        %3461 = vmatpush1.msra.mxu0 0.0
        %3462 = vmatprep.subr.mxu0 0.0
        %3463 = vmatpush1.msra.mxu0 0.0
        %3464 = vmatprep.subr.mxu0 0.0
        %3465 = vmatpush1.msra.mxu0 0.0
        %3466 = vmatprep.subr.mxu0 0.0
        %3467 = vmatpush1.msra.mxu0 0.0
        %3468 = vmatprep.subr.mxu0 0.0
        %3469 = vmatpush1.msra.mxu0 0.0
        %3470 = vmatprep.subr.mxu0 0.0
        %3471 = vmatpush1.msra.mxu0 0.0
        %3472 = vmatprep.subr.mxu0 0.0
        %3473 = vmatpush1.msra.mxu0 0.0
        %3474 = vmatprep.subr.mxu0 0.0
        %3475 = vmatpush1.msra.mxu0 0.0
        %3476 = vmatprep.subr.mxu0 0.0
        %3477 = vmatpush1.msra.mxu0 0.0
        %3478 = vmatprep.subr.mxu0 0.0
        %3479 = vmatpush1.msra.mxu0 0.0
        %3480 = vmatprep.subr.mxu0 0.0
        %3481 = vmatpush1.msra.mxu0 0.0
        %3482 = vmatprep.subr.mxu0 0.0
        %3483 = vmatpush1.msra.mxu0 0.0
        %3484 = vmatprep.subr.mxu0 0.0
        %3485 = vmatpush1.msra.mxu0 0.0
        %3486 = vmatprep.subr.mxu0 0.0
        %3487 = vmatpush1.msra.mxu0 0.0
        %3488 = vmatprep.subr.mxu0 0.0
        %3489 = vmatpush1.msra.mxu0 0.0
        %3490 = vmatprep.subr.mxu0 0.0
        %3491 = vmatpush1.msra.mxu0 0.0
        %3492 = vmatprep.subr.mxu0 0.0
        %3493 = vmatpush1.msra.mxu0 0.0
        %3494 = vmatprep.subr.mxu0 0.0
        %3495 = vmatpush1.msra.mxu0 0.0
        %3496 = vmatprep.subr.mxu0 0.0
        %3497 = vmatpush1.msra.mxu0 0.0
        %3498 = vmatprep.subr.mxu0 0.0
        %3499 = vmatpush1.msra.mxu0 0.0
        %3500 = vmatprep.subr.mxu0 0.0
        %3501 = vmatpush1.msra.mxu0 0.0
        %3502 = vmatprep.subr.mxu0 0.0
        %3503 = vmatpush1.msra.mxu0 0.0
        %3504 = vmatprep.subr.mxu0 0.0
        %3505 = vmatpush1.msra.mxu0 0.0
        %3506 = vmatprep.subr.mxu0 0.0
        %3507 = vmatpush1.msra.mxu0 0.0
        %3508 = vmatprep.mubr.f32.mxu0 0.0
        %3509 = vmatmul.mubr.f32.gmra.mrb[0].mxu0 %v3171
        %v3510 = vpop.f32.mrb[0].mxu0
        %v3511 = vadd.f32 0.0, %v3510
        %v3512 = vpop.f32.mrb[0].mxu0
        %3513 = vmatprep.mubr.f32.mxu0 0.0
        %3514 = vmatmul.mubr.f32.gmra.mrb[0].mxu0 %v3174
        %v3515 = vpop.f32.mrb[0].mxu0
        %v3516 = vadd.f32 0.0, %v3515
        %v3517 = vpop.f32.mrb[0].mxu0
        %3518 = vmatprep.mubr.f32.mxu0 0.0
        %3519 = vmatmul.mubr.f32.gmra.mrb[0].mxu0 %v3177
        %v3520 = vpop.f32.mrb[0].mxu0
        %v3521 = vadd.f32 0.0, %v3520
        %v3522 = vpop.f32.mrb[0].mxu0
        %3523 = vdwg.mxu0
        %v3524 = vlaneseq
        %v3525 = vshrl.u32 %v3524, 7
        %v3526 = vsub.s32 0, %v3525
        %v3527 = vrot.slane %v3443, %v3526
        %v3528 = vmul.f32 %v3511, %v3527
        %v3529 = vlaneseq
        %v3530 = vshrl.u32 %v3529, 7
        %v3531 = vsub.s32 1, %v3530
        %v3532 = vrot.slane %v3443, %v3531
        %v3533 = vmul.f32 %v3516, %v3532
        %v3534 = vadd.f32 %v3528, %v3533
        %v3535 = vlaneseq
        %v3536 = vshrl.u32 %v3535, 7
        %v3537 = vsub.s32 2, %v3536
        %v3538 = vrot.slane %v3443, %v3537
        %v3539 = vmul.f32 %v3521, %v3538
        %v3540 = vadd.f32 %v3534, %v3539
        %v3541 = vlaneseq
        %v3542 = vshrl.u32 %v3541, 7
        %v3543 = vsub.s32 3, %v3542
        %v3544 = vrot.slane %v3443, %v3543
        %v3545 = vadd.f32 %v3540, %v3544
        %v3546 = vld [vmem:[#allocation5 + $0x5d0] sm:$0xff]
        %v3547 = vld [vmem:[#allocation5 + $0x5e0] sm:$0xff]
        %v3548 = vld [vmem:[#allocation5 + $0x5f0] sm:$0xff]
        %v3549 = vld [vmem:[#allocation5 + $0x600] sm:$0xff]
        %v3550 = vld [vmem:[#allocation5 + $0x610] sm:$0xff]
        %v3551 = vld [vmem:[#allocation5 + $0x620] sm:$0xff]
        %v3552 = vld [vmem:[#allocation5 + $0x630] ss:$0 sm:$0xff]
        %v3554 = vsel %vm2383, %v3545, 0
        %3556 = vmatprep.subr.mxu0 0.0
        %3557 = vmatpush1.msra.mxu0 %v3546
        %3558 = vmatprep.subr.mxu0 0.0
        %3559 = vmatpush1.msra.mxu0 %v3547
        %3560 = vmatprep.subr.mxu0 0.0
        %3561 = vmatpush1.msra.mxu0 %v3548
        %3562 = vmatprep.subr.mxu0 0.0
        %3563 = vmatpush1.msra.mxu0 %v3549
        %3564 = vmatprep.subr.mxu0 0.0
        %3565 = vmatpush1.msra.mxu0 %v3550
        %3566 = vmatprep.subr.mxu0 0.0
        %3567 = vmatpush1.msra.mxu0 %v3551
        %3568 = vmatprep.subr.mxu0 0.0
        %3569 = vmatpush1.msra.mxu0 0.0
        %3570 = vmatprep.subr.mxu0 0.0
        %3571 = vmatpush1.msra.mxu0 0.0
        %3572 = vmatprep.subr.mxu0 0.0
        %3573 = vmatpush1.msra.mxu0 0.0
        %3574 = vmatprep.subr.mxu0 0.0
        %3575 = vmatpush1.msra.mxu0 0.0
        %3576 = vmatprep.subr.mxu0 0.0
        %3577 = vmatpush1.msra.mxu0 0.0
        %3578 = vmatprep.subr.mxu0 0.0
        %3579 = vmatpush1.msra.mxu0 0.0
        %3580 = vmatprep.subr.mxu0 0.0
        %3581 = vmatpush1.msra.mxu0 0.0
        %3582 = vmatprep.subr.mxu0 0.0
        %3583 = vmatpush1.msra.mxu0 0.0
        %3584 = vmatprep.subr.mxu0 0.0
        %3585 = vmatpush1.msra.mxu0 0.0
        %3586 = vmatprep.subr.mxu0 0.0
        %3587 = vmatpush1.msra.mxu0 0.0
        %3588 = vmatprep.subr.mxu0 0.0
        %3589 = vmatpush1.msra.mxu0 0.0
        %3590 = vmatprep.subr.mxu0 0.0
        %3591 = vmatpush1.msra.mxu0 0.0
        %3592 = vmatprep.subr.mxu0 0.0
        %3593 = vmatpush1.msra.mxu0 0.0
        %3594 = vmatprep.subr.mxu0 0.0
        %3595 = vmatpush1.msra.mxu0 0.0
        %3596 = vmatprep.subr.mxu0 0.0
        %3597 = vmatpush1.msra.mxu0 0.0
        %3598 = vmatprep.subr.mxu0 0.0
        %3599 = vmatpush1.msra.mxu0 0.0
        %3600 = vmatprep.subr.mxu0 0.0
        %3601 = vmatpush1.msra.mxu0 0.0
        %3602 = vmatprep.subr.mxu0 0.0
        %3603 = vmatpush1.msra.mxu0 0.0
        %3604 = vmatprep.subr.mxu0 0.0
        %3605 = vmatpush1.msra.mxu0 0.0
        %3606 = vmatprep.subr.mxu0 0.0
        %3607 = vmatpush1.msra.mxu0 0.0
        %3608 = vmatprep.subr.mxu0 0.0
        %3609 = vmatpush1.msra.mxu0 0.0
        %3610 = vmatprep.subr.mxu0 0.0
        %3611 = vmatpush1.msra.mxu0 0.0
        %3612 = vmatprep.subr.mxu0 0.0
        %3613 = vmatpush1.msra.mxu0 0.0
        %3614 = vmatprep.subr.mxu0 0.0
        %3615 = vmatpush1.msra.mxu0 0.0
        %3616 = vmatprep.subr.mxu0 0.0
        %3617 = vmatpush1.msra.mxu0 0.0
        %3618 = vmatprep.subr.mxu0 0.0
        %3619 = vmatpush1.msra.mxu0 0.0
        %3620 = vmatprep.mubr.f32.mxu0 0.0
        %3621 = vmatmul.mubr.f32.gmra.mrb[0].mxu0 %v3554
        %v3622 = vpop.f32.mrb[0].mxu0
        %v3623 = vadd.f32 %v3552, %v3622
        %v3624 = vpop.f32.mrb[0].mxu0
        %3625 = vdwg.mxu0
        %v3626 = vmax.f32 %v3623, 0.0
        %v3627 = vadd.f32 %v3361, %v3626
        %v3628 = vld [vmem:[#allocation5 + $0x640] sm:$0xff]
        %v3629 = vld [vmem:[#allocation5 + $0x650] sm:$0xff]
        %v3630 = vld [vmem:[#allocation5 + $0x660] sm:$0xff]
        %v3631 = vld [vmem:[#allocation5 + $0x670] sm:$0xff]
        %v3632 = vld [vmem:[#allocation5 + $0x680] sm:$0xff]
        %v3633 = vld [vmem:[#allocation5 + $0x690] sm:$0xff]
        %v3634 = vld [vmem:[#allocation5 + $0x6a0] sm:$0xff]
        %v3635 = vld [vmem:[#allocation5 + $0x6b0] sm:$0xff]
        %v3636 = vld [vmem:[#allocation5 + $0x6c0] sm:$0xff]
        %v3637 = vld [vmem:[#allocation5 + $0x6d0] sm:$0xff]
        %v3638 = vld [vmem:[#allocation5 + $0x6e0] sm:$0xff]
        %v3639 = vld [vmem:[#allocation5 + $0x6f0] sm:$0xff]
        %v3640 = vld [vmem:[#allocation5 + $0x700] ss:$0 sm:$0xff]
        %vm3641 = vcmask 785408
        %v3643 = vsel %vm3641, %v3627, 0
        %3645 = vmatprep.subr.mxu0 0.0
        %3646 = vmatpush1.msra.mxu0 %v3628
        %3647 = vmatprep.subr.mxu0 0.0
        %3648 = vmatpush1.msra.mxu0 %v3629
        %3649 = vmatprep.subr.mxu0 0.0
        %3650 = vmatpush1.msra.mxu0 %v3630
        %3651 = vmatprep.subr.mxu0 0.0
        %3652 = vmatpush1.msra.mxu0 %v3631
        %3653 = vmatprep.subr.mxu0 0.0
        %3654 = vmatpush1.msra.mxu0 %v3632
        %3655 = vmatprep.subr.mxu0 0.0
        %3656 = vmatpush1.msra.mxu0 %v3633
        %3657 = vmatprep.subr.mxu0 0.0
        %3658 = vmatpush1.msra.mxu0 %v3634
        %3659 = vmatprep.subr.mxu0 0.0
        %3660 = vmatpush1.msra.mxu0 %v3635
        %3661 = vmatprep.subr.mxu0 0.0
        %3662 = vmatpush1.msra.mxu0 %v3636
        %3663 = vmatprep.subr.mxu0 0.0
        %3664 = vmatpush1.msra.mxu0 %v3637
        %3665 = vmatprep.subr.mxu0 0.0
        %3666 = vmatpush1.msra.mxu0 %v3638
        %3667 = vmatprep.subr.mxu0 0.0
        %3668 = vmatpush1.msra.mxu0 %v3639
        %3669 = vmatprep.subr.mxu0 0.0
        %3670 = vmatpush1.msra.mxu0 0.0
        %3671 = vmatprep.subr.mxu0 0.0
        %3672 = vmatpush1.msra.mxu0 0.0
        %3673 = vmatprep.subr.mxu0 0.0
        %3674 = vmatpush1.msra.mxu0 0.0
        %3675 = vmatprep.subr.mxu0 0.0
        %3676 = vmatpush1.msra.mxu0 0.0
        %3677 = vmatprep.subr.mxu0 0.0
        %3678 = vmatpush1.msra.mxu0 0.0
        %3679 = vmatprep.subr.mxu0 0.0
        %3680 = vmatpush1.msra.mxu0 0.0
        %3681 = vmatprep.subr.mxu0 0.0
        %3682 = vmatpush1.msra.mxu0 0.0
        %3683 = vmatprep.subr.mxu0 0.0
        %3684 = vmatpush1.msra.mxu0 0.0
        %3685 = vmatprep.subr.mxu0 0.0
        %3686 = vmatpush1.msra.mxu0 0.0
        %3687 = vmatprep.subr.mxu0 0.0
        %3688 = vmatpush1.msra.mxu0 0.0
        %3689 = vmatprep.subr.mxu0 0.0
        %3690 = vmatpush1.msra.mxu0 0.0
        %3691 = vmatprep.subr.mxu0 0.0
        %3692 = vmatpush1.msra.mxu0 0.0
        %3693 = vmatprep.subr.mxu0 0.0
        %3694 = vmatpush1.msra.mxu0 0.0
        %3695 = vmatprep.subr.mxu0 0.0
        %3696 = vmatpush1.msra.mxu0 0.0
        %3697 = vmatprep.subr.mxu0 0.0
        %3698 = vmatpush1.msra.mxu0 0.0
        %3699 = vmatprep.subr.mxu0 0.0
        %3700 = vmatpush1.msra.mxu0 0.0
        %3701 = vmatprep.subr.mxu0 0.0
        %3702 = vmatpush1.msra.mxu0 0.0
        %3703 = vmatprep.subr.mxu0 0.0
        %3704 = vmatpush1.msra.mxu0 0.0
        %3705 = vmatprep.subr.mxu0 0.0
        %3706 = vmatpush1.msra.mxu0 0.0
        %3707 = vmatprep.subr.mxu0 0.0
        %3708 = vmatpush1.msra.mxu0 0.0
        %3709 = vmatprep.mubr.f32.mxu0 0.0
        %3710 = vmatmul.mubr.f32.gmra.mrb[0].mxu0 %v3643
        %v3711 = vpop.f32.mrb[0].mxu0
        %v3712 = vadd.f32 %v3640, %v3711
        %v3713 = vpop.f32.mrb[0].mxu0
        %3714 = vdwg.mxu0
        %v3715 = vmax.f32 %v3712, 0.0
        %v3716 = vld [vmem:[#allocation5 + $0x710] sm:$0xf]
        %v3717 = vld [vmem:[#allocation2 + $0x1b0] sm:$0xff]
        %v3718 = vld [vmem:[#allocation2 + $0x1b8] sm:$0xff]
        %vm3719 = vcmask 31744
        %v3721 = vsel %vm3719, %v3717, 0
        %v3724 = vsel %vm3719, %v3718, 0
        %v3727 = vsel %vm1198, %v3715, 0
        %3729 = vmatprep.subr.mxu0 0.0
        %3730 = vmatpush1.msra.mxu0 %v3727
        %3731 = vmatprep.subr.mxu0 0.0
        %3732 = vmatpush1.msra.mxu0 0.0
        %3733 = vmatprep.subr.mxu0 0.0
        %3734 = vmatpush1.msra.mxu0 0.0
        %3735 = vmatprep.subr.mxu0 0.0
        %3736 = vmatpush1.msra.mxu0 0.0
        %3737 = vmatprep.subr.mxu0 0.0
        %3738 = vmatpush1.msra.mxu0 0.0
        %3739 = vmatprep.subr.mxu0 0.0
        %3740 = vmatpush1.msra.mxu0 0.0
        %3741 = vmatprep.subr.mxu0 0.0
        %3742 = vmatpush1.msra.mxu0 0.0
        %3743 = vmatprep.subr.mxu0 0.0
        %3744 = vmatpush1.msra.mxu0 0.0
        %3745 = vmatprep.subr.mxu0 0.0
        %3746 = vmatpush1.msra.mxu0 0.0
        %3747 = vmatprep.subr.mxu0 0.0
        %3748 = vmatpush1.msra.mxu0 0.0
        %3749 = vmatprep.subr.mxu0 0.0
        %3750 = vmatpush1.msra.mxu0 0.0
        %3751 = vmatprep.subr.mxu0 0.0
        %3752 = vmatpush1.msra.mxu0 0.0
        %3753 = vmatprep.subr.mxu0 0.0
        %3754 = vmatpush1.msra.mxu0 0.0
        %3755 = vmatprep.subr.mxu0 0.0
        %3756 = vmatpush1.msra.mxu0 0.0
        %3757 = vmatprep.subr.mxu0 0.0
        %3758 = vmatpush1.msra.mxu0 0.0
        %3759 = vmatprep.subr.mxu0 0.0
        %3760 = vmatpush1.msra.mxu0 0.0
        %3761 = vmatprep.subr.mxu0 0.0
        %3762 = vmatpush1.msra.mxu0 0.0
        %3763 = vmatprep.subr.mxu0 0.0
        %3764 = vmatpush1.msra.mxu0 0.0
        %3765 = vmatprep.subr.mxu0 0.0
        %3766 = vmatpush1.msra.mxu0 0.0
        %3767 = vmatprep.subr.mxu0 0.0
        %3768 = vmatpush1.msra.mxu0 0.0
        %3769 = vmatprep.subr.mxu0 0.0
        %3770 = vmatpush1.msra.mxu0 0.0
        %3771 = vmatprep.subr.mxu0 0.0
        %3772 = vmatpush1.msra.mxu0 0.0
        %3773 = vmatprep.subr.mxu0 0.0
        %3774 = vmatpush1.msra.mxu0 0.0
        %3775 = vmatprep.subr.mxu0 0.0
        %3776 = vmatpush1.msra.mxu0 0.0
        %3777 = vmatprep.subr.mxu0 0.0
        %3778 = vmatpush1.msra.mxu0 0.0
        %3779 = vmatprep.subr.mxu0 0.0
        %3780 = vmatpush1.msra.mxu0 0.0
        %3781 = vmatprep.subr.mxu0 0.0
        %3782 = vmatpush1.msra.mxu0 0.0
        %3783 = vmatprep.subr.mxu0 0.0
        %3784 = vmatpush1.msra.mxu0 0.0
        %3785 = vmatprep.subr.mxu0 0.0
        %3786 = vmatpush1.msra.mxu0 0.0
        %3787 = vmatprep.subr.mxu0 0.0
        %3788 = vmatpush1.msra.mxu0 0.0
        %3789 = vmatprep.subr.mxu0 0.0
        %3790 = vmatpush1.msra.mxu0 0.0
        %3791 = vmatprep.subr.mxu0 0.0
        %3792 = vmatpush1.msra.mxu0 0.0
        %3793 = vmatprep.mubr.f32.mxu0 0.0
        %3794 = vmatmul.mubr.f32.gmra.mrb[0].mxu0 %v3721
        %v3795 = vpop.f32.mrb[0].mxu0
        %v3796 = vadd.f32 0.0, %v3795
        %v3797 = vpop.f32.mrb[0].mxu0
        %3798 = vmatprep.mubr.f32.mxu0 0.0
        %3799 = vmatmul.mubr.f32.gmra.mrb[0].mxu0 %v3724
        %v3800 = vpop.f32.mrb[0].mxu0
        %v3801 = vadd.f32 0.0, %v3800
        %v3802 = vpop.f32.mrb[0].mxu0
        %3803 = vdwg.mxu0
        %v3804 = vlaneseq
        %v3805 = vshrl.u32 %v3804, 7
        %v3806 = vsub.s32 0, %v3805
        %v3807 = vrot.slane %v3716, %v3806
        %v3808 = vmul.f32 %v3796, %v3807
        %v3809 = vlaneseq
        %v3810 = vshrl.u32 %v3809, 7
        %v3811 = vsub.s32 1, %v3810
        %v3812 = vrot.slane %v3716, %v3811
        %v3813 = vmul.f32 %v3715, %v3812
        %v3814 = vadd.f32 %v3808, %v3813
        %v3815 = vlaneseq
        %v3816 = vshrl.u32 %v3815, 7
        %v3817 = vsub.s32 2, %v3816
        %v3818 = vrot.slane %v3716, %v3817
        %v3819 = vmul.f32 %v3801, %v3818
        %v3820 = vadd.f32 %v3814, %v3819
        %v3821 = vlaneseq
        %v3822 = vshrl.u32 %v3821, 7
        %v3823 = vsub.s32 3, %v3822
        %v3824 = vrot.slane %v3716, %v3823
        %v3825 = vadd.f32 %v3820, %v3824
        %v3826 = vld [vmem:[#allocation5 + $0x720] sm:$0xff]
        %v3827 = vld [vmem:[#allocation5 + $0x730] sm:$0xff]
        %v3828 = vld [vmem:[#allocation5 + $0x740] sm:$0xff]
        %v3829 = vld [vmem:[#allocation5 + $0x750] sm:$0xff]
        %v3830 = vld [vmem:[#allocation5 + $0x760] sm:$0xff]
        %v3831 = vld [vmem:[#allocation5 + $0x770] sm:$0xff]
        %v3832 = vld [vmem:[#allocation5 + $0x780] ss:$0 sm:$0xff]
        %v3834 = vsel %vm2383, %v3825, 0
        %3836 = vmatprep.subr.mxu0 0.0
        %3837 = vmatpush1.msra.mxu0 %v3826
        %3838 = vmatprep.subr.mxu0 0.0
        %3839 = vmatpush1.msra.mxu0 %v3827
        %3840 = vmatprep.subr.mxu0 0.0
        %3841 = vmatpush1.msra.mxu0 %v3828
        %3842 = vmatprep.subr.mxu0 0.0
        %3843 = vmatpush1.msra.mxu0 %v3829
        %3844 = vmatprep.subr.mxu0 0.0
        %3845 = vmatpush1.msra.mxu0 %v3830
        %3846 = vmatprep.subr.mxu0 0.0
        %3847 = vmatpush1.msra.mxu0 %v3831
        %3848 = vmatprep.subr.mxu0 0.0
        %3849 = vmatpush1.msra.mxu0 0.0
        %3850 = vmatprep.subr.mxu0 0.0
        %3851 = vmatpush1.msra.mxu0 0.0
        %3852 = vmatprep.subr.mxu0 0.0
        %3853 = vmatpush1.msra.mxu0 0.0
        %3854 = vmatprep.subr.mxu0 0.0
        %3855 = vmatpush1.msra.mxu0 0.0
        %3856 = vmatprep.subr.mxu0 0.0
        %3857 = vmatpush1.msra.mxu0 0.0
        %3858 = vmatprep.subr.mxu0 0.0
        %3859 = vmatpush1.msra.mxu0 0.0
        %3860 = vmatprep.subr.mxu0 0.0
        %3861 = vmatpush1.msra.mxu0 0.0
        %3862 = vmatprep.subr.mxu0 0.0
        %3863 = vmatpush1.msra.mxu0 0.0
        %3864 = vmatprep.subr.mxu0 0.0
        %3865 = vmatpush1.msra.mxu0 0.0
        %3866 = vmatprep.subr.mxu0 0.0
        %3867 = vmatpush1.msra.mxu0 0.0
        %3868 = vmatprep.subr.mxu0 0.0
        %3869 = vmatpush1.msra.mxu0 0.0
        %3870 = vmatprep.subr.mxu0 0.0
        %3871 = vmatpush1.msra.mxu0 0.0
        %3872 = vmatprep.subr.mxu0 0.0
        %3873 = vmatpush1.msra.mxu0 0.0
        %3874 = vmatprep.subr.mxu0 0.0
        %3875 = vmatpush1.msra.mxu0 0.0
        %3876 = vmatprep.subr.mxu0 0.0
        %3877 = vmatpush1.msra.mxu0 0.0
        %3878 = vmatprep.subr.mxu0 0.0
        %3879 = vmatpush1.msra.mxu0 0.0
        %3880 = vmatprep.subr.mxu0 0.0
        %3881 = vmatpush1.msra.mxu0 0.0
        %3882 = vmatprep.subr.mxu0 0.0
        %3883 = vmatpush1.msra.mxu0 0.0
        %3884 = vmatprep.subr.mxu0 0.0
        %3885 = vmatpush1.msra.mxu0 0.0
        %3886 = vmatprep.subr.mxu0 0.0
        %3887 = vmatpush1.msra.mxu0 0.0
        %3888 = vmatprep.subr.mxu0 0.0
        %3889 = vmatpush1.msra.mxu0 0.0
        %3890 = vmatprep.subr.mxu0 0.0
        %3891 = vmatpush1.msra.mxu0 0.0
        %3892 = vmatprep.subr.mxu0 0.0
        %3893 = vmatpush1.msra.mxu0 0.0
        %3894 = vmatprep.subr.mxu0 0.0
        %3895 = vmatpush1.msra.mxu0 0.0
        %3896 = vmatprep.subr.mxu0 0.0
        %3897 = vmatpush1.msra.mxu0 0.0
        %3898 = vmatprep.subr.mxu0 0.0
        %3899 = vmatpush1.msra.mxu0 0.0
        %3900 = vmatprep.mubr.f32.mxu0 0.0
        %3901 = vmatmul.mubr.f32.gmra.mrb[0].mxu0 %v3834
        %v3902 = vpop.f32.mrb[0].mxu0
        %v3903 = vadd.f32 %v3832, %v3902
        %v3904 = vpop.f32.mrb[0].mxu0
        %3905 = vdwg.mxu0
        %v3906 = vmax.f32 %v3903, 0.0
        %v3907 = vld [vmem:[#allocation5 + $0x790] ss:$0 sm:$0xff]
        %v3908 = vmul.f32 %v3627, %v3907
        %v3909 = vadd.f32 %v3908, %v3906
        %v3910 = vld [vmem:[#allocation5 + $0x7a0] sm:$0xff]
        %v3911 = vld [vmem:[#allocation5 + $0x7a8] sm:$0xff]
        %v3912 = vld [vmem:[#allocation5 + $0x7b0] sm:$0xff]
        %v3913 = vld [vmem:[#allocation5 + $0x7b8] sm:$0xff]
        %v3914 = vld [vmem:[#allocation5 + $0x7c0] sm:$0xff]
        %v3915 = vld [vmem:[#allocation5 + $0x7c8] sm:$0xff]
        %v3916 = vld [vmem:[#allocation5 + $0x7d0] sm:$0xff]
        %v3917 = vld [vmem:[#allocation5 + $0x7d8] sm:$0xff]
        %v3918 = vld [vmem:[#allocation5 + $0x7e0] sm:$0xff]
        %v3919 = vld [vmem:[#allocation5 + $0x7e8] sm:$0xff]
        %v3920 = vld [vmem:[#allocation5 + $0x7f0] sm:$0xff]
        %v3921 = vld [vmem:[#allocation5 + $0x7f8] sm:$0xff]
        %v3922 = vld [vmem:[#allocation5 + $0x800] sm:$0xff]
        %v3923 = vld [vmem:[#allocation5 + $0x808] sm:$0xff]
        %v3924 = vld [vmem:[#allocation5 + $0x810] sm:$0xff]
        %v3925 = vld [vmem:[#allocation5 + $0x818] sm:$0xff]
        %v3926 = vld [vmem:[#allocation5 + $0x820] sm:$0xff]
        %v3927 = vld [vmem:[#allocation5 + $0x828] sm:$0xff]
        %v3928 = vld [vmem:[#allocation5 + $0x830] sm:$0xff]
        %v3929 = vld [vmem:[#allocation5 + $0x838] sm:$0xff]
        %v3930 = vld [vmem:[#allocation5 + $0x840] sm:$0xff]
        %v3931 = vld [vmem:[#allocation5 + $0x848] sm:$0xff]
        %v3932 = vld [vmem:[#allocation5 + $0x850] sm:$0xff]
        %v3933 = vld [vmem:[#allocation5 + $0x858] sm:$0xff]
        %s3934 = scalar_lea.vmem [#allocation5], 2144
        %v3935 = vld [vmem:[%s3934] ss:$8 sm:$0x3]
        %v3937 = vlaneseq
        %v3938 = vshrl.u32 %v3937, 7
        %v3939 = vsub.s32 0, %v3938
        %v3940 = vrot.slane %v3935, %v3939
        %v3941 = vlaneseq
        %v3942 = vshrl.u32 %v3941, 7
        %v3943 = vsub.s32 1, %v3942
        %v3944 = vrot.slane %v3935, %v3943
        %v3948 = vsel %vm3641, %v3909, 0
        %3950 = vmatprep.subr.mxu0 %v3911
        %3951 = vmatpush1.msra.mxu0 %v3910
        %3952 = vmatprep.subr.mxu0 %v3913
        %3953 = vmatpush1.msra.mxu0 %v3912
        %3954 = vmatprep.subr.mxu0 %v3915
        %3955 = vmatpush1.msra.mxu0 %v3914
        %3956 = vmatprep.subr.mxu0 %v3917
        %3957 = vmatpush1.msra.mxu0 %v3916
        %3958 = vmatprep.subr.mxu0 %v3919
        %3959 = vmatpush1.msra.mxu0 %v3918
        %3960 = vmatprep.subr.mxu0 %v3921
        %3961 = vmatpush1.msra.mxu0 %v3920
        %3962 = vmatprep.subr.mxu0 %v3923
        %3963 = vmatpush1.msra.mxu0 %v3922
        %3964 = vmatprep.subr.mxu0 %v3925
        %3965 = vmatpush1.msra.mxu0 %v3924
        %3966 = vmatprep.subr.mxu0 %v3927
        %3967 = vmatpush1.msra.mxu0 %v3926
        %3968 = vmatprep.subr.mxu0 %v3929
        %3969 = vmatpush1.msra.mxu0 %v3928
        %3970 = vmatprep.subr.mxu0 %v3931
        %3971 = vmatpush1.msra.mxu0 %v3930
        %3972 = vmatprep.subr.mxu0 %v3933
        %3973 = vmatpush1.msra.mxu0 %v3932
        %3974 = vmatprep.subr.mxu0 0.0
        %3975 = vmatpush1.msra.mxu0 0.0
        %3976 = vmatprep.subr.mxu0 0.0
        %3977 = vmatpush1.msra.mxu0 0.0
        %3978 = vmatprep.subr.mxu0 0.0
        %3979 = vmatpush1.msra.mxu0 0.0
        %3980 = vmatprep.subr.mxu0 0.0
        %3981 = vmatpush1.msra.mxu0 0.0
        %3982 = vmatprep.subr.mxu0 0.0
        %3983 = vmatpush1.msra.mxu0 0.0
        %3984 = vmatprep.subr.mxu0 0.0
        %3985 = vmatpush1.msra.mxu0 0.0
        %3986 = vmatprep.subr.mxu0 0.0
        %3987 = vmatpush1.msra.mxu0 0.0
        %3988 = vmatprep.subr.mxu0 0.0
        %3989 = vmatpush1.msra.mxu0 0.0
        %3990 = vmatprep.subr.mxu0 0.0
        %3991 = vmatpush1.msra.mxu0 0.0
        %3992 = vmatprep.subr.mxu0 0.0
        %3993 = vmatpush1.msra.mxu0 0.0
        %3994 = vmatprep.subr.mxu0 0.0
        %3995 = vmatpush1.msra.mxu0 0.0
        %3996 = vmatprep.subr.mxu0 0.0
        %3997 = vmatpush1.msra.mxu0 0.0
        %3998 = vmatprep.subr.mxu0 0.0
        %3999 = vmatpush1.msra.mxu0 0.0
        %4000 = vmatprep.subr.mxu0 0.0
        %4001 = vmatpush1.msra.mxu0 0.0
        %4002 = vmatprep.subr.mxu0 0.0
        %4003 = vmatpush1.msra.mxu0 0.0
        %4004 = vmatprep.subr.mxu0 0.0
        %4005 = vmatpush1.msra.mxu0 0.0
        %4006 = vmatprep.subr.mxu0 0.0
        %4007 = vmatpush1.msra.mxu0 0.0
        %4008 = vmatprep.subr.mxu0 0.0
        %4009 = vmatpush1.msra.mxu0 0.0
        %4010 = vmatprep.subr.mxu0 0.0
        %4011 = vmatpush1.msra.mxu0 0.0
        %4012 = vmatprep.subr.mxu0 0.0
        %4013 = vmatpush1.msra.mxu0 0.0
        %4014 = vmatprep.mubr.f32.mxu0 0.0
        %4015 = vmatmul.mubr.f32.gmra.mrb[0].mxu0 %v3948
        %v4016 = vpop.f32.mrb[0].mxu0
        %v4017 = vadd.f32 %v3940, %v4016
        %v4018 = vpop.f32.mrb[0].mxu0
        %v4019 = vadd.f32 %v3944, %v4018
        %4020 = vdwg.mxu0
        %v4021 = vmax.f32 %v4017, 0.0
        %v4022 = vmax.f32 %v4019, 0.0
        %v4024 = vsel %vm3719, 0.25, 0
        %v4027 = vsel %vm1198, %v4021, 0
        %v4030 = vsel %vm1198, %v4022, 0
        %4032 = vmatprep.subr.mxu0 %v4030
        %4033 = vmatpush1.msra.mxu0 %v4027
        %4034 = vmatprep.subr.mxu0 0.0
        %4035 = vmatpush1.msra.mxu0 0.0
        %4036 = vmatprep.subr.mxu0 0.0
        %4037 = vmatpush1.msra.mxu0 0.0
        %4038 = vmatprep.subr.mxu0 0.0
        %4039 = vmatpush1.msra.mxu0 0.0
        %4040 = vmatprep.subr.mxu0 0.0
        %4041 = vmatpush1.msra.mxu0 0.0
        %4042 = vmatprep.subr.mxu0 0.0
        %4043 = vmatpush1.msra.mxu0 0.0
        %4044 = vmatprep.subr.mxu0 0.0
        %4045 = vmatpush1.msra.mxu0 0.0
        %4046 = vmatprep.subr.mxu0 0.0
        %4047 = vmatpush1.msra.mxu0 0.0
        %4048 = vmatprep.subr.mxu0 0.0
        %4049 = vmatpush1.msra.mxu0 0.0
        %4050 = vmatprep.subr.mxu0 0.0
        %4051 = vmatpush1.msra.mxu0 0.0
        %4052 = vmatprep.subr.mxu0 0.0
        %4053 = vmatpush1.msra.mxu0 0.0
        %4054 = vmatprep.subr.mxu0 0.0
        %4055 = vmatpush1.msra.mxu0 0.0
        %4056 = vmatprep.subr.mxu0 0.0
        %4057 = vmatpush1.msra.mxu0 0.0
        %4058 = vmatprep.subr.mxu0 0.0
        %4059 = vmatpush1.msra.mxu0 0.0
        %4060 = vmatprep.subr.mxu0 0.0
        %4061 = vmatpush1.msra.mxu0 0.0
        %4062 = vmatprep.subr.mxu0 0.0
        %4063 = vmatpush1.msra.mxu0 0.0
        %4064 = vmatprep.subr.mxu0 0.0
        %4065 = vmatpush1.msra.mxu0 0.0
        %4066 = vmatprep.subr.mxu0 0.0
        %4067 = vmatpush1.msra.mxu0 0.0
        %4068 = vmatprep.subr.mxu0 0.0
        %4069 = vmatpush1.msra.mxu0 0.0
        %4070 = vmatprep.subr.mxu0 0.0
        %4071 = vmatpush1.msra.mxu0 0.0
        %4072 = vmatprep.subr.mxu0 0.0
        %4073 = vmatpush1.msra.mxu0 0.0
        %4074 = vmatprep.subr.mxu0 0.0
        %4075 = vmatpush1.msra.mxu0 0.0
        %4076 = vmatprep.subr.mxu0 0.0
        %4077 = vmatpush1.msra.mxu0 0.0
        %4078 = vmatprep.subr.mxu0 0.0
        %4079 = vmatpush1.msra.mxu0 0.0
        %4080 = vmatprep.subr.mxu0 0.0
        %4081 = vmatpush1.msra.mxu0 0.0
        %4082 = vmatprep.subr.mxu0 0.0
        %4083 = vmatpush1.msra.mxu0 0.0
        %4084 = vmatprep.subr.mxu0 0.0
        %4085 = vmatpush1.msra.mxu0 0.0
        %4086 = vmatprep.subr.mxu0 0.0
        %4087 = vmatpush1.msra.mxu0 0.0
        %4088 = vmatprep.subr.mxu0 0.0
        %4089 = vmatpush1.msra.mxu0 0.0
        %4090 = vmatprep.subr.mxu0 0.0
        %4091 = vmatpush1.msra.mxu0 0.0
        %4092 = vmatprep.subr.mxu0 0.0
        %4093 = vmatpush1.msra.mxu0 0.0
        %4094 = vmatprep.subr.mxu0 0.0
        %4095 = vmatpush1.msra.mxu0 0.0
        %4096 = vmatprep.mubr.f32.mxu0 0.0
        %4097 = vmatmul.mubr.f32.gmra.mrb[0].mxu0 %v4024
        %v4098 = vpop.f32.mrb[0].mxu0
        %v4099 = vadd.f32 0.0, %v4098
        %v4100 = vpop.f32.mrb[0].mxu0
        %v4101 = vadd.f32 0.0, %v4100
        %4102 = vdwg.mxu0
        %v4103 = vld [vmem:[#allocation5 + $0x870] sm:$0xff]
        %v4104 = vld [vmem:[#allocation5 + $0x880] sm:$0xff]
        %v4105 = vld [vmem:[#allocation5 + $0x890] sm:$0xff]
        %v4106 = vld [vmem:[#allocation5 + $0x8a0] sm:$0xff]
        %v4107 = vld [vmem:[#allocation5 + $0x8b0] sm:$0xff]
        %v4108 = vld [vmem:[#allocation5 + $0x8c0] sm:$0xff]
        %v4109 = vld [vmem:[#allocation5 + $0x8d0] sm:$0xff]
        %v4110 = vld [vmem:[#allocation5 + $0x8e0] sm:$0xff]
        %v4111 = vld [vmem:[#allocation5 + $0x8f0] sm:$0xff]
        %v4112 = vld [vmem:[#allocation5 + $0x900] sm:$0xff]
        %v4113 = vld [vmem:[#allocation5 + $0x910] sm:$0xff]
        %v4114 = vld [vmem:[#allocation5 + $0x920] sm:$0xff]
        %v4115 = vld [vmem:[#allocation5 + $0x930] sm:$0xff]
        %v4116 = vld [vmem:[#allocation5 + $0x940] sm:$0xff]
        %v4117 = vld [vmem:[#allocation5 + $0x950] sm:$0xff]
        %v4118 = vld [vmem:[#allocation5 + $0x960] sm:$0xff]
        %v4119 = vld [vmem:[#allocation5 + $0x970] sm:$0xff]
        %v4120 = vld [vmem:[#allocation5 + $0x980] sm:$0xff]
        %v4121 = vld [vmem:[#allocation5 + $0x990] sm:$0xff]
        %v4122 = vld [vmem:[#allocation5 + $0x9a0] sm:$0xff]
        %v4123 = vld [vmem:[#allocation5 + $0x9b0] sm:$0xff]
        %v4124 = vld [vmem:[#allocation5 + $0x9c0] sm:$0xff]
        %v4125 = vld [vmem:[#allocation5 + $0x9d0] sm:$0xff]
        %v4126 = vld [vmem:[#allocation5 + $0x9e0] sm:$0xff]
        %v4127 = vld [vmem:[#allocation5 + $0x9f0] sm:$0xf]
        %v4128 = vld [vmem:[#allocation5 + $0xa00] ss:$0 sm:$0xff]
        %vm4129 = vcmask 556032
        %v4131 = vsel %vm4129, %v4101, 0
        %v4134 = vsel %vm1198, %v4127, 0
        %4136 = vmatprep.subr.mxu0 0.0
        %4137 = vmatpush1.msra.mxu0 %v4103
        %4138 = vmatprep.subr.mxu0 0.0
        %4139 = vmatpush1.msra.mxu0 %v4104
        %4140 = vmatprep.subr.mxu0 0.0
        %4141 = vmatpush1.msra.mxu0 %v4105
        %4142 = vmatprep.subr.mxu0 0.0
        %4143 = vmatpush1.msra.mxu0 %v4106
        %4144 = vmatprep.subr.mxu0 0.0
        %4145 = vmatpush1.msra.mxu0 %v4107
        %4146 = vmatprep.subr.mxu0 0.0
        %4147 = vmatpush1.msra.mxu0 %v4108
        %4148 = vmatprep.subr.mxu0 0.0
        %4149 = vmatpush1.msra.mxu0 %v4109
        %4150 = vmatprep.subr.mxu0 0.0
        %4151 = vmatpush1.msra.mxu0 %v4110
        %4152 = vmatprep.subr.mxu0 0.0
        %4153 = vmatpush1.msra.mxu0 %v4111
        %4154 = vmatprep.subr.mxu0 0.0
        %4155 = vmatpush1.msra.mxu0 %v4112
        %4156 = vmatprep.subr.mxu0 0.0
        %4157 = vmatpush1.msra.mxu0 %v4113
        %4158 = vmatprep.subr.mxu0 0.0
        %4159 = vmatpush1.msra.mxu0 %v4114
        %4160 = vmatprep.subr.mxu0 0.0
        %4161 = vmatpush1.msra.mxu0 %v4115
        %4162 = vmatprep.subr.mxu0 0.0
        %4163 = vmatpush1.msra.mxu0 %v4116
        %4164 = vmatprep.subr.mxu0 0.0
        %4165 = vmatpush1.msra.mxu0 %v4117
        %4166 = vmatprep.subr.mxu0 0.0
        %4167 = vmatpush1.msra.mxu0 %v4118
        %4168 = vmatprep.subr.mxu0 0.0
        %4169 = vmatpush1.msra.mxu0 %v4119
        %4170 = vmatprep.subr.mxu0 0.0
        %4171 = vmatpush1.msra.mxu0 %v4120
        %4172 = vmatprep.subr.mxu0 0.0
        %4173 = vmatpush1.msra.mxu0 %v4121
        %4174 = vmatprep.subr.mxu0 0.0
        %4175 = vmatpush1.msra.mxu0 %v4122
        %4176 = vmatprep.subr.mxu0 0.0
        %4177 = vmatpush1.msra.mxu0 %v4123
        %4178 = vmatprep.subr.mxu0 0.0
        %4179 = vmatpush1.msra.mxu0 %v4124
        %4180 = vmatprep.subr.mxu0 0.0
        %4181 = vmatpush1.msra.mxu0 %v4125
        %4182 = vmatprep.subr.mxu0 0.0
        %4183 = vmatpush1.msra.mxu0 %v4126
        %4184 = vmatprep.subr.mxu0 0.0
        %4185 = vmatpush1.msra.mxu0 %v4134
        %4186 = vmatprep.subr.mxu0 0.0
        %4187 = vmatpush1.msra.mxu0 0.0
        %4188 = vmatprep.subr.mxu0 0.0
        %4189 = vmatpush1.msra.mxu0 0.0
        %4190 = vmatprep.subr.mxu0 0.0
        %4191 = vmatpush1.msra.mxu0 0.0
        %4192 = vmatprep.subr.mxu0 0.0
        %4193 = vmatpush1.msra.mxu0 0.0
        %4194 = vmatprep.subr.mxu0 0.0
        %4195 = vmatpush1.msra.mxu0 0.0
        %4196 = vmatprep.subr.mxu0 0.0
        %4197 = vmatpush1.msra.mxu0 0.0
        %4198 = vmatprep.subr.mxu0 0.0
        %4199 = vmatpush1.msra.mxu0 0.0
        %4200 = vmatprep.mubr.f32.mxu0 %v4131
        %4201 = vmatmul.mubr.f32.gmra.mrb[0].mxu0 %v4099
        %v4202 = vpop.f32.mrb[0].mxu0
        %v4203 = vadd.f32 %v4128, %v4202
        %v4204 = vpop.f32.mrb[0].mxu0
        %4205 = vdwg.mxu0
        %4206 = vst [vmem:[%s192] sm:$0x1] %v4203
        %s4207 = sand.u32 %s95, 1
        %s4208 = scalar_lea.sflag [#allocation4], %s4207
        %s4209 = sand.u32 %s95, 1
        %s4210 = scalar_lea.vmem [#allocation7], %s4209
        // Predicated region
        $region41: #{_lambda_.1} parent=31 // pred_check
          %p4211 = pneg %p105
        $region42: #{_lambda_.1} parent=31 // pred_check_branch
          %4213 = sbr.rel (%p4211) target = $region44
        $region43: #{_lambda_.1} parent=31 // pred_region
          %s4215 = ssub.s32 16, 16
          %4216 = vsyncadd %s4208, %s4215
          %s4217 = smul.addr %s19, 16
          %s4218 = scalar_lea.hbm %s3, %s4217
          %s4220 = sshll.u32 %s4210, 4
          %s4221 = int_to_ptr.vmem [resolvable:$true] %s4220
          %4223 = dma.vmem_to_hbm [thread:$0]  %s4221, 16, %s4218, %s4208
        $region44: #{_lambda_.1} parent=31 // pred_fallthru
          _
      $region32: #{_lambda_.1} parent=5 // pred_fallthru
        _
      %p4224 = scmp.le.s32.totalorder 2, %s14
      // Predicated region
      $region45: #{_lambda_.1} parent=5 // pred_check
        %p4225 = pneg %p4224
      $region46: #{_lambda_.1} parent=5 // pred_check_branch
        %4227 = sbr.rel (%p4225) target = $region48
      $region47: #{_lambda_.1} parent=5 // pred_region
        %s4228 = ssub.s32 %s14, 2
        // Predicated region
        $region49: #{_lambda_.1} parent=47 // pred_check
          %p4229 = pneg %p111
        $region50: #{_lambda_.1} parent=47 // pred_check_branch
          %4231 = sbr.rel (%p4229) target = $region52
        $region51: #{_lambda_.1} parent=47 // pred_region
          %s4232 = sand.u32 %s96, 1
          %s4233 = scalar_lea.sflag [#allocation4], %s4232
          %s4234 = sand.u32 %s96, 1
          %s4235 = scalar_lea.vmem [#allocation7], %s4234
          %4236 = dma.done %s4233, 16
        $region52: #{_lambda_.1} parent=47 // pred_fallthru
          _
      $region48: #{_lambda_.1} parent=5 // pred_fallthru
        _
    $region6: #{_lambda_.1} parent=1 // loop_footer
      %s18 = sadd.s32 1, %s14
    $region7: #{_lambda_.1} parent=1 // loop_footer_branch
      %13 = sbr.rel target = $region3
    $region8: #{_lambda_.1} parent=1 // loop_exit
      _
    %4237 = vsyncpa [#allocation3], 1
    %s4238 = scalar_lea.sflag [#allocation3], 1
    %4239 = vsyncpa %s4238, 1
    %4240 = vsyncpa [#allocation6], 1
    %4241 = vsyncpa [#allocation4], 1
    %s4242 = scalar_lea.sflag [#allocation4], 1
    %4243 = vsyncpa %s4242, 1

</llo_original>
